<compile_context>
chip_gen: v7x
topology: tpu7x:2x2x1
jax: 0.10.0
libtpu: 0.0.40
codegen_flags: <defaults>
</compile_context>

<pallas_src>
import jax
import jax.numpy as jnp
from jax import lax
from jax.experimental import pallas as pl
from jax.experimental.pallas import tpu as pltpu


def _make_kernel(Hh, Whp, Wh_real, C4, PAD):
    """Builds the kernel for static half-sizes (Hh, Whp) and C4 = 4*C lanes."""
    Hp, Wp = Hh + 2 * PAD, Whp + 2 * PAD
    H1, W1 = Hh + 2, Whp + 2          # stage-1 output incl. 1-pixel halo
    off = PAD - 4                     # padded coord of the 7x7 tap (0,0) at halo (0,0)
    f32 = jnp.float32

    def kernel(x_ref, w1_ref, b1_ref, w2_ref, t_ref, o_ref, sub_pad):
        # x_ref:   (1, Hh, Whp, 4C) unpadded, parity-deinterleaved input [a|b|c|d]
        # w1_ref:  (7, 7, 4C)  fused stage-1 depthwise weights  [LL|LH|HL|HH]
        # b1_ref:  (1, 4C)     fused stage-1 bias (zero on LL / HH lanes)
        # w2_ref:  (3, 3, 4C)  fused stage-2 weights (identity for LH/HL/HH lanes)
        # t_ref:   (4C, 4C)    Haar butterfly (analysis == synthesis for Haar)
        # o_ref:   (1, Hh, Whp, 4C) parity-deinterleaved output [aa|bb|cc|dd]
        # sub_pad: (Hp, Wp, 4C) f32 VMEM scratch holding the zero-padded sub-bands
        t = t_ref[...]

        # Haar analysis on the interior only (MXU, default precision: butterfly
        # entries are exactly +/-0.5; bf16-pass rounding is within tolerance).
        xin = x_ref[0].astype(f32)                          # (Hh, Whp, 4C)
        sub = jnp.dot(xin.reshape(Hh * Whp, C4), t,
                      preferred_element_type=f32).reshape(Hh, Whp, C4)

        # Scatter into the padded VMEM scratch: zero the PAD ring (cheap, done
        # every grid step so it is megacore-safe), then store the interior.
        zrow = jnp.zeros((PAD, Wp, C4), f32)
        zcol = jnp.zeros((Hh, PAD, C4), f32)
        sub_pad[0:PAD, :, :] = zrow
        sub_pad[PAD + Hh:Hp, :, :] = zrow
        sub_pad[PAD:PAD + Hh, 0:PAD, :] = zcol
        sub_pad[PAD:PAD + Hh, PAD + Whp:Wp, :] = zcol
        sub_pad[PAD:PAD + Hh, PAD:PAD + Whp, :] = sub

        # Stage 1: fused depthwise conv (3x3 | 3x7 | 7x3 | 3x3) as one 7x7 pass
        # over a 1-pixel halo.  The 7 column (sublane-shifted) views are hoisted
        # out of the tap loop; the 16 all-zero corner taps are skipped (33 kept);
        # 4 independent partial accumulators keep the VALU slots busy.
        w1 = w1_ref[...]
        cols = [sub_pad[off:off + H1 + 6, off + v:off + v + W1, :]
                for v in range(7)]
        taps = [(u, v) for u in range(7) for v in range(7)
                if not (abs(u - 3) > 1 and abs(v - 3) > 1)]
        parts = [None, None, None, None]
        for n, (u, v) in enumerate(taps):
            term = cols[v][u:u + H1] * w1[u, v]
            k = n % 4
            parts[k] = term if parts[k] is None else parts[k] + term
        y1 = (parts[0] + parts[1]) + (parts[2] + parts[3]) + b1_ref[...]

        # Zero the halo ring (and any W-alignment pad columns): the reference
        # zero-pads the stage-1 intermediate before the second LL conv.
        row = lax.broadcasted_iota(jnp.int32, (H1, W1, 1), 0)
        col = lax.broadcasted_iota(jnp.int32, (H1, W1, 1), 1)
        inside = (row >= 1) & (row <= Hh) & (col >= 1) & (col <= Wh_real)
        y1 = jnp.where(inside, y1, 0.0)

        # Stage 2: depthwise 3x3 (real weights on LL lanes, identity centre tap
        # elsewhere) as static slices of the halo buffer; 3 hoisted column views.
        w2 = w2_ref[...]
        parts2 = []
        for v in range(3):
            colv = y1[:, v:v + Whp, :]
            acc = colv[0:Hh] * w2[0, v]
            acc = acc + colv[1:1 + Hh] * w2[1, v]
            acc = acc + colv[2:2 + Hh] * w2[2, v]
            parts2.append(acc)
        y2 = parts2[0] + parts2[1] + parts2[2]

        # Haar synthesis (MXU, default precision), single cast at the store.
        out = jnp.dot(y2.reshape(Hh * Whp, C4), t, preferred_element_type=f32)
        o_ref[0] = out.reshape(Hh, Whp, C4).astype(o_ref.dtype)

    return kernel


def freq_proj_dwt(x_nchw, w_ll1, w_ll2, w_lh, b_lh, w_hl, b_hl, w_hh):
    """FreqProj({'type': 'DWT', 'in_channels': C}) forward (Haar, J=1).

    x_nchw: (B, C, H, W), H and W even.  Depthwise weights are (kh, kw, C)
    (PyTorch (C, 1, kh, kw) transposed); biases are (C,).  Returns NCHW in the
    input dtype.
    """
    B, C, H, W = x_nchw.shape
    assert H % 2 == 0 and W % 2 == 0, "Haar DWT path assumes even H, W"
    f32 = jnp.float32
    Hh, Wh = H // 2, W // 2
    C4 = 4 * C
    Whp = -(-Wh // 8) * 8   # pad half-width up to the f32 sublane tile (8)
    PAD = 8                 # >=4 covers the fused 7-tap reach + 1-pixel halo;
                            # 8 keeps the interior scratch window sublane-aligned
    Hp, Wp = Hh + 2 * PAD, Whp + 2 * PAD

    # Layout-only input prep: NCHW -> NHWC, de-interleave the 2x2 pixel
    # parities onto the channel (lane) axis [a|b|c|d].  The model dtype is kept
    # through the HBM boundary; the upcast to f32 happens inside the kernel.
    x_nhwc = jnp.transpose(x_nchw, (0, 2, 3, 1))
    xg = x_nhwc.reshape(B, Hh, 2, Wh, 2, C)
    xg = jnp.transpose(xg, (0, 1, 3, 2, 4, 5)).reshape(B, Hh, Wh, C4)
    if Whp != Wh:
        xg = jnp.pad(xg, ((0, 0), (0, 0), (0, Whp - Wh), (0, 0)))

    # Fused depthwise weights / bias (sub-band lane order [LL|LH|HL|HH]).
    w1 = jnp.zeros((7, 7, C4), f32)
    w1 = w1.at[2:5, 2:5, 0:C].set(w_ll1.astype(f32))          # conv_ll[0]: 3x3, pad 1
    w1 = w1.at[2:5, 0:7, C:2 * C].set(w_lh.astype(f32))       # conv_lh   : 3x7, pad (1,3)
    w1 = w1.at[0:7, 2:5, 2 * C:3 * C].set(w_hl.astype(f32))   # conv_hl   : 7x3, pad (3,1)
    w1 = w1.at[2:5, 2:5, 3 * C:4 * C].set(w_hh.astype(f32))   # conv_hh   : 3x3, pad 1
    b1 = jnp.concatenate([jnp.zeros((C,), f32), b_lh.astype(f32),
                          b_hl.astype(f32), jnp.zeros((C,), f32)]).reshape(1, C4)

    w2 = jnp.zeros((3, 3, C4), f32)
    w2 = w2.at[:, :, 0:C].set(w_ll2.astype(f32))              # conv_ll[1]: 3x3, pad 1
    w2 = w2.at[1, 1, C:].set(1.0)                             # identity pass-through

    # Haar butterfly: analysis == synthesis == 0.5 * H4 per channel (symmetric).
    m = 0.5 * jnp.array([[1, 1, 1, 1],
                         [1, 1, -1, -1],
                         [1, -1, 1, -1],
                         [1, -1, -1, 1]], f32)
    t = jnp.kron(m, jnp.eye(C, dtype=f32))                    # (4C, 4C)

    kernel = _make_kernel(Hh, Whp, Wh, C4, PAD)

    def const_spec(shape):
        n = len(shape)
        return pl.BlockSpec(shape, lambda b, _n=n: (0,) * _n)

    grid_spec = pltpu.PrefetchScalarGridSpec(
        num_scalar_prefetch=0,
        grid=(B,),
        in_specs=[
            pl.BlockSpec((1, Hh, Whp, C4), lambda b: (b, 0, 0, 0)),
            const_spec((7, 7, C4)),
            const_spec((1, C4)),
            const_spec((3, 3, C4)),
            const_spec((C4, C4)),
        ],
        out_specs=pl.BlockSpec((1, Hh, Whp, C4), lambda b: (b, 0, 0, 0)),
        scratch_shapes=[pltpu.VMEM((Hp, Wp, C4), f32)],
    )

    yg = pl.pallas_call(
        kernel,
        out_shape=jax.ShapeDtypeStruct((B, Hh, Whp, C4), x_nchw.dtype),
        grid_spec=grid_spec,
        compiler_params=pltpu.CompilerParams(
            dimension_semantics=("parallel",),
            vmem_limit_bytes=32 * 1024 * 1024),
    )(xg, w1, b1, w2, t)

    # Layout-only output post: crop the W-alignment pad, re-interleave the 2x2
    # pixel parities, NHWC -> NCHW.
    yg = yg[:, :, :Wh, :]
    y = yg.reshape(B, Hh, Wh, 2, 2, C)
    y = jnp.transpose(y, (0, 1, 3, 2, 4, 5)).reshape(B, H, W, C)
    return jnp.transpose(y, (0, 3, 1, 2)).astype(x_nchw.dtype)


# ----------------------- pure-JAX reference (NCHW) -------------------------
def _ref_forward(x, w_ll1, w_ll2, w_lh, b_lh, w_hl, b_hl, w_hh):
    """WaveletProj (Haar, J=1) reference, explicit (precision-exact) math."""
    def dwconv(z, w, ph, pw, bias=None):
        _, _, h, wd = z.shape
        kh, kw = w.shape[0], w.shape[1]
        zp = jnp.pad(z, ((0, 0), (0, 0), (ph, ph), (pw, pw)))
        out = jnp.zeros_like(z)
        for u in range(kh):
            for v in range(kw):
                out = out + zp[:, :, u:u + h, v:v + wd] * w[u, v][None, :, None, None]
        if bias is not None:
            out = out + bias[None, :, None, None]
        return out

    a = x[:, :, 0::2, 0::2]
    b = x[:, :, 0::2, 1::2]
    c = x[:, :, 1::2, 0::2]
    d = x[:, :, 1::2, 1::2]
    ll = 0.5 * (a + b + c + d)
    lh = 0.5 * (a + b - c - d)   # low along W, high along H (pytorch_wavelets order)
    hl = 0.5 * (a - b + c - d)
    hh = 0.5 * (a - b - c + d)

    ll = dwconv(dwconv(ll, w_ll1, 1, 1), w_ll2, 1, 1)
    lh = dwconv(lh, w_lh, 1, 3, b_lh)
    hl = dwconv(hl, w_hl, 3, 1, b_hl)
    hh = dwconv(hh, w_hh, 1, 1)

    aa = 0.5 * (ll + lh + hl + hh)
    bb = 0.5 * (ll + lh - hl - hh)
    cc = 0.5 * (ll - lh + hl - hh)
    dd = 0.5 * (ll - lh - hl + hh)

    out = jnp.zeros_like(x)
    out = out.at[:, :, 0::2, 0::2].set(aa)
    out = out.at[:, :, 0::2, 1::2].set(bb)
    out = out.at[:, :, 1::2, 0::2].set(cc)
    out = out.at[:, :, 1::2, 1::2].set(dd)
    return out


if __name__ == "__main__":
    key = jax.random.PRNGKey(0)
    B, C, H, W = 2, 32, 16, 16   # in_channels=32 so that 4*C = 128 lanes

    ks = jax.random.split(key, 9)
    x = jax.random.normal(ks[0], (B, C, H, W), jnp.float32)
    # conv3x3 helper assumed: depthwise, stride 1, padding 1, bias=False.
    w_ll1 = jax.random.normal(ks[1], (3, 3, C), jnp.float32) * 0.1
    w_ll2 = jax.random.normal(ks[2], (3, 3, C), jnp.float32) * 0.1
    w_lh = jax.random.normal(ks[3], (3, 7, C), jnp.float32) * 0.1   # bias=True
    b_lh = jax.random.normal(ks[4], (C,), jnp.float32) * 0.1
    w_hl = jax.random.normal(ks[5], (7, 3, C), jnp.float32) * 0.1   # bias=True
    b_hl = jax.random.normal(ks[6], (C,), jnp.float32) * 0.1
    w_hh = jax.random.normal(ks[7], (3, 3, C), jnp.float32) * 0.1

    out = freq_proj_dwt(x, w_ll1, w_ll2, w_lh, b_lh, w_hl, b_hl, w_hh)
    jax.block_until_ready(out)
    ref = _ref_forward(x, w_ll1, w_ll2, w_lh, b_lh, w_hl, b_hl, w_hh)
    err = float(jnp.max(jnp.abs(out - ref)))
    # Tolerance budgets default-precision (bf16-pass) MXU rounding on the two
    # Haar butterflies; structural errors would be orders of magnitude larger.
    assert err < 5e-2, err

    # Second case: non-8-aligned half-width (Wh=10 -> padded to 16 in-wrapper).
    x2 = jax.random.normal(ks[8], (B, C, 12, 20), jnp.float32)
    out2 = freq_proj_dwt(x2, w_ll1, w_ll2, w_lh, b_lh, w_hl, b_hl, w_hh)
    jax.block_until_ready(out2)
    ref2 = _ref_forward(x2, w_ll1, w_ll2, w_lh, b_lh, w_hl, b_hl, w_hh)
    err2 = float(jnp.max(jnp.abs(out2 - ref2)))
    assert err2 < 5e-2, err2

    print("KERNEL_OK")
</pallas_src>

<mosaic_0001>
module attributes {stable_mosaic.version = 11 : i64} {
  func.func @kernel(%arg0: i32, %arg1: memref<1x8x8x128xf32, #tpu.memory_space<vmem>>, %arg2: memref<7x7x128xf32, #tpu.memory_space<vmem>>, %arg3: memref<1x128xf32, #tpu.memory_space<vmem>>, %arg4: memref<3x3x128xf32, #tpu.memory_space<vmem>>, %arg5: memref<128x128xf32, #tpu.memory_space<vmem>>, %arg6: memref<1x8x8x128xf32, #tpu.memory_space<vmem>>, %arg7: memref<24x24x128xf32, #tpu.memory_space<vmem>>) attributes {dimension_semantics = [#tpu.dimension_semantics<parallel>], iteration_bounds = array<i64: 2>, scalar_prefetch = 0 : i64, scratch_operands = 1 : i64, tpu.core_type = #tpu.core_type<tc>, window_params = [{transform_indices = @transform_0, window_bounds = array<i64: 1, 8, 8, 128>}, {pipeline_mode = #tpu.pipeline_mode<synchronous>, transform_indices = @transform_1, window_bounds = array<i64: 7, 7, 128>}, {pipeline_mode = #tpu.pipeline_mode<synchronous>, transform_indices = @transform_2, window_bounds = array<i64: 1, 128>}, {pipeline_mode = #tpu.pipeline_mode<synchronous>, transform_indices = @transform_3, window_bounds = array<i64: 3, 3, 128>}, {pipeline_mode = #tpu.pipeline_mode<synchronous>, transform_indices = @transform_4, window_bounds = array<i64: 128, 128>}, {transform_indices = @transform_5, window_bounds = array<i64: 1, 8, 8, 128>}]} {
    %c0 = arith.constant 0 : index
    %c0_0 = arith.constant 0 : index
    %0 = vector.load %arg5[%c0, %c0_0] : memref<128x128xf32, #tpu.memory_space<vmem>>, vector<128x128xf32>
    %c0_1 = arith.constant 0 : index
    %c0_2 = arith.constant 0 : index
    %c0_3 = arith.constant 0 : index
    %c0_4 = arith.constant 0 : index
    %1 = vector.load %arg1[%c0_1, %c0_2, %c0_3, %c0_4] : memref<1x8x8x128xf32, #tpu.memory_space<vmem>>, vector<1x8x8x128xf32>
    %2 = vector.shape_cast %1 : vector<1x8x8x128xf32> to vector<8x8x128xf32>
    %3 = vector.shape_cast %2 : vector<8x8x128xf32> to vector<64x128xf32>
    %cst = arith.constant dense<0.000000e+00> : vector<64x128xf32>
    %4 = tpu.matmul %3, %0, %cst {dimension_numbers = #tpu.dot_dimension_numbers<[1], [0], [0], [1], [0, 0, 1, 1], [], []>} : vector<64x128xf32>, vector<128x128xf32>, vector<64x128xf32> -> vector<64x128xf32>
    %5 = vector.shape_cast %4 : vector<64x128xf32> to vector<8x8x128xf32>
    %cst_5 = arith.constant 0.000000e+00 : f32
    %6 = vector.broadcast %cst_5 : f32 to vector<8x24x128xf32>
    %cst_6 = arith.constant 0.000000e+00 : f32
    %7 = vector.broadcast %cst_6 : f32 to vector<8x8x128xf32>
    %c0_7 = arith.constant 0 : index
    %c0_8 = arith.constant 0 : index
    %c0_9 = arith.constant 0 : index
    %8 = vector.load %arg7[%c0_7, %c0_8, %c0_9] : memref<24x24x128xf32, #tpu.memory_space<vmem>>, vector<8x24x128xf32>
    tpu.vector_store %arg7[%c0_7, %c0_8, %c0_9], %6 {strides = array<i32>} : memref<24x24x128xf32, #tpu.memory_space<vmem>>, vector<8x24x128xf32>,
    %c16 = arith.constant 16 : index
    %c0_10 = arith.constant 0 : index
    %c0_11 = arith.constant 0 : index
    %9 = vector.load %arg7[%c16, %c0_10, %c0_11] : memref<24x24x128xf32, #tpu.memory_space<vmem>>, vector<8x24x128xf32>
    tpu.vector_store %arg7[%c16, %c0_10, %c0_11], %6 {strides = array<i32>} : memref<24x24x128xf32, #tpu.memory_space<vmem>>, vector<8x24x128xf32>,
    %c8 = arith.constant 8 : index
    %c0_12 = arith.constant 0 : index
    %c0_13 = arith.constant 0 : index
    %10 = vector.load %arg7[%c8, %c0_12, %c0_13] : memref<24x24x128xf32, #tpu.memory_space<vmem>>, vector<8x8x128xf32>
    tpu.vector_store %arg7[%c8, %c0_12, %c0_13], %7 {strides = array<i32>} : memref<24x24x128xf32, #tpu.memory_space<vmem>>, vector<8x8x128xf32>,
    %c8_14 = arith.constant 8 : index
    %c16_15 = arith.constant 16 : index
    %c0_16 = arith.constant 0 : index
    %11 = vector.load %arg7[%c8_14, %c16_15, %c0_16] : memref<24x24x128xf32, #tpu.memory_space<vmem>>, vector<8x8x128xf32>
    tpu.vector_store %arg7[%c8_14, %c16_15, %c0_16], %7 {strides = array<i32>} : memref<24x24x128xf32, #tpu.memory_space<vmem>>, vector<8x8x128xf32>,
    %c8_17 = arith.constant 8 : index
    %c8_18 = arith.constant 8 : index
    %c0_19 = arith.constant 0 : index
    %12 = vector.load %arg7[%c8_17, %c8_18, %c0_19] : memref<24x24x128xf32, #tpu.memory_space<vmem>>, vector<8x8x128xf32>
    tpu.vector_store %arg7[%c8_17, %c8_18, %c0_19], %5 {strides = array<i32>} : memref<24x24x128xf32, #tpu.memory_space<vmem>>, vector<8x8x128xf32>,
    %c0_20 = arith.constant 0 : index
    %c0_21 = arith.constant 0 : index
    %c0_22 = arith.constant 0 : index
    %13 = vector.load %arg2[%c0_20, %c0_21, %c0_22] : memref<7x7x128xf32, #tpu.memory_space<vmem>>, vector<7x7x128xf32>
    %c4 = arith.constant 4 : index
    %c4_23 = arith.constant 4 : index
    %c0_24 = arith.constant 0 : index
    %14 = vector.load %arg7[%c4, %c4_23, %c0_24] : memref<24x24x128xf32, #tpu.memory_space<vmem>>, vector<16x10x128xf32>
    %c4_25 = arith.constant 4 : index
    %c5 = arith.constant 5 : index
    %c0_26 = arith.constant 0 : index
    %15 = vector.load %arg7[%c4_25, %c5, %c0_26] : memref<24x24x128xf32, #tpu.memory_space<vmem>>, vector<16x10x128xf32>
    %c4_27 = arith.constant 4 : index
    %c6 = arith.constant 6 : index
    %c0_28 = arith.constant 0 : index
    %16 = vector.load %arg7[%c4_27, %c6, %c0_28] : memref<24x24x128xf32, #tpu.memory_space<vmem>>, vector<16x10x128xf32>
    %c4_29 = arith.constant 4 : index
    %c7 = arith.constant 7 : index
    %c0_30 = arith.constant 0 : index
    %17 = vector.load %arg7[%c4_29, %c7, %c0_30] : memref<24x24x128xf32, #tpu.memory_space<vmem>>, vector<16x10x128xf32>
    %c4_31 = arith.constant 4 : index
    %c8_32 = arith.constant 8 : index
    %c0_33 = arith.constant 0 : index
    %18 = vector.load %arg7[%c4_31, %c8_32, %c0_33] : memref<24x24x128xf32, #tpu.memory_space<vmem>>, vector<16x10x128xf32>
    %c4_34 = arith.constant 4 : index
    %c9 = arith.constant 9 : index
    %c0_35 = arith.constant 0 : index
    %19 = vector.load %arg7[%c4_34, %c9, %c0_35] : memref<24x24x128xf32, #tpu.memory_space<vmem>>, vector<16x10x128xf32>
    %c4_36 = arith.constant 4 : index
    %c10 = arith.constant 10 : index
    %c0_37 = arith.constant 0 : index
    %20 = vector.load %arg7[%c4_36, %c10, %c0_37] : memref<24x24x128xf32, #tpu.memory_space<vmem>>, vector<16x10x128xf32>
    %21 = vector.extract_strided_slice %16 {offsets = [0, 0, 0], sizes = [10, 10, 128], strides = [1, 1, 1]} : vector<16x10x128xf32> to vector<10x10x128xf32>
    %22 = vector.extract_strided_slice %13 {offsets = [0, 2, 0], sizes = [1, 1, 128], strides = [1, 1, 1]} : vector<7x7x128xf32> to vector<1x1x128xf32>
    %23 = vector.shape_cast %22 : vector<1x1x128xf32> to vector<128xf32>
    %24 = vector.shape_cast %23 : vector<128xf32> to vector<1x1x128xf32>
    %25 = vector.broadcast %24 : vector<1x1x128xf32> to vector<10x10x128xf32>
    %26 = arith.mulf %21, %25 : vector<10x10x128xf32>
    %27 = vector.extract_strided_slice %17 {offsets = [0, 0, 0], sizes = [10, 10, 128], strides = [1, 1, 1]} : vector<16x10x128xf32> to vector<10x10x128xf32>
    %28 = vector.extract_strided_slice %13 {offsets = [0, 3, 0], sizes = [1, 1, 128], strides = [1, 1, 1]} : vector<7x7x128xf32> to vector<1x1x128xf32>
    %29 = vector.shape_cast %28 : vector<1x1x128xf32> to vector<128xf32>
    %30 = vector.shape_cast %29 : vector<128xf32> to vector<1x1x128xf32>
    %31 = vector.broadcast %30 : vector<1x1x128xf32> to vector<10x10x128xf32>
    %32 = arith.mulf %27, %31 : vector<10x10x128xf32>
    %33 = vector.extract_strided_slice %18 {offsets = [0, 0, 0], sizes = [10, 10, 128], strides = [1, 1, 1]} : vector<16x10x128xf32> to vector<10x10x128xf32>
    %34 = vector.extract_strided_slice %13 {offsets = [0, 4, 0], sizes = [1, 1, 128], strides = [1, 1, 1]} : vector<7x7x128xf32> to vector<1x1x128xf32>
    %35 = vector.shape_cast %34 : vector<1x1x128xf32> to vector<128xf32>
    %36 = vector.shape_cast %35 : vector<128xf32> to vector<1x1x128xf32>
    %37 = vector.broadcast %36 : vector<1x1x128xf32> to vector<10x10x128xf32>
    %38 = arith.mulf %33, %37 : vector<10x10x128xf32>
    %39 = vector.extract_strided_slice %16 {offsets = [1, 0, 0], sizes = [10, 10, 128], strides = [1, 1, 1]} : vector<16x10x128xf32> to vector<10x10x128xf32>
    %40 = vector.extract_strided_slice %13 {offsets = [1, 2, 0], sizes = [1, 1, 128], strides = [1, 1, 1]} : vector<7x7x128xf32> to vector<1x1x128xf32>
    %41 = vector.shape_cast %40 : vector<1x1x128xf32> to vector<128xf32>
    %42 = vector.shape_cast %41 : vector<128xf32> to vector<1x1x128xf32>
    %43 = vector.broadcast %42 : vector<1x1x128xf32> to vector<10x10x128xf32>
    %44 = arith.mulf %39, %43 : vector<10x10x128xf32>
    %45 = vector.extract_strided_slice %17 {offsets = [1, 0, 0], sizes = [10, 10, 128], strides = [1, 1, 1]} : vector<16x10x128xf32> to vector<10x10x128xf32>
    %46 = vector.extract_strided_slice %13 {offsets = [1, 3, 0], sizes = [1, 1, 128], strides = [1, 1, 1]} : vector<7x7x128xf32> to vector<1x1x128xf32>
    %47 = vector.shape_cast %46 : vector<1x1x128xf32> to vector<128xf32>
    %48 = vector.shape_cast %47 : vector<128xf32> to vector<1x1x128xf32>
    %49 = vector.broadcast %48 : vector<1x1x128xf32> to vector<10x10x128xf32>
    %50 = arith.mulf %45, %49 : vector<10x10x128xf32>
    %51 = arith.addf %26, %50 : vector<10x10x128xf32>
    %52 = vector.extract_strided_slice %18 {offsets = [1, 0, 0], sizes = [10, 10, 128], strides = [1, 1, 1]} : vector<16x10x128xf32> to vector<10x10x128xf32>
    %53 = vector.extract_strided_slice %13 {offsets = [1, 4, 0], sizes = [1, 1, 128], strides = [1, 1, 1]} : vector<7x7x128xf32> to vector<1x1x128xf32>
    %54 = vector.shape_cast %53 : vector<1x1x128xf32> to vector<128xf32>
    %55 = vector.shape_cast %54 : vector<128xf32> to vector<1x1x128xf32>
    %56 = vector.broadcast %55 : vector<1x1x128xf32> to vector<10x10x128xf32>
    %57 = arith.mulf %52, %56 : vector<10x10x128xf32>
    %58 = arith.addf %32, %57 : vector<10x10x128xf32>
    %59 = vector.extract_strided_slice %14 {offsets = [2, 0, 0], sizes = [10, 10, 128], strides = [1, 1, 1]} : vector<16x10x128xf32> to vector<10x10x128xf32>
    %60 = vector.extract_strided_slice %13 {offsets = [2, 0, 0], sizes = [1, 1, 128], strides = [1, 1, 1]} : vector<7x7x128xf32> to vector<1x1x128xf32>
    %61 = vector.shape_cast %60 : vector<1x1x128xf32> to vector<128xf32>
    %62 = vector.shape_cast %61 : vector<128xf32> to vector<1x1x128xf32>
    %63 = vector.broadcast %62 : vector<1x1x128xf32> to vector<10x10x128xf32>
    %64 = arith.mulf %59, %63 : vector<10x10x128xf32>
    %65 = arith.addf %38, %64 : vector<10x10x128xf32>
    %66 = vector.extract_strided_slice %15 {offsets = [2, 0, 0], sizes = [10, 10, 128], strides = [1, 1, 1]} : vector<16x10x128xf32> to vector<10x10x128xf32>
    %67 = vector.extract_strided_slice %13 {offsets = [2, 1, 0], sizes = [1, 1, 128], strides = [1, 1, 1]} : vector<7x7x128xf32> to vector<1x1x128xf32>
    %68 = vector.shape_cast %67 : vector<1x1x128xf32> to vector<128xf32>
    %69 = vector.shape_cast %68 : vector<128xf32> to vector<1x1x128xf32>
    %70 = vector.broadcast %69 : vector<1x1x128xf32> to vector<10x10x128xf32>
    %71 = arith.mulf %66, %70 : vector<10x10x128xf32>
    %72 = arith.addf %44, %71 : vector<10x10x128xf32>
    %73 = vector.extract_strided_slice %16 {offsets = [2, 0, 0], sizes = [10, 10, 128], strides = [1, 1, 1]} : vector<16x10x128xf32> to vector<10x10x128xf32>
    %74 = vector.extract_strided_slice %13 {offsets = [2, 2, 0], sizes = [1, 1, 128], strides = [1, 1, 1]} : vector<7x7x128xf32> to vector<1x1x128xf32>
    %75 = vector.shape_cast %74 : vector<1x1x128xf32> to vector<128xf32>
    %76 = vector.shape_cast %75 : vector<128xf32> to vector<1x1x128xf32>
    %77 = vector.broadcast %76 : vector<1x1x128xf32> to vector<10x10x128xf32>
    %78 = arith.mulf %73, %77 : vector<10x10x128xf32>
    %79 = arith.addf %51, %78 : vector<10x10x128xf32>
    %80 = vector.extract_strided_slice %17 {offsets = [2, 0, 0], sizes = [10, 10, 128], strides = [1, 1, 1]} : vector<16x10x128xf32> to vector<10x10x128xf32>
    %81 = vector.extract_strided_slice %13 {offsets = [2, 3, 0], sizes = [1, 1, 128], strides = [1, 1, 1]} : vector<7x7x128xf32> to vector<1x1x128xf32>
    %82 = vector.shape_cast %81 : vector<1x1x128xf32> to vector<128xf32>
    %83 = vector.shape_cast %82 : vector<128xf32> to vector<1x1x128xf32>
    %84 = vector.broadcast %83 : vector<1x1x128xf32> to vector<10x10x128xf32>
    %85 = arith.mulf %80, %84 : vector<10x10x128xf32>
    %86 = arith.addf %58, %85 : vector<10x10x128xf32>
    %87 = vector.extract_strided_slice %18 {offsets = [2, 0, 0], sizes = [10, 10, 128], strides = [1, 1, 1]} : vector<16x10x128xf32> to vector<10x10x128xf32>
    %88 = vector.extract_strided_slice %13 {offsets = [2, 4, 0], sizes = [1, 1, 128], strides = [1, 1, 1]} : vector<7x7x128xf32> to vector<1x1x128xf32>
    %89 = vector.shape_cast %88 : vector<1x1x128xf32> to vector<128xf32>
    %90 = vector.shape_cast %89 : vector<128xf32> to vector<1x1x128xf32>
    %91 = vector.broadcast %90 : vector<1x1x128xf32> to vector<10x10x128xf32>
    %92 = arith.mulf %87, %91 : vector<10x10x128xf32>
    %93 = arith.addf %65, %92 : vector<10x10x128xf32>
    %94 = vector.extract_strided_slice %19 {offsets = [2, 0, 0], sizes = [10, 10, 128], strides = [1, 1, 1]} : vector<16x10x128xf32> to vector<10x10x128xf32>
    %95 = vector.extract_strided_slice %13 {offsets = [2, 5, 0], sizes = [1, 1, 128], strides = [1, 1, 1]} : vector<7x7x128xf32> to vector<1x1x128xf32>
    %96 = vector.shape_cast %95 : vector<1x1x128xf32> to vector<128xf32>
    %97 = vector.shape_cast %96 : vector<128xf32> to vector<1x1x128xf32>
    %98 = vector.broadcast %97 : vector<1x1x128xf32> to vector<10x10x128xf32>
    %99 = arith.mulf %94, %98 : vector<10x10x128xf32>
    %100 = arith.addf %72, %99 : vector<10x10x128xf32>
    %101 = vector.extract_strided_slice %20 {offsets = [2, 0, 0], sizes = [10, 10, 128], strides = [1, 1, 1]} : vector<16x10x128xf32> to vector<10x10x128xf32>
    %102 = vector.extract_strided_slice %13 {offsets = [2, 6, 0], sizes = [1, 1, 128], strides = [1, 1, 1]} : vector<7x7x128xf32> to vector<1x1x128xf32>
    %103 = vector.shape_cast %102 : vector<1x1x128xf32> to vector<128xf32>
    %104 = vector.shape_cast %103 : vector<128xf32> to vector<1x1x128xf32>
    %105 = vector.broadcast %104 : vector<1x1x128xf32> to vector<10x10x128xf32>
    %106 = arith.mulf %101, %105 : vector<10x10x128xf32>
    %107 = arith.addf %79, %106 : vector<10x10x128xf32>
    %108 = vector.extract_strided_slice %14 {offsets = [3, 0, 0], sizes = [10, 10, 128], strides = [1, 1, 1]} : vector<16x10x128xf32> to vector<10x10x128xf32>
    %109 = vector.extract_strided_slice %13 {offsets = [3, 0, 0], sizes = [1, 1, 128], strides = [1, 1, 1]} : vector<7x7x128xf32> to vector<1x1x128xf32>
    %110 = vector.shape_cast %109 : vector<1x1x128xf32> to vector<128xf32>
    %111 = vector.shape_cast %110 : vector<128xf32> to vector<1x1x128xf32>
    %112 = vector.broadcast %111 : vector<1x1x128xf32> to vector<10x10x128xf32>
    %113 = arith.mulf %108, %112 : vector<10x10x128xf32>
    %114 = arith.addf %86, %113 : vector<10x10x128xf32>
    %115 = vector.extract_strided_slice %15 {offsets = [3, 0, 0], sizes = [10, 10, 128], strides = [1, 1, 1]} : vector<16x10x128xf32> to vector<10x10x128xf32>
    %116 = vector.extract_strided_slice %13 {offsets = [3, 1, 0], sizes = [1, 1, 128], strides = [1, 1, 1]} : vector<7x7x128xf32> to vector<1x1x128xf32>
    %117 = vector.shape_cast %116 : vector<1x1x128xf32> to vector<128xf32>
    %118 = vector.shape_cast %117 : vector<128xf32> to vector<1x1x128xf32>
    %119 = vector.broadcast %118 : vector<1x1x128xf32> to vector<10x10x128xf32>
    %120 = arith.mulf %115, %119 : vector<10x10x128xf32>
    %121 = arith.addf %93, %120 : vector<10x10x128xf32>
    %122 = vector.extract_strided_slice %16 {offsets = [3, 0, 0], sizes = [10, 10, 128], strides = [1, 1, 1]} : vector<16x10x128xf32> to vector<10x10x128xf32>
    %123 = vector.extract_strided_slice %13 {offsets = [3, 2, 0], sizes = [1, 1, 128], strides = [1, 1, 1]} : vector<7x7x128xf32> to vector<1x1x128xf32>
    %124 = vector.shape_cast %123 : vector<1x1x128xf32> to vector<128xf32>
    %125 = vector.shape_cast %124 : vector<128xf32> to vector<1x1x128xf32>
    %126 = vector.broadcast %125 : vector<1x1x128xf32> to vector<10x10x128xf32>
    %127 = arith.mulf %122, %126 : vector<10x10x128xf32>
    %128 = arith.addf %100, %127 : vector<10x10x128xf32>
    %129 = vector.extract_strided_slice %17 {offsets = [3, 0, 0], sizes = [10, 10, 128], strides = [1, 1, 1]} : vector<16x10x128xf32> to vector<10x10x128xf32>
    %130 = vector.extract_strided_slice %13 {offsets = [3, 3, 0], sizes = [1, 1, 128], strides = [1, 1, 1]} : vector<7x7x128xf32> to vector<1x1x128xf32>
    %131 = vector.shape_cast %130 : vector<1x1x128xf32> to vector<128xf32>
    %132 = vector.shape_cast %131 : vector<128xf32> to vector<1x1x128xf32>
    %133 = vector.broadcast %132 : vector<1x1x128xf32> to vector<10x10x128xf32>
    %134 = arith.mulf %129, %133 : vector<10x10x128xf32>
    %135 = arith.addf %107, %134 : vector<10x10x128xf32>
    %136 = vector.extract_strided_slice %18 {offsets = [3, 0, 0], sizes = [10, 10, 128], strides = [1, 1, 1]} : vector<16x10x128xf32> to vector<10x10x128xf32>
    %137 = vector.extract_strided_slice %13 {offsets = [3, 4, 0], sizes = [1, 1, 128], strides = [1, 1, 1]} : vector<7x7x128xf32> to vector<1x1x128xf32>
    %138 = vector.shape_cast %137 : vector<1x1x128xf32> to vector<128xf32>
    %139 = vector.shape_cast %138 : vector<128xf32> to vector<1x1x128xf32>
    %140 = vector.broadcast %139 : vector<1x1x128xf32> to vector<10x10x128xf32>
    %141 = arith.mulf %136, %140 : vector<10x10x128xf32>
    %142 = arith.addf %114, %141 : vector<10x10x128xf32>
    %143 = vector.extract_strided_slice %19 {offsets = [3, 0, 0], sizes = [10, 10, 128], strides = [1, 1, 1]} : vector<16x10x128xf32> to vector<10x10x128xf32>
    %144 = vector.extract_strided_slice %13 {offsets = [3, 5, 0], sizes = [1, 1, 128], strides = [1, 1, 1]} : vector<7x7x128xf32> to vector<1x1x128xf32>
    %145 = vector.shape_cast %144 : vector<1x1x128xf32> to vector<128xf32>
    %146 = vector.shape_cast %145 : vector<128xf32> to vector<1x1x128xf32>
    %147 = vector.broadcast %146 : vector<1x1x128xf32> to vector<10x10x128xf32>
    %148 = arith.mulf %143, %147 : vector<10x10x128xf32>
    %149 = arith.addf %121, %148 : vector<10x10x128xf32>
    %150 = vector.extract_strided_slice %20 {offsets = [3, 0, 0], sizes = [10, 10, 128], strides = [1, 1, 1]} : vector<16x10x128xf32> to vector<10x10x128xf32>
    %151 = vector.extract_strided_slice %13 {offsets = [3, 6, 0], sizes = [1, 1, 128], strides = [1, 1, 1]} : vector<7x7x128xf32> to vector<1x1x128xf32>
    %152 = vector.shape_cast %151 : vector<1x1x128xf32> to vector<128xf32>
    %153 = vector.shape_cast %152 : vector<128xf32> to vector<1x1x128xf32>
    %154 = vector.broadcast %153 : vector<1x1x128xf32> to vector<10x10x128xf32>
    %155 = arith.mulf %150, %154 : vector<10x10x128xf32>
    %156 = arith.addf %128, %155 : vector<10x10x128xf32>
    %157 = vector.extract_strided_slice %14 {offsets = [4, 0, 0], sizes = [10, 10, 128], strides = [1, 1, 1]} : vector<16x10x128xf32> to vector<10x10x128xf32>
    %158 = vector.extract_strided_slice %13 {offsets = [4, 0, 0], sizes = [1, 1, 128], strides = [1, 1, 1]} : vector<7x7x128xf32> to vector<1x1x128xf32>
    %159 = vector.shape_cast %158 : vector<1x1x128xf32> to vector<128xf32>
    %160 = vector.shape_cast %159 : vector<128xf32> to vector<1x1x128xf32>
    %161 = vector.broadcast %160 : vector<1x1x128xf32> to vector<10x10x128xf32>
    %162 = arith.mulf %157, %161 : vector<10x10x128xf32>
    %163 = arith.addf %135, %162 : vector<10x10x128xf32>
    %164 = vector.extract_strided_slice %15 {offsets = [4, 0, 0], sizes = [10, 10, 128], strides = [1, 1, 1]} : vector<16x10x128xf32> to vector<10x10x128xf32>
    %165 = vector.extract_strided_slice %13 {offsets = [4, 1, 0], sizes = [1, 1, 128], strides = [1, 1, 1]} : vector<7x7x128xf32> to vector<1x1x128xf32>
    %166 = vector.shape_cast %165 : vector<1x1x128xf32> to vector<128xf32>
    %167 = vector.shape_cast %166 : vector<128xf32> to vector<1x1x128xf32>
    %168 = vector.broadcast %167 : vector<1x1x128xf32> to vector<10x10x128xf32>
    %169 = arith.mulf %164, %168 : vector<10x10x128xf32>
    %170 = arith.addf %142, %169 : vector<10x10x128xf32>
    %171 = vector.extract_strided_slice %16 {offsets = [4, 0, 0], sizes = [10, 10, 128], strides = [1, 1, 1]} : vector<16x10x128xf32> to vector<10x10x128xf32>
    %172 = vector.extract_strided_slice %13 {offsets = [4, 2, 0], sizes = [1, 1, 128], strides = [1, 1, 1]} : vector<7x7x128xf32> to vector<1x1x128xf32>
    %173 = vector.shape_cast %172 : vector<1x1x128xf32> to vector<128xf32>
    %174 = vector.shape_cast %173 : vector<128xf32> to vector<1x1x128xf32>
    %175 = vector.broadcast %174 : vector<1x1x128xf32> to vector<10x10x128xf32>
    %176 = arith.mulf %171, %175 : vector<10x10x128xf32>
    %177 = arith.addf %149, %176 : vector<10x10x128xf32>
    %178 = vector.extract_strided_slice %17 {offsets = [4, 0, 0], sizes = [10, 10, 128], strides = [1, 1, 1]} : vector<16x10x128xf32> to vector<10x10x128xf32>
    %179 = vector.extract_strided_slice %13 {offsets = [4, 3, 0], sizes = [1, 1, 128], strides = [1, 1, 1]} : vector<7x7x128xf32> to vector<1x1x128xf32>
    %180 = vector.shape_cast %179 : vector<1x1x128xf32> to vector<128xf32>
    %181 = vector.shape_cast %180 : vector<128xf32> to vector<1x1x128xf32>
    %182 = vector.broadcast %181 : vector<1x1x128xf32> to vector<10x10x128xf32>
    %183 = arith.mulf %178, %182 : vector<10x10x128xf32>
    %184 = arith.addf %156, %183 : vector<10x10x128xf32>
    %185 = vector.extract_strided_slice %18 {offsets = [4, 0, 0], sizes = [10, 10, 128], strides = [1, 1, 1]} : vector<16x10x128xf32> to vector<10x10x128xf32>
    %186 = vector.extract_strided_slice %13 {offsets = [4, 4, 0], sizes = [1, 1, 128], strides = [1, 1, 1]} : vector<7x7x128xf32> to vector<1x1x128xf32>
    %187 = vector.shape_cast %186 : vector<1x1x128xf32> to vector<128xf32>
    %188 = vector.shape_cast %187 : vector<128xf32> to vector<1x1x128xf32>
    %189 = vector.broadcast %188 : vector<1x1x128xf32> to vector<10x10x128xf32>
    %190 = arith.mulf %185, %189 : vector<10x10x128xf32>
    %191 = arith.addf %163, %190 : vector<10x10x128xf32>
    %192 = vector.extract_strided_slice %19 {offsets = [4, 0, 0], sizes = [10, 10, 128], strides = [1, 1, 1]} : vector<16x10x128xf32> to vector<10x10x128xf32>
    %193 = vector.extract_strided_slice %13 {offsets = [4, 5, 0], sizes = [1, 1, 128], strides = [1, 1, 1]} : vector<7x7x128xf32> to vector<1x1x128xf32>
    %194 = vector.shape_cast %193 : vector<1x1x128xf32> to vector<128xf32>
    %195 = vector.shape_cast %194 : vector<128xf32> to vector<1x1x128xf32>
    %196 = vector.broadcast %195 : vector<1x1x128xf32> to vector<10x10x128xf32>
    %197 = arith.mulf %192, %196 : vector<10x10x128xf32>
    %198 = arith.addf %170, %197 : vector<10x10x128xf32>
    %199 = vector.extract_strided_slice %20 {offsets = [4, 0, 0], sizes = [10, 10, 128], strides = [1, 1, 1]} : vector<16x10x128xf32> to vector<10x10x128xf32>
    %200 = vector.extract_strided_slice %13 {offsets = [4, 6, 0], sizes = [1, 1, 128], strides = [1, 1, 1]} : vector<7x7x128xf32> to vector<1x1x128xf32>
    %201 = vector.shape_cast %200 : vector<1x1x128xf32> to vector<128xf32>
    %202 = vector.shape_cast %201 : vector<128xf32> to vector<1x1x128xf32>
    %203 = vector.broadcast %202 : vector<1x1x128xf32> to vector<10x10x128xf32>
    %204 = arith.mulf %199, %203 : vector<10x10x128xf32>
    %205 = arith.addf %177, %204 : vector<10x10x128xf32>
    %206 = vector.extract_strided_slice %16 {offsets = [5, 0, 0], sizes = [10, 10, 128], strides = [1, 1, 1]} : vector<16x10x128xf32> to vector<10x10x128xf32>
    %207 = vector.extract_strided_slice %13 {offsets = [5, 2, 0], sizes = [1, 1, 128], strides = [1, 1, 1]} : vector<7x7x128xf32> to vector<1x1x128xf32>
    %208 = vector.shape_cast %207 : vector<1x1x128xf32> to vector<128xf32>
    %209 = vector.shape_cast %208 : vector<128xf32> to vector<1x1x128xf32>
    %210 = vector.broadcast %209 : vector<1x1x128xf32> to vector<10x10x128xf32>
    %211 = arith.mulf %206, %210 : vector<10x10x128xf32>
    %212 = arith.addf %184, %211 : vector<10x10x128xf32>
    %213 = vector.extract_strided_slice %17 {offsets = [5, 0, 0], sizes = [10, 10, 128], strides = [1, 1, 1]} : vector<16x10x128xf32> to vector<10x10x128xf32>
    %214 = vector.extract_strided_slice %13 {offsets = [5, 3, 0], sizes = [1, 1, 128], strides = [1, 1, 1]} : vector<7x7x128xf32> to vector<1x1x128xf32>
    %215 = vector.shape_cast %214 : vector<1x1x128xf32> to vector<128xf32>
    %216 = vector.shape_cast %215 : vector<128xf32> to vector<1x1x128xf32>
    %217 = vector.broadcast %216 : vector<1x1x128xf32> to vector<10x10x128xf32>
    %218 = arith.mulf %213, %217 : vector<10x10x128xf32>
    %219 = arith.addf %191, %218 : vector<10x10x128xf32>
    %220 = vector.extract_strided_slice %18 {offsets = [5, 0, 0], sizes = [10, 10, 128], strides = [1, 1, 1]} : vector<16x10x128xf32> to vector<10x10x128xf32>
    %221 = vector.extract_strided_slice %13 {offsets = [5, 4, 0], sizes = [1, 1, 128], strides = [1, 1, 1]} : vector<7x7x128xf32> to vector<1x1x128xf32>
    %222 = vector.shape_cast %221 : vector<1x1x128xf32> to vector<128xf32>
    %223 = vector.shape_cast %222 : vector<128xf32> to vector<1x1x128xf32>
    %224 = vector.broadcast %223 : vector<1x1x128xf32> to vector<10x10x128xf32>
    %225 = arith.mulf %220, %224 : vector<10x10x128xf32>
    %226 = arith.addf %198, %225 : vector<10x10x128xf32>
    %227 = vector.extract_strided_slice %16 {offsets = [6, 0, 0], sizes = [10, 10, 128], strides = [1, 1, 1]} : vector<16x10x128xf32> to vector<10x10x128xf32>
    %228 = vector.extract_strided_slice %13 {offsets = [6, 2, 0], sizes = [1, 1, 128], strides = [1, 1, 1]} : vector<7x7x128xf32> to vector<1x1x128xf32>
    %229 = vector.shape_cast %228 : vector<1x1x128xf32> to vector<128xf32>
    %230 = vector.shape_cast %229 : vector<128xf32> to vector<1x1x128xf32>
    %231 = vector.broadcast %230 : vector<1x1x128xf32> to vector<10x10x128xf32>
    %232 = arith.mulf %227, %231 : vector<10x10x128xf32>
    %233 = arith.addf %205, %232 : vector<10x10x128xf32>
    %234 = vector.extract_strided_slice %17 {offsets = [6, 0, 0], sizes = [10, 10, 128], strides = [1, 1, 1]} : vector<16x10x128xf32> to vector<10x10x128xf32>
    %235 = vector.extract_strided_slice %13 {offsets = [6, 3, 0], sizes = [1, 1, 128], strides = [1, 1, 1]} : vector<7x7x128xf32> to vector<1x1x128xf32>
    %236 = vector.shape_cast %235 : vector<1x1x128xf32> to vector<128xf32>
    %237 = vector.shape_cast %236 : vector<128xf32> to vector<1x1x128xf32>
    %238 = vector.broadcast %237 : vector<1x1x128xf32> to vector<10x10x128xf32>
    %239 = arith.mulf %234, %238 : vector<10x10x128xf32>
    %240 = arith.addf %212, %239 : vector<10x10x128xf32>
    %241 = vector.extract_strided_slice %18 {offsets = [6, 0, 0], sizes = [10, 10, 128], strides = [1, 1, 1]} : vector<16x10x128xf32> to vector<10x10x128xf32>
    %242 = vector.extract_strided_slice %13 {offsets = [6, 4, 0], sizes = [1, 1, 128], strides = [1, 1, 1]} : vector<7x7x128xf32> to vector<1x1x128xf32>
    %243 = vector.shape_cast %242 : vector<1x1x128xf32> to vector<128xf32>
    %244 = vector.shape_cast %243 : vector<128xf32> to vector<1x1x128xf32>
    %245 = vector.broadcast %244 : vector<1x1x128xf32> to vector<10x10x128xf32>
    %246 = arith.mulf %241, %245 : vector<10x10x128xf32>
    %247 = arith.addf %219, %246 : vector<10x10x128xf32>
    %248 = arith.addf %247, %226 : vector<10x10x128xf32>
    %249 = arith.addf %233, %240 : vector<10x10x128xf32>
    %250 = arith.addf %248, %249 : vector<10x10x128xf32>
    %c0_38 = arith.constant 0 : index
    %c0_39 = arith.constant 0 : index
    %251 = vector.load %arg3[%c0_38, %c0_39] : memref<1x128xf32, #tpu.memory_space<vmem>>, vector<1x128xf32>
    %252 = vector.shape_cast %251 : vector<1x128xf32> to vector<1x1x128xf32>
    %253 = vector.broadcast %252 : vector<1x1x128xf32> to vector<10x10x128xf32>
    %254 = arith.addf %250, %253 : vector<10x10x128xf32>
    %255 = tpu.iota {dimensions = array<i32: 0>} : vector<10x10x1xi32>
    %256 = tpu.iota {dimensions = array<i32: 1>} : vector<10x10x1xi32>
    %c1_i32 = arith.constant 1 : i32
    %257 = vector.broadcast %c1_i32 : i32 to vector<10x10x1xi32>
    %258 = arith.cmpi sge, %255, %257 : vector<10x10x1xi32>
    %c8_i32 = arith.constant 8 : i32
    %259 = vector.broadcast %c8_i32 : i32 to vector<10x10x1xi32>
    %260 = arith.cmpi sle, %255, %259 : vector<10x10x1xi32>
    %261 = arith.andi %258, %260 : vector<10x10x1xi1>
    %c1_i32_40 = arith.constant 1 : i32
    %262 = vector.broadcast %c1_i32_40 : i32 to vector<10x10x1xi32>
    %263 = arith.cmpi sge, %256, %262 : vector<10x10x1xi32>
    %264 = arith.andi %261, %263 : vector<10x10x1xi1>
    %c8_i32_41 = arith.constant 8 : i32
    %265 = vector.broadcast %c8_i32_41 : i32 to vector<10x10x1xi32>
    %266 = arith.cmpi sle, %256, %265 : vector<10x10x1xi32>
    %267 = arith.andi %264, %266 : vector<10x10x1xi1>
    %cst_42 = arith.constant 0.000000e+00 : f32
    %268 = vector.shape_cast %267 : vector<10x10x1xi1> to vector<10x10x1xi1>
    %269 = vector.broadcast %268 : vector<10x10x1xi1> to vector<10x10x128xi1>
    %270 = vector.broadcast %cst_42 : f32 to vector<10x10x128xf32>
    %271 = arith.select %269, %254, %270 : vector<10x10x128xi1>, vector<10x10x128xf32>
    %c0_43 = arith.constant 0 : index
    %c0_44 = arith.constant 0 : index
    %c0_45 = arith.constant 0 : index
    %272 = vector.load %arg4[%c0_43, %c0_44, %c0_45] : memref<3x3x128xf32, #tpu.memory_space<vmem>>, vector<3x3x128xf32>
    %273 = vector.extract_strided_slice %271 {offsets = [0, 0, 0], sizes = [10, 8, 128], strides = [1, 1, 1]} : vector<10x10x128xf32> to vector<10x8x128xf32>
    %274 = vector.extract_strided_slice %273 {offsets = [0, 0, 0], sizes = [8, 8, 128], strides = [1, 1, 1]} : vector<10x8x128xf32> to vector<8x8x128xf32>
    %275 = vector.extract_strided_slice %272 {offsets = [0, 0, 0], sizes = [1, 1, 128], strides = [1, 1, 1]} : vector<3x3x128xf32> to vector<1x1x128xf32>
    %276 = vector.shape_cast %275 : vector<1x1x128xf32> to vector<128xf32>
    %277 = vector.shape_cast %276 : vector<128xf32> to vector<1x1x128xf32>
    %278 = vector.broadcast %277 : vector<1x1x128xf32> to vector<8x8x128xf32>
    %279 = arith.mulf %274, %278 : vector<8x8x128xf32>
    %280 = vector.extract_strided_slice %273 {offsets = [1, 0, 0], sizes = [8, 8, 128], strides = [1, 1, 1]} : vector<10x8x128xf32> to vector<8x8x128xf32>
    %281 = vector.extract_strided_slice %272 {offsets = [1, 0, 0], sizes = [1, 1, 128], strides = [1, 1, 1]} : vector<3x3x128xf32> to vector<1x1x128xf32>
    %282 = vector.shape_cast %281 : vector<1x1x128xf32> to vector<128xf32>
    %283 = vector.shape_cast %282 : vector<128xf32> to vector<1x1x128xf32>
    %284 = vector.broadcast %283 : vector<1x1x128xf32> to vector<8x8x128xf32>
    %285 = arith.mulf %280, %284 : vector<8x8x128xf32>
    %286 = arith.addf %279, %285 : vector<8x8x128xf32>
    %287 = vector.extract_strided_slice %273 {offsets = [2, 0, 0], sizes = [8, 8, 128], strides = [1, 1, 1]} : vector<10x8x128xf32> to vector<8x8x128xf32>
    %288 = vector.extract_strided_slice %272 {offsets = [2, 0, 0], sizes = [1, 1, 128], strides = [1, 1, 1]} : vector<3x3x128xf32> to vector<1x1x128xf32>
    %289 = vector.shape_cast %288 : vector<1x1x128xf32> to vector<128xf32>
    %290 = vector.shape_cast %289 : vector<128xf32> to vector<1x1x128xf32>
    %291 = vector.broadcast %290 : vector<1x1x128xf32> to vector<8x8x128xf32>
    %292 = arith.mulf %287, %291 : vector<8x8x128xf32>
    %293 = arith.addf %286, %292 : vector<8x8x128xf32>
    %294 = vector.extract_strided_slice %271 {offsets = [0, 1, 0], sizes = [10, 8, 128], strides = [1, 1, 1]} : vector<10x10x128xf32> to vector<10x8x128xf32>
    %295 = vector.extract_strided_slice %294 {offsets = [0, 0, 0], sizes = [8, 8, 128], strides = [1, 1, 1]} : vector<10x8x128xf32> to vector<8x8x128xf32>
    %296 = vector.extract_strided_slice %272 {offsets = [0, 1, 0], sizes = [1, 1, 128], strides = [1, 1, 1]} : vector<3x3x128xf32> to vector<1x1x128xf32>
    %297 = vector.shape_cast %296 : vector<1x1x128xf32> to vector<128xf32>
    %298 = vector.shape_cast %297 : vector<128xf32> to vector<1x1x128xf32>
    %299 = vector.broadcast %298 : vector<1x1x128xf32> to vector<8x8x128xf32>
    %300 = arith.mulf %295, %299 : vector<8x8x128xf32>
    %301 = vector.extract_strided_slice %294 {offsets = [1, 0, 0], sizes = [8, 8, 128], strides = [1, 1, 1]} : vector<10x8x128xf32> to vector<8x8x128xf32>
    %302 = vector.extract_strided_slice %272 {offsets = [1, 1, 0], sizes = [1, 1, 128], strides = [1, 1, 1]} : vector<3x3x128xf32> to vector<1x1x128xf32>
    %303 = vector.shape_cast %302 : vector<1x1x128xf32> to vector<128xf32>
    %304 = vector.shape_cast %303 : vector<128xf32> to vector<1x1x128xf32>
    %305 = vector.broadcast %304 : vector<1x1x128xf32> to vector<8x8x128xf32>
    %306 = arith.mulf %301, %305 : vector<8x8x128xf32>
    %307 = arith.addf %300, %306 : vector<8x8x128xf32>
    %308 = vector.extract_strided_slice %294 {offsets = [2, 0, 0], sizes = [8, 8, 128], strides = [1, 1, 1]} : vector<10x8x128xf32> to vector<8x8x128xf32>
    %309 = vector.extract_strided_slice %272 {offsets = [2, 1, 0], sizes = [1, 1, 128], strides = [1, 1, 1]} : vector<3x3x128xf32> to vector<1x1x128xf32>
    %310 = vector.shape_cast %309 : vector<1x1x128xf32> to vector<128xf32>
    %311 = vector.shape_cast %310 : vector<128xf32> to vector<1x1x128xf32>
    %312 = vector.broadcast %311 : vector<1x1x128xf32> to vector<8x8x128xf32>
    %313 = arith.mulf %308, %312 : vector<8x8x128xf32>
    %314 = arith.addf %307, %313 : vector<8x8x128xf32>
    %315 = vector.extract_strided_slice %271 {offsets = [0, 2, 0], sizes = [10, 8, 128], strides = [1, 1, 1]} : vector<10x10x128xf32> to vector<10x8x128xf32>
    %316 = vector.extract_strided_slice %315 {offsets = [0, 0, 0], sizes = [8, 8, 128], strides = [1, 1, 1]} : vector<10x8x128xf32> to vector<8x8x128xf32>
    %317 = vector.extract_strided_slice %272 {offsets = [0, 2, 0], sizes = [1, 1, 128], strides = [1, 1, 1]} : vector<3x3x128xf32> to vector<1x1x128xf32>
    %318 = vector.shape_cast %317 : vector<1x1x128xf32> to vector<128xf32>
    %319 = vector.shape_cast %318 : vector<128xf32> to vector<1x1x128xf32>
    %320 = vector.broadcast %319 : vector<1x1x128xf32> to vector<8x8x128xf32>
    %321 = arith.mulf %316, %320 : vector<8x8x128xf32>
    %322 = vector.extract_strided_slice %315 {offsets = [1, 0, 0], sizes = [8, 8, 128], strides = [1, 1, 1]} : vector<10x8x128xf32> to vector<8x8x128xf32>
    %323 = vector.extract_strided_slice %272 {offsets = [1, 2, 0], sizes = [1, 1, 128], strides = [1, 1, 1]} : vector<3x3x128xf32> to vector<1x1x128xf32>
    %324 = vector.shape_cast %323 : vector<1x1x128xf32> to vector<128xf32>
    %325 = vector.shape_cast %324 : vector<128xf32> to vector<1x1x128xf32>
    %326 = vector.broadcast %325 : vector<1x1x128xf32> to vector<8x8x128xf32>
    %327 = arith.mulf %322, %326 : vector<8x8x128xf32>
    %328 = arith.addf %321, %327 : vector<8x8x128xf32>
    %329 = vector.extract_strided_slice %315 {offsets = [2, 0, 0], sizes = [8, 8, 128], strides = [1, 1, 1]} : vector<10x8x128xf32> to vector<8x8x128xf32>
    %330 = vector.extract_strided_slice %272 {offsets = [2, 2, 0], sizes = [1, 1, 128], strides = [1, 1, 1]} : vector<3x3x128xf32> to vector<1x1x128xf32>
    %331 = vector.shape_cast %330 : vector<1x1x128xf32> to vector<128xf32>
    %332 = vector.shape_cast %331 : vector<128xf32> to vector<1x1x128xf32>
    %333 = vector.broadcast %332 : vector<1x1x128xf32> to vector<8x8x128xf32>
    %334 = arith.mulf %329, %333 : vector<8x8x128xf32>
    %335 = arith.addf %328, %334 : vector<8x8x128xf32>
    %336 = arith.addf %293, %314 : vector<8x8x128xf32>
    %337 = arith.addf %336, %335 : vector<8x8x128xf32>
    %338 = vector.shape_cast %337 : vector<8x8x128xf32> to vector<64x128xf32>
    %cst_46 = arith.constant dense<0.000000e+00> : vector<64x128xf32>
    %339 = tpu.matmul %338, %0, %cst_46 {dimension_numbers = #tpu.dot_dimension_numbers<[1], [0], [0], [1], [0, 0, 1, 1], [], []>} : vector<64x128xf32>, vector<128x128xf32>, vector<64x128xf32> -> vector<64x128xf32>
    %340 = vector.shape_cast %339 : vector<64x128xf32> to vector<8x8x128xf32>
    %c0_47 = arith.constant 0 : index
    %c0_48 = arith.constant 0 : index
    %c0_49 = arith.constant 0 : index
    %c0_50 = arith.constant 0 : index
    %341 = vector.load %arg6[%c0_47, %c0_48, %c0_49, %c0_50] : memref<1x8x8x128xf32, #tpu.memory_space<vmem>>, vector<1x8x8x128xf32>
    %342 = vector.shape_cast %341 : vector<1x8x8x128xf32> to vector<8x8x128xf32>
    %343 = vector.shape_cast %340 : vector<8x8x128xf32> to vector<1x8x8x128xf32>
    tpu.vector_store %arg6[%c0_47, %c0_48, %c0_49, %c0_50], %343 {strides = array<i32>} : memref<1x8x8x128xf32, #tpu.memory_space<vmem>>, vector<1x8x8x128xf32>,
    return
  }
  func.func @transform_0(%arg0: i32) -> (i32, i32, i32, i32) {
    %c0_i32 = arith.constant 0 : i32
    %c0_i32_0 = arith.constant 0 : i32
    %c0_i32_1 = arith.constant 0 : i32
    %c0_i32_2 = arith.constant 0 : i32
    return %arg0, %c0_i32, %c0_i32_0, %c0_i32_1 : i32, i32, i32, i32
  }
  func.func @transform_1(%arg0: i32) -> (i32, i32, i32) {
    %c0_i32 = arith.constant 0 : i32
    %c0_i32_0 = arith.constant 0 : i32
    %c0_i32_1 = arith.constant 0 : i32
    %c0_i32_2 = arith.constant 0 : i32
    return %c0_i32, %c0_i32_0, %c0_i32_1 : i32, i32, i32
  }
  func.func @transform_2(%arg0: i32) -> (i32, i32) {
    %c0_i32 = arith.constant 0 : i32
    %c0_i32_0 = arith.constant 0 : i32
    %c0_i32_1 = arith.constant 0 : i32
    return %c0_i32, %c0_i32_0 : i32, i32
  }
  func.func @transform_3(%arg0: i32) -> (i32, i32, i32) {
    %c0_i32 = arith.constant 0 : i32
    %c0_i32_0 = arith.constant 0 : i32
    %c0_i32_1 = arith.constant 0 : i32
    %c0_i32_2 = arith.constant 0 : i32
    return %c0_i32, %c0_i32_0, %c0_i32_1 : i32, i32, i32
  }
  func.func @transform_4(%arg0: i32) -> (i32, i32) {
    %c0_i32 = arith.constant 0 : i32
    %c0_i32_0 = arith.constant 0 : i32
    %c0_i32_1 = arith.constant 0 : i32
    return %c0_i32, %c0_i32_0 : i32, i32
  }
  func.func @transform_5(%arg0: i32) -> (i32, i32, i32, i32) {
    %c0_i32 = arith.constant 0 : i32
    %c0_i32_0 = arith.constant 0 : i32
    %c0_i32_1 = arith.constant 0 : i32
    %c0_i32_2 = arith.constant 0 : i32
    return %arg0, %c0_i32, %c0_i32_0, %c0_i32_1 : i32, i32, i32, i32
  }
}

</mosaic_0001>

<llo_original>
// kernel: tpu_custom_call.1
$region0: #{tpu_custom_call.1}
  #allocation0 [shape = 'u32[]', space=smem, size = 0x4, offset = 0x4, fixed_abs, tag = 'smem constant byte address 0x4 - core index']
  #allocation1 [shape = 'u32[144,128]{1,0:T(1,128)}', space=vmem, size = 0x12000, scoped, tag = 'internal scratch']
  #allocation2 [shape = 'f32[24,24,128]{2,1,0:T(8,128)}', space=vmem, size = 0x48000, scoped, tag = 'scratch operand']
  %s0 = inlined_call_operand.hbm [shape: f32[2,8,8,128], index: 0, kind: input, shape index: {}]
  %s1 = inlined_call_operand.hbm [shape: f32[7,7,128], index: 1, kind: input, shape index: {}]
  %s2 = inlined_call_operand.vmem [shape: f32[1,128], index: 2, kind: input, shape index: {}]
  %s3 = inlined_call_operand.hbm [shape: f32[3,3,128], index: 3, kind: input, shape index: {}]
  %s4 = inlined_call_operand.hbm [shape: f32[128,128], index: 4, kind: input, shape index: {}]
  %s5 = inlined_call_operand.hbm [shape: f32[2,8,8,128], index: 5, kind: output, shape index: {}]
  %s6 = sld [smem:[#allocation0]]
  $region69: #{tpu_custom_call.1} parent=0
    _
  %s8 = ssub.s32 1, %s6
  %s9 = scalar_select 0, %s8, %s6
  $region1: #{tpu_custom_call.1} parent=0
    #allocation3 [shape = 'u8[65536]{0}', space=vmem, size = 0x10000, scoped, tag = 'input window, operand 0']
    #allocation4 [shape = 's32[2]{0}', space=sflag, size = 0x8, scoped, tag = 'scoped memory for tpu_custom_call.1']
    #allocation5 [shape = 's32[2]{0}', space=sflag, size = 0x8, scoped, tag = 'scoped memory for tpu_custom_call.1']
    #allocation6 [shape = 'u8[28672]{0}', space=vmem, size = 0x7000, scoped, tag = 'input window, operand 1, single buffered']
    #allocation7 [shape = 's32[1]{0}', space=sflag, size = 0x4, scoped, tag = 'scoped memory for tpu_custom_call.1']
    #allocation8 [shape = 'u8[6144]{0}', space=vmem, size = 0x1800, scoped, tag = 'input window, operand 3, single buffered']
    #allocation9 [shape = 'u8[65536]{0}', space=vmem, size = 0x10000, scoped, tag = 'input window, operand 4, single buffered']
    #allocation10 [shape = 's32[1]{0}', space=sflag, size = 0x4, scoped, tag = 'scoped memory for tpu_custom_call.1']
    #allocation11 [shape = 'u8[65536]{0}', space=vmem, size = 0x10000, scoped, tag = 'output window, operand 0']
    %10 = vsyncpa [#allocation4], 0
    %s11 = scalar_lea.sflag [#allocation4], 1
    %12 = vsyncpa %s11, 0
    %13 = vsyncpa [#allocation7], 0
    %14 = vsyncpa [#allocation10], 0
    %15 = vsyncpa [#allocation5], 0
    %s16 = scalar_lea.sflag [#allocation5], 1
    %17 = vsyncpa %s16, 0
    loop: start=0, step=1, limit=4
    $region2: #{tpu_custom_call.1} parent=1 // loop_pre_header
      _
    $region3: #{tpu_custom_call.1} parent=1 // loop_header
      %s19 = sphi 0, %s23
      %p20 = scmp.ge.s32.totalorder %s19, 4
      %s29 = sphi 0, %s31
      %s32 = sphi 0, %s29
      %s33 = sphi 0, %s32
      %s49 = sphi 0, %s33
      %s53 = sphi 0, %s53
      %s55 = sphi 0, %s53
      %s56 = sphi 0, %s55
      %s70 = sphi 0, %s56
      %s74 = sphi 0, %s74
      %s76 = sphi 0, %s74
      %s77 = sphi 0, %s76
      %s91 = sphi 0, %s77
      %s95 = sphi 0, %s95
      %s97 = sphi 0, %s95
      %s98 = sphi 0, %s97
      %s112 = sphi 0, %s98
      %s116 = sphi 0, %s116
      %s118 = sphi 0, %s116
      %s119 = sphi 0, %s118
      %s133 = sphi 0, %s119
      %s139 = sphi 0, %s141
      %s142 = sphi 0, %s139
      %s143 = sphi 0, %s142
      %s159 = sphi 0, %s143
    $region4: #{tpu_custom_call.1} parent=1 // loop_header_branch
      %22 = sbr.rel (%p20) target = $region8
    $region5: #{tpu_custom_call.1} parent=1 // loop_body
      %s24 = ssub.s32 %s19, 1
      %s25 = ssub.s32 %s19, 2
      %s26 = sadd.s32 %s19, 1
      %s27 = ssub.s32 %s19, %s26
      %p28 = scmp.eq.s32.totalorder %s27, 0
      %s30 = sadd.s32 %s29, 1
      %s31 = scalar_select %p28, %s29, %s30
      %p34 = pneg %p28
      %p35 = scmp.eq.s32.totalorder %s19, 1
      %p36 = por %p34, %p35
      %p37 = scmp.ne.s32.totalorder %s29, %s32
      %p38 = scmp.eq.s32.totalorder %s19, 0
      %p39 = por %p37, %p38
      %p40 = scmp.ne.s32.totalorder %s29, %s32
      %p41 = scmp.eq.s32.totalorder %s24, 1
      %p42 = por %p40, %p41
      %p43 = scmp.ne.s32.totalorder %s32, %s33
      %p44 = scmp.eq.s32.totalorder %s24, 0
      %p45 = por %p43, %p44
      %p46 = scmp.ne.s32.totalorder %s32, %s33
      %p47 = scmp.eq.s32.totalorder %s25, 1
      %p48 = por %p46, %p47
      %p50 = scmp.ne.s32.totalorder %s33, %s49
      %p51 = scmp.eq.s32.totalorder %s25, 0
      %p52 = por %p50, %p51
      %s54 = sadd.s32 %s53, 1
      %p57 = scmp.eq.s32.totalorder %s19, 1
      %p58 = scmp.ne.s32.totalorder %s53, %s55
      %p59 = scmp.eq.s32.totalorder %s19, 0
      %p60 = por %p58, %p59
      %p61 = scmp.ne.s32.totalorder %s53, %s55
      %p62 = scmp.eq.s32.totalorder %s24, 1
      %p63 = por %p61, %p62
      %p64 = scmp.ne.s32.totalorder %s55, %s56
      %p65 = scmp.eq.s32.totalorder %s24, 0
      %p66 = por %p64, %p65
      %p67 = scmp.ne.s32.totalorder %s55, %s56
      %p68 = scmp.eq.s32.totalorder %s25, 1
      %p69 = por %p67, %p68
      %p71 = scmp.ne.s32.totalorder %s56, %s70
      %p72 = scmp.eq.s32.totalorder %s25, 0
      %p73 = por %p71, %p72
      %s75 = sadd.s32 %s74, 1
      %p78 = scmp.eq.s32.totalorder %s19, 1
      %p79 = scmp.ne.s32.totalorder %s74, %s76
      %p80 = scmp.eq.s32.totalorder %s19, 0
      %p81 = por %p79, %p80
      %p82 = scmp.ne.s32.totalorder %s74, %s76
      %p83 = scmp.eq.s32.totalorder %s24, 1
      %p84 = por %p82, %p83
      %p85 = scmp.ne.s32.totalorder %s76, %s77
      %p86 = scmp.eq.s32.totalorder %s24, 0
      %p87 = por %p85, %p86
      %p88 = scmp.ne.s32.totalorder %s76, %s77
      %p89 = scmp.eq.s32.totalorder %s25, 1
      %p90 = por %p88, %p89
      %p92 = scmp.ne.s32.totalorder %s77, %s91
      %p93 = scmp.eq.s32.totalorder %s25, 0
      %p94 = por %p92, %p93
      %s96 = sadd.s32 %s95, 1
      %p99 = scmp.eq.s32.totalorder %s19, 1
      %p100 = scmp.ne.s32.totalorder %s95, %s97
      %p101 = scmp.eq.s32.totalorder %s19, 0
      %p102 = por %p100, %p101
      %p103 = scmp.ne.s32.totalorder %s95, %s97
      %p104 = scmp.eq.s32.totalorder %s24, 1
      %p105 = por %p103, %p104
      %p106 = scmp.ne.s32.totalorder %s97, %s98
      %p107 = scmp.eq.s32.totalorder %s24, 0
      %p108 = por %p106, %p107
      %p109 = scmp.ne.s32.totalorder %s97, %s98
      %p110 = scmp.eq.s32.totalorder %s25, 1
      %p111 = por %p109, %p110
      %p113 = scmp.ne.s32.totalorder %s98, %s112
      %p114 = scmp.eq.s32.totalorder %s25, 0
      %p115 = por %p113, %p114
      %s117 = sadd.s32 %s116, 1
      %p120 = scmp.eq.s32.totalorder %s19, 1
      %p121 = scmp.ne.s32.totalorder %s116, %s118
      %p122 = scmp.eq.s32.totalorder %s19, 0
      %p123 = por %p121, %p122
      %p124 = scmp.ne.s32.totalorder %s116, %s118
      %p125 = scmp.eq.s32.totalorder %s24, 1
      %p126 = por %p124, %p125
      %p127 = scmp.ne.s32.totalorder %s118, %s119
      %p128 = scmp.eq.s32.totalorder %s24, 0
      %p129 = por %p127, %p128
      %p130 = scmp.ne.s32.totalorder %s118, %s119
      %p131 = scmp.eq.s32.totalorder %s25, 1
      %p132 = por %p130, %p131
      %p134 = scmp.ne.s32.totalorder %s119, %s133
      %p135 = scmp.eq.s32.totalorder %s25, 0
      %p136 = por %p134, %p135
      %s137 = ssub.s32 %s19, %s26
      %p138 = scmp.eq.s32.totalorder %s137, 0
      %s140 = sadd.s32 %s139, 1
      %s141 = scalar_select %p138, %s139, %s140
      %p144 = pneg %p138
      %p145 = scmp.eq.s32.totalorder %s19, 1
      %p146 = por %p144, %p145
      %p147 = scmp.ne.s32.totalorder %s139, %s142
      %p148 = scmp.eq.s32.totalorder %s19, 0
      %p149 = por %p147, %p148
      %p150 = scmp.ne.s32.totalorder %s139, %s142
      %p151 = scmp.eq.s32.totalorder %s24, 1
      %p152 = por %p150, %p151
      %p153 = scmp.ne.s32.totalorder %s142, %s143
      %p154 = scmp.eq.s32.totalorder %s24, 0
      %p155 = por %p153, %p154
      %p156 = scmp.ne.s32.totalorder %s142, %s143
      %p157 = scmp.eq.s32.totalorder %s25, 1
      %p158 = por %p156, %p157
      %p160 = scmp.ne.s32.totalorder %s143, %s159
      %p161 = scmp.eq.s32.totalorder %s25, 0
      %p162 = por %p160, %p161
      %p163 = scmp.le.s32.totalorder 1, %s19
      %p164 = scmp.lt.s32.totalorder %s19, 3
      %p165 = pnand %p163, %p164
      %p166 = pneg %p165
      // Predicated region
      $region9: #{tpu_custom_call.1} parent=5 // pred_check
        _
      $region10: #{tpu_custom_call.1} parent=5 // pred_check_branch
        %168 = sbr.rel (%p165) target = $region12
      $region11: #{tpu_custom_call.1} parent=5 // pred_region
        %s169 = ssub.s32 %s19, 1
        // Predicated region
        $region13: #{tpu_custom_call.1} parent=11 // pred_check
          %p170 = pneg %p66
        $region14: #{tpu_custom_call.1} parent=11 // pred_check_branch
          %172 = sbr.rel (%p170) target = $region16
        $region15: #{tpu_custom_call.1} parent=11 // pred_region
          %s174 = ssub.s32 896, 896
          %175 = vsyncadd [#allocation7], %s174
          %s176 = sshll.u32 [#allocation6], 4
          %s177 = int_to_ptr.vmem [resolvable:$true] %s176
          %182 = dma.hbm_to_vmem [thread:$0]  %s1, 896, %s177, [#allocation7], 128, 128, 8
        $region16: #{tpu_custom_call.1} parent=11 // pred_fallthru
          _
        // Predicated region
        $region17: #{tpu_custom_call.1} parent=11 // pred_check
          %p183 = pneg %p87
        $region18: #{tpu_custom_call.1} parent=11 // pred_check_branch
          %185 = sbr.rel (%p183) target = $region20
        $region19: #{tpu_custom_call.1} parent=11 // pred_region
          _
        $region20: #{tpu_custom_call.1} parent=11 // pred_fallthru
          _
        // Predicated region
        $region21: #{tpu_custom_call.1} parent=11 // pred_check
          %p186 = pneg %p108
        $region22: #{tpu_custom_call.1} parent=11 // pred_check_branch
          %188 = sbr.rel (%p186) target = $region24
        $region23: #{tpu_custom_call.1} parent=11 // pred_region
          %s190 = ssub.s32 192, 192
          %191 = vsyncadd [#allocation7], %s190
          %s192 = sshll.u32 [#allocation8], 4
          %s193 = int_to_ptr.vmem [resolvable:$true] %s192
          %198 = dma.hbm_to_vmem [thread:$0]  %s3, 192, %s193, [#allocation7], 64, 64, 4
        $region24: #{tpu_custom_call.1} parent=11 // pred_fallthru
          _
        // Predicated region
        $region25: #{tpu_custom_call.1} parent=11 // pred_check
          %p199 = pneg %p129
        $region26: #{tpu_custom_call.1} parent=11 // pred_check_branch
          %201 = sbr.rel (%p199) target = $region28
        $region27: #{tpu_custom_call.1} parent=11 // pred_region
          %s203 = ssub.s32 2048, 2048
          %204 = vsyncadd [#allocation10], %s203
          %s205 = sshll.u32 [#allocation9], 4
          %s206 = int_to_ptr.vmem [resolvable:$true] %s205
          %211 = dma.hbm_to_vmem [thread:$0]  %s4, 2048, %s206, [#allocation10], 128, 128, 8
        $region28: #{tpu_custom_call.1} parent=11 // pred_fallthru
          _
      $region12: #{tpu_custom_call.1} parent=5 // pred_fallthru
        _
      %p212 = scmp.lt.s32.totalorder %s19, 2
      // Predicated region
      $region29: #{tpu_custom_call.1} parent=5 // pred_check
        %p213 = pneg %p212
      $region30: #{tpu_custom_call.1} parent=5 // pred_check_branch
        %215 = sbr.rel (%p213) target = $region32
      $region31: #{tpu_custom_call.1} parent=5 // pred_region
        // Predicated region
        $region33: #{tpu_custom_call.1} parent=31 // pred_check
          %p216 = pneg %p39
        $region34: #{tpu_custom_call.1} parent=31 // pred_check_branch
          %218 = sbr.rel (%p216) target = $region36
        $region35: #{tpu_custom_call.1} parent=31 // pred_region
          %s219 = sand.u32 %s29, 1
          %s220 = scalar_lea.sflag [#allocation4], %s219
          %s221 = sand.u32 %s29, 1
          %s222 = smul.addr %s221, 64
          %s223 = scalar_lea.vmem [#allocation3], %s222
          %s225 = ssub.s32 1024, 1024
          %226 = vsyncadd %s220, %s225
          %s227 = smul.addr %s19, 8
          %s228 = smul.addr %s227, 128
          %s229 = scalar_lea.hbm %s0, %s228
          %s230 = sshll.u32 %s223, 4
          %s231 = int_to_ptr.vmem [resolvable:$true] %s230
          %236 = dma.hbm_to_vmem [thread:$0]  %s229, 1024, %s231, %s220, 128, 128, 8
        $region36: #{tpu_custom_call.1} parent=31 // pred_fallthru
          _
      $region32: #{tpu_custom_call.1} parent=5 // pred_fallthru
        _
      %p237 = scmp.le.s32.totalorder 1, %s19
      %p238 = scmp.lt.s32.totalorder %s19, 3
      %p239 = pnand %p237, %p238
      %p240 = pneg %p239
      // Predicated region
      $region37: #{tpu_custom_call.1} parent=5 // pred_check
        _
      $region38: #{tpu_custom_call.1} parent=5 // pred_check_branch
        %242 = sbr.rel (%p239) target = $region40
      $region39: #{tpu_custom_call.1} parent=5 // pred_region
        %s243 = ssub.s32 %s19, 1
        %s244 = sand.u32 %s32, 1
        %s245 = scalar_lea.sflag [#allocation4], %s244
        %s246 = sand.u32 %s32, 1
        %s247 = smul.addr %s246, 64
        %s248 = scalar_lea.vmem [#allocation3], %s247
        // Predicated region
        $region41: #{tpu_custom_call.1} parent=39 // pred_check
          %p249 = pneg %p45
        $region42: #{tpu_custom_call.1} parent=39 // pred_check_branch
          %251 = sbr.rel (%p249) target = $region44
        $region43: #{tpu_custom_call.1} parent=39 // pred_region
          %252 = dma.done %s245, 1024
        $region44: #{tpu_custom_call.1} parent=39 // pred_fallthru
          _
        // Predicated region
        $region45: #{tpu_custom_call.1} parent=39 // pred_check
          %p253 = pneg %p66
        $region46: #{tpu_custom_call.1} parent=39 // pred_check_branch
          %255 = sbr.rel (%p253) target = $region48
        $region47: #{tpu_custom_call.1} parent=39 // pred_region
          %256 = dma.done [#allocation7], 896
        $region48: #{tpu_custom_call.1} parent=39 // pred_fallthru
          _
        // Predicated region
        $region49: #{tpu_custom_call.1} parent=39 // pred_check
          %p257 = pneg %p108
        $region50: #{tpu_custom_call.1} parent=39 // pred_check_branch
          %259 = sbr.rel (%p257) target = $region52
        $region51: #{tpu_custom_call.1} parent=39 // pred_region
          %260 = dma.done [#allocation7], 192
        $region52: #{tpu_custom_call.1} parent=39 // pred_fallthru
          _
        // Predicated region
        $region53: #{tpu_custom_call.1} parent=39 // pred_check
          %p261 = pneg %p129
        $region54: #{tpu_custom_call.1} parent=39 // pred_check_branch
          %263 = sbr.rel (%p261) target = $region56
        $region55: #{tpu_custom_call.1} parent=39 // pred_region
          %264 = dma.done [#allocation10], 2048
        $region56: #{tpu_custom_call.1} parent=39 // pred_fallthru
          _
        %s265 = sand.u32 %s32, 1
        %s266 = scalar_lea.sflag [#allocation4], %s265
        %s267 = sand.u32 %s32, 1
        %s268 = smul.addr %s267, 64
        %s269 = scalar_lea.vmem [#allocation3], %s268
        %p270 = pneg %p45
        %p271 = pneg %p42
        %p272 = pneg %p66
        %p273 = pneg %p63
        %p274 = pneg %p87
        %p275 = pneg %p84
        %p276 = pneg %p108
        %p277 = pneg %p105
        %p278 = pneg %p129
        %p279 = pneg %p126
        %p280 = pneg %p155
        %p281 = pneg %p152
        %s282 = sand.u32 %s142, 1
        %s283 = scalar_lea.sflag [#allocation5], %s282
        %s284 = sand.u32 %s142, 1
        %s285 = smul.addr %s284, 64
        %s286 = scalar_lea.vmem [#allocation11], %s285
        %v287 = vld [vmem:[#allocation9] sm:$0xff]
        %v288 = vld [vmem:[#allocation9 + $0x8] sm:$0xff]
        %v289 = vld [vmem:[#allocation9 + $0x10] sm:$0xff]
        %v290 = vld [vmem:[#allocation9 + $0x18] sm:$0xff]
        %v291 = vld [vmem:[#allocation9 + $0x20] sm:$0xff]
        %v292 = vld [vmem:[#allocation9 + $0x28] sm:$0xff]
        %v293 = vld [vmem:[#allocation9 + $0x30] sm:$0xff]
        %v294 = vld [vmem:[#allocation9 + $0x38] sm:$0xff]
        %v295 = vld [vmem:[#allocation9 + $0x40] sm:$0xff]
        %v296 = vld [vmem:[#allocation9 + $0x48] sm:$0xff]
        %v297 = vld [vmem:[#allocation9 + $0x50] sm:$0xff]
        %v298 = vld [vmem:[#allocation9 + $0x58] sm:$0xff]
        %v299 = vld [vmem:[#allocation9 + $0x60] sm:$0xff]
        %v300 = vld [vmem:[#allocation9 + $0x68] sm:$0xff]
        %v301 = vld [vmem:[#allocation9 + $0x70] sm:$0xff]
        %v302 = vld [vmem:[#allocation9 + $0x78] sm:$0xff]
        %v303 = vld [vmem:[%s248] sm:$0xff]
        %v304 = vld [vmem:[%s248 + $0x8] sm:$0xff]
        %v305 = vld [vmem:[%s248 + $0x10] sm:$0xff]
        %v306 = vld [vmem:[%s248 + $0x18] sm:$0xff]
        %v307 = vld [vmem:[%s248 + $0x20] sm:$0xff]
        %v308 = vld [vmem:[%s248 + $0x28] sm:$0xff]
        %v309 = vld [vmem:[%s248 + $0x30] sm:$0xff]
        %v310 = vld [vmem:[%s248 + $0x38] sm:$0xff]
        %311 = vmatprep.subr.mxu0 0.0
        %312 = vmatpush1.msra.mxu0 %v287
        %313 = vmatprep.subr.mxu0 0.0
        %314 = vmatpush1.msra.mxu0 %v288
        %315 = vmatprep.subr.mxu0 0.0
        %316 = vmatpush1.msra.mxu0 %v289
        %317 = vmatprep.subr.mxu0 0.0
        %318 = vmatpush1.msra.mxu0 %v290
        %319 = vmatprep.subr.mxu0 0.0
        %320 = vmatpush1.msra.mxu0 %v291
        %321 = vmatprep.subr.mxu0 0.0
        %322 = vmatpush1.msra.mxu0 %v292
        %323 = vmatprep.subr.mxu0 0.0
        %324 = vmatpush1.msra.mxu0 %v293
        %325 = vmatprep.subr.mxu0 0.0
        %326 = vmatpush1.msra.mxu0 %v294
        %327 = vmatprep.subr.mxu0 0.0
        %328 = vmatpush1.msra.mxu0 %v295
        %329 = vmatprep.subr.mxu0 0.0
        %330 = vmatpush1.msra.mxu0 %v296
        %331 = vmatprep.subr.mxu0 0.0
        %332 = vmatpush1.msra.mxu0 %v297
        %333 = vmatprep.subr.mxu0 0.0
        %334 = vmatpush1.msra.mxu0 %v298
        %335 = vmatprep.subr.mxu0 0.0
        %336 = vmatpush1.msra.mxu0 %v299
        %337 = vmatprep.subr.mxu0 0.0
        %338 = vmatpush1.msra.mxu0 %v300
        %339 = vmatprep.subr.mxu0 0.0
        %340 = vmatpush1.msra.mxu0 %v301
        %341 = vmatprep.subr.mxu0 0.0
        %342 = vmatpush1.msra.mxu0 %v302
        %343 = vmatprep.subr.mxu0 0.0
        %344 = vmatpush1.msra.mxu0 0.0
        %345 = vmatprep.subr.mxu0 0.0
        %346 = vmatpush1.msra.mxu0 0.0
        %347 = vmatprep.subr.mxu0 0.0
        %348 = vmatpush1.msra.mxu0 0.0
        %349 = vmatprep.subr.mxu0 0.0
        %350 = vmatpush1.msra.mxu0 0.0
        %351 = vmatprep.subr.mxu0 0.0
        %352 = vmatpush1.msra.mxu0 0.0
        %353 = vmatprep.subr.mxu0 0.0
        %354 = vmatpush1.msra.mxu0 0.0
        %355 = vmatprep.subr.mxu0 0.0
        %356 = vmatpush1.msra.mxu0 0.0
        %357 = vmatprep.subr.mxu0 0.0
        %358 = vmatpush1.msra.mxu0 0.0
        %359 = vmatprep.subr.mxu0 0.0
        %360 = vmatpush1.msra.mxu0 0.0
        %361 = vmatprep.subr.mxu0 0.0
        %362 = vmatpush1.msra.mxu0 0.0
        %363 = vmatprep.subr.mxu0 0.0
        %364 = vmatpush1.msra.mxu0 0.0
        %365 = vmatprep.subr.mxu0 0.0
        %366 = vmatpush1.msra.mxu0 0.0
        %367 = vmatprep.subr.mxu0 0.0
        %368 = vmatpush1.msra.mxu0 0.0
        %369 = vmatprep.subr.mxu0 0.0
        %370 = vmatpush1.msra.mxu0 0.0
        %371 = vmatprep.subr.mxu0 0.0
        %372 = vmatpush1.msra.mxu0 0.0
        %373 = vmatprep.subr.mxu0 0.0
        %374 = vmatpush1.msra.mxu0 0.0
        %375 = vmatprep.mubr.f32.mxu0 0.0
        %376 = vmatmul.mubr.f32.gmra.mrb[0].mxu0 %v303
        %v377 = vpop.f32.mrb[0].mxu0
        %v378 = vadd.f32 0.0, %v377
        %v379 = vpop.f32.mrb[0].mxu0
        %380 = vmatprep.mubr.f32.mxu0 0.0
        %381 = vmatmul.mubr.f32.gmra.mrb[0].mxu0 %v304
        %v382 = vpop.f32.mrb[0].mxu0
        %v383 = vadd.f32 0.0, %v382
        %v384 = vpop.f32.mrb[0].mxu0
        %385 = vmatprep.mubr.f32.mxu0 0.0
        %386 = vmatmul.mubr.f32.gmra.mrb[0].mxu0 %v305
        %v387 = vpop.f32.mrb[0].mxu0
        %v388 = vadd.f32 0.0, %v387
        %v389 = vpop.f32.mrb[0].mxu0
        %390 = vmatprep.mubr.f32.mxu0 0.0
        %391 = vmatmul.mubr.f32.gmra.mrb[0].mxu0 %v306
        %v392 = vpop.f32.mrb[0].mxu0
        %v393 = vadd.f32 0.0, %v392
        %v394 = vpop.f32.mrb[0].mxu0
        %395 = vmatprep.mubr.f32.mxu0 0.0
        %396 = vmatmul.mubr.f32.gmra.mrb[0].mxu0 %v307
        %v397 = vpop.f32.mrb[0].mxu0
        %v398 = vadd.f32 0.0, %v397
        %v399 = vpop.f32.mrb[0].mxu0
        %400 = vmatprep.mubr.f32.mxu0 0.0
        %401 = vmatmul.mubr.f32.gmra.mrb[0].mxu0 %v308
        %v402 = vpop.f32.mrb[0].mxu0
        %v403 = vadd.f32 0.0, %v402
        %v404 = vpop.f32.mrb[0].mxu0
        %405 = vmatprep.mubr.f32.mxu0 0.0
        %406 = vmatmul.mubr.f32.gmra.mrb[0].mxu0 %v309
        %v407 = vpop.f32.mrb[0].mxu0
        %v408 = vadd.f32 0.0, %v407
        %v409 = vpop.f32.mrb[0].mxu0
        %410 = vmatprep.mubr.f32.mxu0 0.0
        %411 = vmatmul.mubr.f32.gmra.mrb[0].mxu0 %v310
        %v412 = vpop.f32.mrb[0].mxu0
        %v413 = vadd.f32 0.0, %v412
        %v414 = vpop.f32.mrb[0].mxu0
        %415 = vdwg.mxu0
        %416 = vst [vmem:[#allocation2] sm:$0xff] 0.0
        %417 = vst [vmem:[#allocation2 + $0x8] sm:$0xff] 0.0
        %418 = vst [vmem:[#allocation2 + $0x10] sm:$0xff] 0.0
        %419 = vst [vmem:[#allocation2 + $0x18] sm:$0xff] 0.0
        %420 = vst [vmem:[#allocation2 + $0x20] sm:$0xff] 0.0
        %421 = vst [vmem:[#allocation2 + $0x28] sm:$0xff] 0.0
        %422 = vst [vmem:[#allocation2 + $0x30] sm:$0xff] 0.0
        %423 = vst [vmem:[#allocation2 + $0x38] sm:$0xff] 0.0
        %424 = vst [vmem:[#allocation2 + $0x40] sm:$0xff] 0.0
        %425 = vst [vmem:[#allocation2 + $0x48] sm:$0xff] 0.0
        %426 = vst [vmem:[#allocation2 + $0x50] sm:$0xff] 0.0
        %427 = vst [vmem:[#allocation2 + $0x58] sm:$0xff] 0.0
        %428 = vst [vmem:[#allocation2 + $0x60] sm:$0xff] 0.0
        %429 = vst [vmem:[#allocation2 + $0x68] sm:$0xff] 0.0
        %430 = vst [vmem:[#allocation2 + $0x70] sm:$0xff] 0.0
        %431 = vst [vmem:[#allocation2 + $0x78] sm:$0xff] 0.0
        %432 = vst [vmem:[#allocation2 + $0x80] sm:$0xff] 0.0
        %433 = vst [vmem:[#allocation2 + $0x88] sm:$0xff] 0.0
        %434 = vst [vmem:[#allocation2 + $0x90] sm:$0xff] 0.0
        %435 = vst [vmem:[#allocation2 + $0x98] sm:$0xff] 0.0
        %436 = vst [vmem:[#allocation2 + $0xa0] sm:$0xff] 0.0
        %437 = vst [vmem:[#allocation2 + $0xa8] sm:$0xff] 0.0
        %438 = vst [vmem:[#allocation2 + $0xb0] sm:$0xff] 0.0
        %439 = vst [vmem:[#allocation2 + $0xb8] sm:$0xff] 0.0
        %s440 = scalar_lea.vmem [#allocation2], 384
        %441 = vst [vmem:[%s440] sm:$0xff] 0.0
        %442 = vst [vmem:[%s440 + $0x8] sm:$0xff] 0.0
        %443 = vst [vmem:[%s440 + $0x10] sm:$0xff] 0.0
        %444 = vst [vmem:[%s440 + $0x18] sm:$0xff] 0.0
        %445 = vst [vmem:[%s440 + $0x20] sm:$0xff] 0.0
        %446 = vst [vmem:[%s440 + $0x28] sm:$0xff] 0.0
        %447 = vst [vmem:[%s440 + $0x30] sm:$0xff] 0.0
        %448 = vst [vmem:[%s440 + $0x38] sm:$0xff] 0.0
        %449 = vst [vmem:[%s440 + $0x40] sm:$0xff] 0.0
        %450 = vst [vmem:[%s440 + $0x48] sm:$0xff] 0.0
        %451 = vst [vmem:[%s440 + $0x50] sm:$0xff] 0.0
        %452 = vst [vmem:[%s440 + $0x58] sm:$0xff] 0.0
        %453 = vst [vmem:[%s440 + $0x60] sm:$0xff] 0.0
        %454 = vst [vmem:[%s440 + $0x68] sm:$0xff] 0.0
        %455 = vst [vmem:[%s440 + $0x70] sm:$0xff] 0.0
        %456 = vst [vmem:[%s440 + $0x78] sm:$0xff] 0.0
        %457 = vst [vmem:[%s440 + $0x80] sm:$0xff] 0.0
        %458 = vst [vmem:[%s440 + $0x88] sm:$0xff] 0.0
        %459 = vst [vmem:[%s440 + $0x90] sm:$0xff] 0.0
        %460 = vst [vmem:[%s440 + $0x98] sm:$0xff] 0.0
        %461 = vst [vmem:[%s440 + $0xa0] sm:$0xff] 0.0
        %462 = vst [vmem:[%s440 + $0xa8] sm:$0xff] 0.0
        %463 = vst [vmem:[%s440 + $0xb0] sm:$0xff] 0.0
        %464 = vst [vmem:[%s440 + $0xb8] sm:$0xff] 0.0
        %s465 = scalar_lea.vmem [#allocation2], 192
        %466 = vst [vmem:[%s465] sm:$0xff] 0.0
        %467 = vst [vmem:[%s465 + $0x18] sm:$0xff] 0.0
        %468 = vst [vmem:[%s465 + $0x30] sm:$0xff] 0.0
        %469 = vst [vmem:[%s465 + $0x48] sm:$0xff] 0.0
        %470 = vst [vmem:[%s465 + $0x60] sm:$0xff] 0.0
        %471 = vst [vmem:[%s465 + $0x78] sm:$0xff] 0.0
        %472 = vst [vmem:[%s465 + $0x90] sm:$0xff] 0.0
        %473 = vst [vmem:[%s465 + $0xa8] sm:$0xff] 0.0
        %474 = vst [vmem:[%s465 + $0x10] sm:$0xff] 0.0
        %475 = vst [vmem:[%s465 + $0x28] sm:$0xff] 0.0
        %476 = vst [vmem:[%s465 + $0x40] sm:$0xff] 0.0
        %477 = vst [vmem:[%s465 + $0x58] sm:$0xff] 0.0
        %478 = vst [vmem:[%s465 + $0x70] sm:$0xff] 0.0
        %479 = vst [vmem:[%s465 + $0x88] sm:$0xff] 0.0
        %480 = vst [vmem:[%s465 + $0xa0] sm:$0xff] 0.0
        %481 = vst [vmem:[%s465 + $0xb8] sm:$0xff] 0.0
        %482 = vst [vmem:[%s465 + $0x8] sm:$0xff] %v378
        %483 = vst [vmem:[%s465 + $0x20] sm:$0xff] %v383
        %484 = vst [vmem:[%s465 + $0x38] sm:$0xff] %v388
        %485 = vst [vmem:[%s465 + $0x50] sm:$0xff] %v393
        %486 = vst [vmem:[%s465 + $0x68] sm:$0xff] %v398
        %487 = vst [vmem:[%s465 + $0x80] sm:$0xff] %v403
        %488 = vst [vmem:[%s465 + $0x98] sm:$0xff] %v408
        %489 = vst [vmem:[%s465 + $0xb0] sm:$0xff] %v413
        %v490 = vld [vmem:[#allocation6] sm:$0x7f]
        %v491 = vld [vmem:[#allocation6 + $0x8] sm:$0x7f]
        %v492 = vld [vmem:[#allocation6 + $0x10] sm:$0x7f]
        %v493 = vld [vmem:[#allocation6 + $0x18] sm:$0x7f]
        %v494 = vld [vmem:[#allocation6 + $0x20] sm:$0x7f]
        %v495 = vld [vmem:[#allocation6 + $0x28] sm:$0x7f]
        %v496 = vld [vmem:[#allocation6 + $0x30] sm:$0x7f]
        %s497 = scalar_lea.vmem [#allocation2], 96
        %v498 = vld [vmem:[%s497 + $0x34] sm:$0xff]
        %v499 = vld [vmem:[%s497 + $0x3c] sm:$0x3]
        %v500 = vld [vmem:[%s497 + $0x4c] sm:$0xff]
        %v501 = vld [vmem:[%s497 + $0x54] sm:$0x3]
        %v502 = vld [vmem:[%s497 + $0x64] sm:$0xff]
        %v503 = vld [vmem:[%s497 + $0x6c] sm:$0x3]
        %v504 = vld [vmem:[%s497 + $0x7c] sm:$0xff]
        %v505 = vld [vmem:[%s497 + $0x84] sm:$0x3]
        %v506 = vld [vmem:[%s497 + $0x94] sm:$0xff]
        %v507 = vld [vmem:[%s497 + $0x9c] sm:$0x3]
        %v508 = vld [vmem:[%s497 + $0xac] sm:$0xff]
        %v509 = vld [vmem:[%s497 + $0xb4] sm:$0x3]
        %v510 = vld [vmem:[%s497 + $0xc4] sm:$0xff]
        %v511 = vld [vmem:[%s497 + $0xcc] sm:$0x3]
        %v512 = vld [vmem:[%s497 + $0xdc] sm:$0xff]
        %v513 = vld [vmem:[%s497 + $0xe4] sm:$0x3]
        %v514 = vld [vmem:[%s497 + $0xf4] sm:$0xff]
        %v515 = vld [vmem:[%s497 + $0xfc] sm:$0x3]
        %v516 = vld [vmem:[%s497 + $0x10c] sm:$0xff]
        %v517 = vld [vmem:[%s497 + $0x114] sm:$0x3]
        %v518 = vld [vmem:[%s497 + $0x124] sm:$0xff]
        %v519 = vld [vmem:[%s497 + $0x12c] sm:$0x3]
        %v520 = vld [vmem:[%s497 + $0x13c] sm:$0xff]
        %v521 = vld [vmem:[%s497 + $0x144] sm:$0x3]
        %v522 = vld [vmem:[%s497 + $0x35] sm:$0xff]
        %v523 = vld [vmem:[%s497 + $0x3d] sm:$0x3]
        %v524 = vld [vmem:[%s497 + $0x4d] sm:$0xff]
        %v525 = vld [vmem:[%s497 + $0x55] sm:$0x3]
        %v526 = vld [vmem:[%s497 + $0x65] sm:$0xff]
        %v527 = vld [vmem:[%s497 + $0x6d] sm:$0x3]
        %v528 = vld [vmem:[%s497 + $0x7d] sm:$0xff]
        %v529 = vld [vmem:[%s497 + $0x85] sm:$0x3]
        %v530 = vld [vmem:[%s497 + $0x95] sm:$0xff]
        %v531 = vld [vmem:[%s497 + $0x9d] sm:$0x3]
        %v532 = vld [vmem:[%s497 + $0xad] sm:$0xff]
        %v533 = vld [vmem:[%s497 + $0xb5] sm:$0x3]
        %v534 = vld [vmem:[%s497 + $0xc5] sm:$0xff]
        %v535 = vld [vmem:[%s497 + $0xcd] sm:$0x3]
        %v536 = vld [vmem:[%s497 + $0xdd] sm:$0xff]
        %v537 = vld [vmem:[%s497 + $0xe5] sm:$0x3]
        %v538 = vld [vmem:[%s497 + $0xf5] sm:$0xff]
        %v539 = vld [vmem:[%s497 + $0xfd] sm:$0x3]
        %v540 = vld [vmem:[%s497 + $0x10d] sm:$0xff]
        %v541 = vld [vmem:[%s497 + $0x115] sm:$0x3]
        %v542 = vld [vmem:[%s497 + $0x125] sm:$0xff]
        %v543 = vld [vmem:[%s497 + $0x12d] sm:$0x3]
        %v544 = vld [vmem:[%s497 + $0x13d] sm:$0xff]
        %v545 = vld [vmem:[%s497 + $0x145] sm:$0x3]
        %v546 = vld [vmem:[%s497 + $0x6] sm:$0xff]
        %v547 = vld [vmem:[%s497 + $0xe] sm:$0x3]
        %v548 = vld [vmem:[%s497 + $0x1e] sm:$0xff]
        %v549 = vld [vmem:[%s497 + $0x26] sm:$0x3]
        %v550 = vld [vmem:[%s497 + $0x36] sm:$0xff]
        %v551 = vld [vmem:[%s497 + $0x3e] sm:$0x3]
        %v552 = vld [vmem:[%s497 + $0x4e] sm:$0xff]
        %v553 = vld [vmem:[%s497 + $0x56] sm:$0x3]
        %v554 = vld [vmem:[%s497 + $0x66] sm:$0xff]
        %v555 = vld [vmem:[%s497 + $0x6e] sm:$0x3]
        %v556 = vld [vmem:[%s497 + $0x7e] sm:$0xff]
        %v557 = vld [vmem:[%s497 + $0x86] sm:$0x3]
        %v558 = vld [vmem:[%s497 + $0x96] sm:$0xff]
        %v559 = vld [vmem:[%s497 + $0x9e] sm:$0x3]
        %v560 = vld [vmem:[%s497 + $0xae] sm:$0xff]
        %v561 = vld [vmem:[%s497 + $0xb6] sm:$0x3]
        %v562 = vld [vmem:[%s497 + $0xc6] sm:$0xff]
        %v563 = vld [vmem:[%s497 + $0xce] sm:$0x3]
        %v564 = vld [vmem:[%s497 + $0xde] sm:$0xff]
        %v565 = vld [vmem:[%s497 + $0xe6] sm:$0x3]
        %v566 = vld [vmem:[%s497 + $0xf6] sm:$0xff]
        %v567 = vld [vmem:[%s497 + $0xfe] sm:$0x3]
        %v568 = vld [vmem:[%s497 + $0x10e] sm:$0xff]
        %v569 = vld [vmem:[%s497 + $0x116] sm:$0x3]
        %v570 = vld [vmem:[%s497 + $0x126] sm:$0xff]
        %v571 = vld [vmem:[%s497 + $0x12e] sm:$0x3]
        %v572 = vld [vmem:[%s497 + $0x13e] sm:$0xff]
        %v573 = vld [vmem:[%s497 + $0x146] sm:$0x3]
        %v574 = vld [vmem:[%s497 + $0x156] sm:$0xff]
        %v575 = vld [vmem:[%s497 + $0x15e] sm:$0x3]
        %v576 = vld [vmem:[%s497 + $0x16e] sm:$0xff]
        %v577 = vld [vmem:[%s497 + $0x176] sm:$0x3]
        %v578 = vld [vmem:[%s497 + $0x7] sm:$0xff]
        %v579 = vld [vmem:[%s497 + $0xf] sm:$0x3]
        %v580 = vld [vmem:[%s497 + $0x1f] sm:$0xff]
        %v581 = vld [vmem:[%s497 + $0x27] sm:$0x3]
        %v582 = vld [vmem:[%s497 + $0x37] sm:$0xff]
        %v583 = vld [vmem:[%s497 + $0x3f] sm:$0x3]
        %v584 = vld [vmem:[%s497 + $0x4f] sm:$0xff]
        %v585 = vld [vmem:[%s497 + $0x57] sm:$0x3]
        %v586 = vld [vmem:[%s497 + $0x67] sm:$0xff]
        %v587 = vld [vmem:[%s497 + $0x6f] sm:$0x3]
        %v588 = vld [vmem:[%s497 + $0x7f] sm:$0xff]
        %v589 = vld [vmem:[%s497 + $0x87] sm:$0x3]
        %v590 = vld [vmem:[%s497 + $0x97] sm:$0xff]
        %v591 = vld [vmem:[%s497 + $0x9f] sm:$0x3]
        %v592 = vld [vmem:[%s497 + $0xaf] sm:$0xff]
        %v593 = vld [vmem:[%s497 + $0xb7] sm:$0x3]
        %v594 = vld [vmem:[%s497 + $0xc7] sm:$0xff]
        %v595 = vld [vmem:[%s497 + $0xcf] sm:$0x3]
        %v596 = vld [vmem:[%s497 + $0xdf] sm:$0xff]
        %v597 = vld [vmem:[%s497 + $0xe7] sm:$0x3]
        %v598 = vld [vmem:[%s497 + $0xf7] sm:$0xff]
        %v599 = vld [vmem:[%s497 + $0xff] sm:$0x3]
        %v600 = vld [vmem:[%s497 + $0x10f] sm:$0xff]
        %v601 = vld [vmem:[%s497 + $0x117] sm:$0x3]
        %v602 = vld [vmem:[%s497 + $0x127] sm:$0xff]
        %v603 = vld [vmem:[%s497 + $0x12f] sm:$0x3]
        %v604 = vld [vmem:[%s497 + $0x13f] sm:$0xff]
        %v605 = vld [vmem:[%s497 + $0x147] sm:$0x3]
        %v606 = vld [vmem:[%s497 + $0x157] sm:$0xff]
        %v607 = vld [vmem:[%s497 + $0x15f] sm:$0x3]
        %v608 = vld [vmem:[%s497 + $0x16f] sm:$0xff]
        %v609 = vld [vmem:[%s497 + $0x177] sm:$0x3]
        %v610 = vld [vmem:[%s497 + $0x8] sm:$0xff]
        %v611 = vld [vmem:[%s497 + $0x10] sm:$0x3]
        %v612 = vld [vmem:[%s497 + $0x20] sm:$0xff]
        %v613 = vld [vmem:[%s497 + $0x28] sm:$0x3]
        %v614 = vld [vmem:[%s497 + $0x38] sm:$0xff]
        %v615 = vld [vmem:[%s497 + $0x40] sm:$0x3]
        %v616 = vld [vmem:[%s497 + $0x50] sm:$0xff]
        %v617 = vld [vmem:[%s497 + $0x58] sm:$0x3]
        %v618 = vld [vmem:[%s497 + $0x68] sm:$0xff]
        %v619 = vld [vmem:[%s497 + $0x70] sm:$0x3]
        %v620 = vld [vmem:[%s497 + $0x80] sm:$0xff]
        %v621 = vld [vmem:[%s497 + $0x88] sm:$0x3]
        %v622 = vld [vmem:[%s497 + $0x98] sm:$0xff]
        %v623 = vld [vmem:[%s497 + $0xa0] sm:$0x3]
        %v624 = vld [vmem:[%s497 + $0xb0] sm:$0xff]
        %v625 = vld [vmem:[%s497 + $0xb8] sm:$0x3]
        %v626 = vld [vmem:[%s497 + $0xc8] sm:$0xff]
        %v627 = vld [vmem:[%s497 + $0xd0] sm:$0x3]
        %v628 = vld [vmem:[%s497 + $0xe0] sm:$0xff]
        %v629 = vld [vmem:[%s497 + $0xe8] sm:$0x3]
        %v630 = vld [vmem:[%s497 + $0xf8] sm:$0xff]
        %v631 = vld [vmem:[%s497 + $0x100] sm:$0x3]
        %v632 = vld [vmem:[%s497 + $0x110] sm:$0xff]
        %v633 = vld [vmem:[%s497 + $0x118] sm:$0x3]
        %v634 = vld [vmem:[%s497 + $0x128] sm:$0xff]
        %v635 = vld [vmem:[%s497 + $0x130] sm:$0x3]
        %v636 = vld [vmem:[%s497 + $0x140] sm:$0xff]
        %v637 = vld [vmem:[%s497 + $0x148] sm:$0x3]
        %v638 = vld [vmem:[%s497 + $0x158] sm:$0xff]
        %v639 = vld [vmem:[%s497 + $0x160] sm:$0x3]
        %v640 = vld [vmem:[%s497 + $0x170] sm:$0xff]
        %v641 = vld [vmem:[%s497 + $0x178] sm:$0x3]
        %v642 = vld [vmem:[%s497 + $0x39] sm:$0xff]
        %v643 = vld [vmem:[%s497 + $0x41] sm:$0x3]
        %v644 = vld [vmem:[%s497 + $0x51] sm:$0xff]
        %v645 = vld [vmem:[%s497 + $0x59] sm:$0x3]
        %v646 = vld [vmem:[%s497 + $0x69] sm:$0xff]
        %v647 = vld [vmem:[%s497 + $0x71] sm:$0x3]
        %v648 = vld [vmem:[%s497 + $0x81] sm:$0xff]
        %v649 = vld [vmem:[%s497 + $0x89] sm:$0x3]
        %v650 = vld [vmem:[%s497 + $0x99] sm:$0xff]
        %v651 = vld [vmem:[%s497 + $0xa1] sm:$0x3]
        %v652 = vld [vmem:[%s497 + $0xb1] sm:$0xff]
        %v653 = vld [vmem:[%s497 + $0xb9] sm:$0x3]
        %v654 = vld [vmem:[%s497 + $0xc9] sm:$0xff]
        %v655 = vld [vmem:[%s497 + $0xd1] sm:$0x3]
        %v656 = vld [vmem:[%s497 + $0xe1] sm:$0xff]
        %v657 = vld [vmem:[%s497 + $0xe9] sm:$0x3]
        %v658 = vld [vmem:[%s497 + $0xf9] sm:$0xff]
        %v659 = vld [vmem:[%s497 + $0x101] sm:$0x3]
        %v660 = vld [vmem:[%s497 + $0x111] sm:$0xff]
        %v661 = vld [vmem:[%s497 + $0x119] sm:$0x3]
        %v662 = vld [vmem:[%s497 + $0x129] sm:$0xff]
        %v663 = vld [vmem:[%s497 + $0x131] sm:$0x3]
        %v664 = vld [vmem:[%s497 + $0x141] sm:$0xff]
        %v665 = vld [vmem:[%s497 + $0x149] sm:$0x3]
        %v666 = vld [vmem:[%s497 + $0x3a] sm:$0xff]
        %v667 = vld [vmem:[%s497 + $0x42] sm:$0x3]
        %v668 = vld [vmem:[%s497 + $0x52] sm:$0xff]
        %v669 = vld [vmem:[%s497 + $0x5a] sm:$0x3]
        %v670 = vld [vmem:[%s497 + $0x6a] sm:$0xff]
        %v671 = vld [vmem:[%s497 + $0x72] sm:$0x3]
        %v672 = vld [vmem:[%s497 + $0x82] sm:$0xff]
        %v673 = vld [vmem:[%s497 + $0x8a] sm:$0x3]
        %v674 = vld [vmem:[%s497 + $0x9a] sm:$0xff]
        %v675 = vld [vmem:[%s497 + $0xa2] sm:$0x3]
        %v676 = vld [vmem:[%s497 + $0xb2] sm:$0xff]
        %v677 = vld [vmem:[%s497 + $0xba] sm:$0x3]
        %v678 = vld [vmem:[%s497 + $0xca] sm:$0xff]
        %v679 = vld [vmem:[%s497 + $0xd2] sm:$0x3]
        %v680 = vld [vmem:[%s497 + $0xe2] sm:$0xff]
        %v681 = vld [vmem:[%s497 + $0xea] sm:$0x3]
        %v682 = vld [vmem:[%s497 + $0xfa] sm:$0xff]
        %v683 = vld [vmem:[%s497 + $0x102] sm:$0x3]
        %v684 = vld [vmem:[%s497 + $0x112] sm:$0xff]
        %v685 = vld [vmem:[%s497 + $0x11a] sm:$0x3]
        %v686 = vld [vmem:[%s497 + $0x12a] sm:$0xff]
        %v687 = vld [vmem:[%s497 + $0x132] sm:$0x3]
        %v688 = vld [vmem:[%s497 + $0x142] sm:$0xff]
        %v689 = vld [vmem:[%s497 + $0x14a] sm:$0x3]
        %v690 = vlaneseq
        %v691 = vshrl.u32 %v690, 7
        %v692 = vsub.s32 2, %v691
        %v693 = vrot.slane %v490, %v692
        %v694 = vmul.f32 %v546, %v693
        %v695 = vmul.f32 %v547, %v693
        %v696 = vmul.f32 %v548, %v693
        %v697 = vmul.f32 %v549, %v693
        %v698 = vmul.f32 %v550, %v693
        %v699 = vmul.f32 %v551, %v693
        %v700 = vmul.f32 %v552, %v693
        %v701 = vmul.f32 %v553, %v693
        %v702 = vmul.f32 %v554, %v693
        %v703 = vmul.f32 %v555, %v693
        %v704 = vmul.f32 %v556, %v693
        %v705 = vmul.f32 %v557, %v693
        %v706 = vmul.f32 %v558, %v693
        %v707 = vmul.f32 %v559, %v693
        %v708 = vmul.f32 %v560, %v693
        %v709 = vmul.f32 %v561, %v693
        %v710 = vmul.f32 %v562, %v693
        %v711 = vmul.f32 %v563, %v693
        %v712 = vmul.f32 %v564, %v693
        %v713 = vmul.f32 %v565, %v693
        %v714 = vlaneseq
        %v715 = vshrl.u32 %v714, 7
        %v716 = vsub.s32 3, %v715
        %v717 = vrot.slane %v490, %v716
        %v718 = vmul.f32 %v578, %v717
        %v719 = vmul.f32 %v579, %v717
        %v720 = vmul.f32 %v580, %v717
        %v721 = vmul.f32 %v581, %v717
        %v722 = vmul.f32 %v582, %v717
        %v723 = vmul.f32 %v583, %v717
        %v724 = vmul.f32 %v584, %v717
        %v725 = vmul.f32 %v585, %v717
        %v726 = vmul.f32 %v586, %v717
        %v727 = vmul.f32 %v587, %v717
        %v728 = vmul.f32 %v588, %v717
        %v729 = vmul.f32 %v589, %v717
        %v730 = vmul.f32 %v590, %v717
        %v731 = vmul.f32 %v591, %v717
        %v732 = vmul.f32 %v592, %v717
        %v733 = vmul.f32 %v593, %v717
        %v734 = vmul.f32 %v594, %v717
        %v735 = vmul.f32 %v595, %v717
        %v736 = vmul.f32 %v596, %v717
        %v737 = vmul.f32 %v597, %v717
        %v738 = vlaneseq
        %v739 = vshrl.u32 %v738, 7
        %v740 = vsub.s32 4, %v739
        %v741 = vrot.slane %v490, %v740
        %v742 = vmul.f32 %v610, %v741
        %v743 = vmul.f32 %v611, %v741
        %v744 = vmul.f32 %v612, %v741
        %v745 = vmul.f32 %v613, %v741
        %v746 = vmul.f32 %v614, %v741
        %v747 = vmul.f32 %v615, %v741
        %v748 = vmul.f32 %v616, %v741
        %v749 = vmul.f32 %v617, %v741
        %v750 = vmul.f32 %v618, %v741
        %v751 = vmul.f32 %v619, %v741
        %v752 = vmul.f32 %v620, %v741
        %v753 = vmul.f32 %v621, %v741
        %v754 = vmul.f32 %v622, %v741
        %v755 = vmul.f32 %v623, %v741
        %v756 = vmul.f32 %v624, %v741
        %v757 = vmul.f32 %v625, %v741
        %v758 = vmul.f32 %v626, %v741
        %v759 = vmul.f32 %v627, %v741
        %v760 = vmul.f32 %v628, %v741
        %v761 = vmul.f32 %v629, %v741
        %v762 = vlaneseq
        %v763 = vshrl.u32 %v762, 7
        %v764 = vsub.s32 2, %v763
        %v765 = vrot.slane %v491, %v764
        %v766 = vmul.f32 %v548, %v765
        %v767 = vmul.f32 %v549, %v765
        %v768 = vmul.f32 %v550, %v765
        %v769 = vmul.f32 %v551, %v765
        %v770 = vmul.f32 %v552, %v765
        %v771 = vmul.f32 %v553, %v765
        %v772 = vmul.f32 %v554, %v765
        %v773 = vmul.f32 %v555, %v765
        %v774 = vmul.f32 %v556, %v765
        %v775 = vmul.f32 %v557, %v765
        %v776 = vmul.f32 %v558, %v765
        %v777 = vmul.f32 %v559, %v765
        %v778 = vmul.f32 %v560, %v765
        %v779 = vmul.f32 %v561, %v765
        %v780 = vmul.f32 %v562, %v765
        %v781 = vmul.f32 %v563, %v765
        %v782 = vmul.f32 %v564, %v765
        %v783 = vmul.f32 %v565, %v765
        %v784 = vmul.f32 %v566, %v765
        %v785 = vmul.f32 %v567, %v765
        %v786 = vlaneseq
        %v787 = vshrl.u32 %v786, 7
        %v788 = vsub.s32 3, %v787
        %v789 = vrot.slane %v491, %v788
        %v790 = vmul.f32 %v580, %v789
        %v791 = vmul.f32 %v581, %v789
        %v792 = vmul.f32 %v582, %v789
        %v793 = vmul.f32 %v583, %v789
        %v794 = vmul.f32 %v584, %v789
        %v795 = vmul.f32 %v585, %v789
        %v796 = vmul.f32 %v586, %v789
        %v797 = vmul.f32 %v587, %v789
        %v798 = vmul.f32 %v588, %v789
        %v799 = vmul.f32 %v589, %v789
        %v800 = vmul.f32 %v590, %v789
        %v801 = vmul.f32 %v591, %v789
        %v802 = vmul.f32 %v592, %v789
        %v803 = vmul.f32 %v593, %v789
        %v804 = vmul.f32 %v594, %v789
        %v805 = vmul.f32 %v595, %v789
        %v806 = vmul.f32 %v596, %v789
        %v807 = vmul.f32 %v597, %v789
        %v808 = vmul.f32 %v598, %v789
        %v809 = vmul.f32 %v599, %v789
        %v810 = vadd.f32 %v694, %v790
        %v811 = vadd.f32 %v695, %v791
        %v812 = vadd.f32 %v696, %v792
        %v813 = vadd.f32 %v697, %v793
        %v814 = vadd.f32 %v698, %v794
        %v815 = vadd.f32 %v699, %v795
        %v816 = vadd.f32 %v700, %v796
        %v817 = vadd.f32 %v701, %v797
        %v818 = vadd.f32 %v702, %v798
        %v819 = vadd.f32 %v703, %v799
        %v820 = vadd.f32 %v704, %v800
        %v821 = vadd.f32 %v705, %v801
        %v822 = vadd.f32 %v706, %v802
        %v823 = vadd.f32 %v707, %v803
        %v824 = vadd.f32 %v708, %v804
        %v825 = vadd.f32 %v709, %v805
        %v826 = vadd.f32 %v710, %v806
        %v827 = vadd.f32 %v711, %v807
        %v828 = vadd.f32 %v712, %v808
        %v829 = vadd.f32 %v713, %v809
        %v830 = vlaneseq
        %v831 = vshrl.u32 %v830, 7
        %v832 = vsub.s32 4, %v831
        %v833 = vrot.slane %v491, %v832
        %v834 = vmul.f32 %v612, %v833
        %v835 = vmul.f32 %v613, %v833
        %v836 = vmul.f32 %v614, %v833
        %v837 = vmul.f32 %v615, %v833
        %v838 = vmul.f32 %v616, %v833
        %v839 = vmul.f32 %v617, %v833
        %v840 = vmul.f32 %v618, %v833
        %v841 = vmul.f32 %v619, %v833
        %v842 = vmul.f32 %v620, %v833
        %v843 = vmul.f32 %v621, %v833
        %v844 = vmul.f32 %v622, %v833
        %v845 = vmul.f32 %v623, %v833
        %v846 = vmul.f32 %v624, %v833
        %v847 = vmul.f32 %v625, %v833
        %v848 = vmul.f32 %v626, %v833
        %v849 = vmul.f32 %v627, %v833
        %v850 = vmul.f32 %v628, %v833
        %v851 = vmul.f32 %v629, %v833
        %v852 = vmul.f32 %v630, %v833
        %v853 = vmul.f32 %v631, %v833
        %v854 = vadd.f32 %v718, %v834
        %v855 = vadd.f32 %v719, %v835
        %v856 = vadd.f32 %v720, %v836
        %v857 = vadd.f32 %v721, %v837
        %v858 = vadd.f32 %v722, %v838
        %v859 = vadd.f32 %v723, %v839
        %v860 = vadd.f32 %v724, %v840
        %v861 = vadd.f32 %v725, %v841
        %v862 = vadd.f32 %v726, %v842
        %v863 = vadd.f32 %v727, %v843
        %v864 = vadd.f32 %v728, %v844
        %v865 = vadd.f32 %v729, %v845
        %v866 = vadd.f32 %v730, %v846
        %v867 = vadd.f32 %v731, %v847
        %v868 = vadd.f32 %v732, %v848
        %v869 = vadd.f32 %v733, %v849
        %v870 = vadd.f32 %v734, %v850
        %v871 = vadd.f32 %v735, %v851
        %v872 = vadd.f32 %v736, %v852
        %v873 = vadd.f32 %v737, %v853
        %v874 = vlaneseq
        %v875 = vshrl.u32 %v874, 7
        %v876 = vsub.s32 0, %v875
        %v877 = vrot.slane %v492, %v876
        %v878 = vmul.f32 %v498, %v877
        %v879 = vmul.f32 %v499, %v877
        %v880 = vmul.f32 %v500, %v877
        %v881 = vmul.f32 %v501, %v877
        %v882 = vmul.f32 %v502, %v877
        %v883 = vmul.f32 %v503, %v877
        %v884 = vmul.f32 %v504, %v877
        %v885 = vmul.f32 %v505, %v877
        %v886 = vmul.f32 %v506, %v877
        %v887 = vmul.f32 %v507, %v877
        %v888 = vmul.f32 %v508, %v877
        %v889 = vmul.f32 %v509, %v877
        %v890 = vmul.f32 %v510, %v877
        %v891 = vmul.f32 %v511, %v877
        %v892 = vmul.f32 %v512, %v877
        %v893 = vmul.f32 %v513, %v877
        %v894 = vmul.f32 %v514, %v877
        %v895 = vmul.f32 %v515, %v877
        %v896 = vmul.f32 %v516, %v877
        %v897 = vmul.f32 %v517, %v877
        %v898 = vadd.f32 %v742, %v878
        %v899 = vadd.f32 %v743, %v879
        %v900 = vadd.f32 %v744, %v880
        %v901 = vadd.f32 %v745, %v881
        %v902 = vadd.f32 %v746, %v882
        %v903 = vadd.f32 %v747, %v883
        %v904 = vadd.f32 %v748, %v884
        %v905 = vadd.f32 %v749, %v885
        %v906 = vadd.f32 %v750, %v886
        %v907 = vadd.f32 %v751, %v887
        %v908 = vadd.f32 %v752, %v888
        %v909 = vadd.f32 %v753, %v889
        %v910 = vadd.f32 %v754, %v890
        %v911 = vadd.f32 %v755, %v891
        %v912 = vadd.f32 %v756, %v892
        %v913 = vadd.f32 %v757, %v893
        %v914 = vadd.f32 %v758, %v894
        %v915 = vadd.f32 %v759, %v895
        %v916 = vadd.f32 %v760, %v896
        %v917 = vadd.f32 %v761, %v897
        %v918 = vlaneseq
        %v919 = vshrl.u32 %v918, 7
        %v920 = vsub.s32 1, %v919
        %v921 = vrot.slane %v492, %v920
        %v922 = vmul.f32 %v522, %v921
        %v923 = vmul.f32 %v523, %v921
        %v924 = vmul.f32 %v524, %v921
        %v925 = vmul.f32 %v525, %v921
        %v926 = vmul.f32 %v526, %v921
        %v927 = vmul.f32 %v527, %v921
        %v928 = vmul.f32 %v528, %v921
        %v929 = vmul.f32 %v529, %v921
        %v930 = vmul.f32 %v530, %v921
        %v931 = vmul.f32 %v531, %v921
        %v932 = vmul.f32 %v532, %v921
        %v933 = vmul.f32 %v533, %v921
        %v934 = vmul.f32 %v534, %v921
        %v935 = vmul.f32 %v535, %v921
        %v936 = vmul.f32 %v536, %v921
        %v937 = vmul.f32 %v537, %v921
        %v938 = vmul.f32 %v538, %v921
        %v939 = vmul.f32 %v539, %v921
        %v940 = vmul.f32 %v540, %v921
        %v941 = vmul.f32 %v541, %v921
        %v942 = vadd.f32 %v766, %v922
        %v943 = vadd.f32 %v767, %v923
        %v944 = vadd.f32 %v768, %v924
        %v945 = vadd.f32 %v769, %v925
        %v946 = vadd.f32 %v770, %v926
        %v947 = vadd.f32 %v771, %v927
        %v948 = vadd.f32 %v772, %v928
        %v949 = vadd.f32 %v773, %v929
        %v950 = vadd.f32 %v774, %v930
        %v951 = vadd.f32 %v775, %v931
        %v952 = vadd.f32 %v776, %v932
        %v953 = vadd.f32 %v777, %v933
        %v954 = vadd.f32 %v778, %v934
        %v955 = vadd.f32 %v779, %v935
        %v956 = vadd.f32 %v780, %v936
        %v957 = vadd.f32 %v781, %v937
        %v958 = vadd.f32 %v782, %v938
        %v959 = vadd.f32 %v783, %v939
        %v960 = vadd.f32 %v784, %v940
        %v961 = vadd.f32 %v785, %v941
        %v962 = vlaneseq
        %v963 = vshrl.u32 %v962, 7
        %v964 = vsub.s32 2, %v963
        %v965 = vrot.slane %v492, %v964
        %v966 = vmul.f32 %v550, %v965
        %v967 = vmul.f32 %v551, %v965
        %v968 = vmul.f32 %v552, %v965
        %v969 = vmul.f32 %v553, %v965
        %v970 = vmul.f32 %v554, %v965
        %v971 = vmul.f32 %v555, %v965
        %v972 = vmul.f32 %v556, %v965
        %v973 = vmul.f32 %v557, %v965
        %v974 = vmul.f32 %v558, %v965
        %v975 = vmul.f32 %v559, %v965
        %v976 = vmul.f32 %v560, %v965
        %v977 = vmul.f32 %v561, %v965
        %v978 = vmul.f32 %v562, %v965
        %v979 = vmul.f32 %v563, %v965
        %v980 = vmul.f32 %v564, %v965
        %v981 = vmul.f32 %v565, %v965
        %v982 = vmul.f32 %v566, %v965
        %v983 = vmul.f32 %v567, %v965
        %v984 = vmul.f32 %v568, %v965
        %v985 = vmul.f32 %v569, %v965
        %v986 = vadd.f32 %v810, %v966
        %v987 = vadd.f32 %v811, %v967
        %v988 = vadd.f32 %v812, %v968
        %v989 = vadd.f32 %v813, %v969
        %v990 = vadd.f32 %v814, %v970
        %v991 = vadd.f32 %v815, %v971
        %v992 = vadd.f32 %v816, %v972
        %v993 = vadd.f32 %v817, %v973
        %v994 = vadd.f32 %v818, %v974
        %v995 = vadd.f32 %v819, %v975
        %v996 = vadd.f32 %v820, %v976
        %v997 = vadd.f32 %v821, %v977
        %v998 = vadd.f32 %v822, %v978
        %v999 = vadd.f32 %v823, %v979
        %v1000 = vadd.f32 %v824, %v980
        %v1001 = vadd.f32 %v825, %v981
        %v1002 = vadd.f32 %v826, %v982
        %v1003 = vadd.f32 %v827, %v983
        %v1004 = vadd.f32 %v828, %v984
        %v1005 = vadd.f32 %v829, %v985
        %v1006 = vlaneseq
        %v1007 = vshrl.u32 %v1006, 7
        %v1008 = vsub.s32 3, %v1007
        %v1009 = vrot.slane %v492, %v1008
        %v1010 = vmul.f32 %v582, %v1009
        %v1011 = vmul.f32 %v583, %v1009
        %v1012 = vmul.f32 %v584, %v1009
        %v1013 = vmul.f32 %v585, %v1009
        %v1014 = vmul.f32 %v586, %v1009
        %v1015 = vmul.f32 %v587, %v1009
        %v1016 = vmul.f32 %v588, %v1009
        %v1017 = vmul.f32 %v589, %v1009
        %v1018 = vmul.f32 %v590, %v1009
        %v1019 = vmul.f32 %v591, %v1009
        %v1020 = vmul.f32 %v592, %v1009
        %v1021 = vmul.f32 %v593, %v1009
        %v1022 = vmul.f32 %v594, %v1009
        %v1023 = vmul.f32 %v595, %v1009
        %v1024 = vmul.f32 %v596, %v1009
        %v1025 = vmul.f32 %v597, %v1009
        %v1026 = vmul.f32 %v598, %v1009
        %v1027 = vmul.f32 %v599, %v1009
        %v1028 = vmul.f32 %v600, %v1009
        %v1029 = vmul.f32 %v601, %v1009
        %v1030 = vadd.f32 %v854, %v1010
        %v1031 = vadd.f32 %v855, %v1011
        %v1032 = vadd.f32 %v856, %v1012
        %v1033 = vadd.f32 %v857, %v1013
        %v1034 = vadd.f32 %v858, %v1014
        %v1035 = vadd.f32 %v859, %v1015
        %v1036 = vadd.f32 %v860, %v1016
        %v1037 = vadd.f32 %v861, %v1017
        %v1038 = vadd.f32 %v862, %v1018
        %v1039 = vadd.f32 %v863, %v1019
        %v1040 = vadd.f32 %v864, %v1020
        %v1041 = vadd.f32 %v865, %v1021
        %v1042 = vadd.f32 %v866, %v1022
        %v1043 = vadd.f32 %v867, %v1023
        %v1044 = vadd.f32 %v868, %v1024
        %v1045 = vadd.f32 %v869, %v1025
        %v1046 = vadd.f32 %v870, %v1026
        %v1047 = vadd.f32 %v871, %v1027
        %v1048 = vadd.f32 %v872, %v1028
        %v1049 = vadd.f32 %v873, %v1029
        %v1050 = vlaneseq
        %v1051 = vshrl.u32 %v1050, 7
        %v1052 = vsub.s32 4, %v1051
        %v1053 = vrot.slane %v492, %v1052
        %v1054 = vmul.f32 %v614, %v1053
        %v1055 = vmul.f32 %v615, %v1053
        %v1056 = vmul.f32 %v616, %v1053
        %v1057 = vmul.f32 %v617, %v1053
        %v1058 = vmul.f32 %v618, %v1053
        %v1059 = vmul.f32 %v619, %v1053
        %v1060 = vmul.f32 %v620, %v1053
        %v1061 = vmul.f32 %v621, %v1053
        %v1062 = vmul.f32 %v622, %v1053
        %v1063 = vmul.f32 %v623, %v1053
        %v1064 = vmul.f32 %v624, %v1053
        %v1065 = vmul.f32 %v625, %v1053
        %v1066 = vmul.f32 %v626, %v1053
        %v1067 = vmul.f32 %v627, %v1053
        %v1068 = vmul.f32 %v628, %v1053
        %v1069 = vmul.f32 %v629, %v1053
        %v1070 = vmul.f32 %v630, %v1053
        %v1071 = vmul.f32 %v631, %v1053
        %v1072 = vmul.f32 %v632, %v1053
        %v1073 = vmul.f32 %v633, %v1053
        %v1074 = vadd.f32 %v898, %v1054
        %v1075 = vadd.f32 %v899, %v1055
        %v1076 = vadd.f32 %v900, %v1056
        %v1077 = vadd.f32 %v901, %v1057
        %v1078 = vadd.f32 %v902, %v1058
        %v1079 = vadd.f32 %v903, %v1059
        %v1080 = vadd.f32 %v904, %v1060
        %v1081 = vadd.f32 %v905, %v1061
        %v1082 = vadd.f32 %v906, %v1062
        %v1083 = vadd.f32 %v907, %v1063
        %v1084 = vadd.f32 %v908, %v1064
        %v1085 = vadd.f32 %v909, %v1065
        %v1086 = vadd.f32 %v910, %v1066
        %v1087 = vadd.f32 %v911, %v1067
        %v1088 = vadd.f32 %v912, %v1068
        %v1089 = vadd.f32 %v913, %v1069
        %v1090 = vadd.f32 %v914, %v1070
        %v1091 = vadd.f32 %v915, %v1071
        %v1092 = vadd.f32 %v916, %v1072
        %v1093 = vadd.f32 %v917, %v1073
        %v1094 = vlaneseq
        %v1095 = vshrl.u32 %v1094, 7
        %v1096 = vsub.s32 5, %v1095
        %v1097 = vrot.slane %v492, %v1096
        %v1098 = vmul.f32 %v642, %v1097
        %v1099 = vmul.f32 %v643, %v1097
        %v1100 = vmul.f32 %v644, %v1097
        %v1101 = vmul.f32 %v645, %v1097
        %v1102 = vmul.f32 %v646, %v1097
        %v1103 = vmul.f32 %v647, %v1097
        %v1104 = vmul.f32 %v648, %v1097
        %v1105 = vmul.f32 %v649, %v1097
        %v1106 = vmul.f32 %v650, %v1097
        %v1107 = vmul.f32 %v651, %v1097
        %v1108 = vmul.f32 %v652, %v1097
        %v1109 = vmul.f32 %v653, %v1097
        %v1110 = vmul.f32 %v654, %v1097
        %v1111 = vmul.f32 %v655, %v1097
        %v1112 = vmul.f32 %v656, %v1097
        %v1113 = vmul.f32 %v657, %v1097
        %v1114 = vmul.f32 %v658, %v1097
        %v1115 = vmul.f32 %v659, %v1097
        %v1116 = vmul.f32 %v660, %v1097
        %v1117 = vmul.f32 %v661, %v1097
        %v1118 = vadd.f32 %v942, %v1098
        %v1119 = vadd.f32 %v943, %v1099
        %v1120 = vadd.f32 %v944, %v1100
        %v1121 = vadd.f32 %v945, %v1101
        %v1122 = vadd.f32 %v946, %v1102
        %v1123 = vadd.f32 %v947, %v1103
        %v1124 = vadd.f32 %v948, %v1104
        %v1125 = vadd.f32 %v949, %v1105
        %v1126 = vadd.f32 %v950, %v1106
        %v1127 = vadd.f32 %v951, %v1107
        %v1128 = vadd.f32 %v952, %v1108
        %v1129 = vadd.f32 %v953, %v1109
        %v1130 = vadd.f32 %v954, %v1110
        %v1131 = vadd.f32 %v955, %v1111
        %v1132 = vadd.f32 %v956, %v1112
        %v1133 = vadd.f32 %v957, %v1113
        %v1134 = vadd.f32 %v958, %v1114
        %v1135 = vadd.f32 %v959, %v1115
        %v1136 = vadd.f32 %v960, %v1116
        %v1137 = vadd.f32 %v961, %v1117
        %v1138 = vlaneseq
        %v1139 = vshrl.u32 %v1138, 7
        %v1140 = vsub.s32 6, %v1139
        %v1141 = vrot.slane %v492, %v1140
        %v1142 = vmul.f32 %v666, %v1141
        %v1143 = vmul.f32 %v667, %v1141
        %v1144 = vmul.f32 %v668, %v1141
        %v1145 = vmul.f32 %v669, %v1141
        %v1146 = vmul.f32 %v670, %v1141
        %v1147 = vmul.f32 %v671, %v1141
        %v1148 = vmul.f32 %v672, %v1141
        %v1149 = vmul.f32 %v673, %v1141
        %v1150 = vmul.f32 %v674, %v1141
        %v1151 = vmul.f32 %v675, %v1141
        %v1152 = vmul.f32 %v676, %v1141
        %v1153 = vmul.f32 %v677, %v1141
        %v1154 = vmul.f32 %v678, %v1141
        %v1155 = vmul.f32 %v679, %v1141
        %v1156 = vmul.f32 %v680, %v1141
        %v1157 = vmul.f32 %v681, %v1141
        %v1158 = vmul.f32 %v682, %v1141
        %v1159 = vmul.f32 %v683, %v1141
        %v1160 = vmul.f32 %v684, %v1141
        %v1161 = vmul.f32 %v685, %v1141
        %v1162 = vadd.f32 %v986, %v1142
        %v1163 = vadd.f32 %v987, %v1143
        %v1164 = vadd.f32 %v988, %v1144
        %v1165 = vadd.f32 %v989, %v1145
        %v1166 = vadd.f32 %v990, %v1146
        %v1167 = vadd.f32 %v991, %v1147
        %v1168 = vadd.f32 %v992, %v1148
        %v1169 = vadd.f32 %v993, %v1149
        %v1170 = vadd.f32 %v994, %v1150
        %v1171 = vadd.f32 %v995, %v1151
        %v1172 = vadd.f32 %v996, %v1152
        %v1173 = vadd.f32 %v997, %v1153
        %v1174 = vadd.f32 %v998, %v1154
        %v1175 = vadd.f32 %v999, %v1155
        %v1176 = vadd.f32 %v1000, %v1156
        %v1177 = vadd.f32 %v1001, %v1157
        %v1178 = vadd.f32 %v1002, %v1158
        %v1179 = vadd.f32 %v1003, %v1159
        %v1180 = vadd.f32 %v1004, %v1160
        %v1181 = vadd.f32 %v1005, %v1161
        %v1182 = vlaneseq
        %v1183 = vshrl.u32 %v1182, 7
        %v1184 = vsub.s32 0, %v1183
        %v1185 = vrot.slane %v493, %v1184
        %v1186 = vmul.f32 %v500, %v1185
        %v1187 = vmul.f32 %v501, %v1185
        %v1188 = vmul.f32 %v502, %v1185
        %v1189 = vmul.f32 %v503, %v1185
        %v1190 = vmul.f32 %v504, %v1185
        %v1191 = vmul.f32 %v505, %v1185
        %v1192 = vmul.f32 %v506, %v1185
        %v1193 = vmul.f32 %v507, %v1185
        %v1194 = vmul.f32 %v508, %v1185
        %v1195 = vmul.f32 %v509, %v1185
        %v1196 = vmul.f32 %v510, %v1185
        %v1197 = vmul.f32 %v511, %v1185
        %v1198 = vmul.f32 %v512, %v1185
        %v1199 = vmul.f32 %v513, %v1185
        %v1200 = vmul.f32 %v514, %v1185
        %v1201 = vmul.f32 %v515, %v1185
        %v1202 = vmul.f32 %v516, %v1185
        %v1203 = vmul.f32 %v517, %v1185
        %v1204 = vmul.f32 %v518, %v1185
        %v1205 = vmul.f32 %v519, %v1185
        %v1206 = vadd.f32 %v1030, %v1186
        %v1207 = vadd.f32 %v1031, %v1187
        %v1208 = vadd.f32 %v1032, %v1188
        %v1209 = vadd.f32 %v1033, %v1189
        %v1210 = vadd.f32 %v1034, %v1190
        %v1211 = vadd.f32 %v1035, %v1191
        %v1212 = vadd.f32 %v1036, %v1192
        %v1213 = vadd.f32 %v1037, %v1193
        %v1214 = vadd.f32 %v1038, %v1194
        %v1215 = vadd.f32 %v1039, %v1195
        %v1216 = vadd.f32 %v1040, %v1196
        %v1217 = vadd.f32 %v1041, %v1197
        %v1218 = vadd.f32 %v1042, %v1198
        %v1219 = vadd.f32 %v1043, %v1199
        %v1220 = vadd.f32 %v1044, %v1200
        %v1221 = vadd.f32 %v1045, %v1201
        %v1222 = vadd.f32 %v1046, %v1202
        %v1223 = vadd.f32 %v1047, %v1203
        %v1224 = vadd.f32 %v1048, %v1204
        %v1225 = vadd.f32 %v1049, %v1205
        %v1226 = vlaneseq
        %v1227 = vshrl.u32 %v1226, 7
        %v1228 = vsub.s32 1, %v1227
        %v1229 = vrot.slane %v493, %v1228
        %v1230 = vmul.f32 %v524, %v1229
        %v1231 = vmul.f32 %v525, %v1229
        %v1232 = vmul.f32 %v526, %v1229
        %v1233 = vmul.f32 %v527, %v1229
        %v1234 = vmul.f32 %v528, %v1229
        %v1235 = vmul.f32 %v529, %v1229
        %v1236 = vmul.f32 %v530, %v1229
        %v1237 = vmul.f32 %v531, %v1229
        %v1238 = vmul.f32 %v532, %v1229
        %v1239 = vmul.f32 %v533, %v1229
        %v1240 = vmul.f32 %v534, %v1229
        %v1241 = vmul.f32 %v535, %v1229
        %v1242 = vmul.f32 %v536, %v1229
        %v1243 = vmul.f32 %v537, %v1229
        %v1244 = vmul.f32 %v538, %v1229
        %v1245 = vmul.f32 %v539, %v1229
        %v1246 = vmul.f32 %v540, %v1229
        %v1247 = vmul.f32 %v541, %v1229
        %v1248 = vmul.f32 %v542, %v1229
        %v1249 = vmul.f32 %v543, %v1229
        %v1250 = vadd.f32 %v1074, %v1230
        %v1251 = vadd.f32 %v1075, %v1231
        %v1252 = vadd.f32 %v1076, %v1232
        %v1253 = vadd.f32 %v1077, %v1233
        %v1254 = vadd.f32 %v1078, %v1234
        %v1255 = vadd.f32 %v1079, %v1235
        %v1256 = vadd.f32 %v1080, %v1236
        %v1257 = vadd.f32 %v1081, %v1237
        %v1258 = vadd.f32 %v1082, %v1238
        %v1259 = vadd.f32 %v1083, %v1239
        %v1260 = vadd.f32 %v1084, %v1240
        %v1261 = vadd.f32 %v1085, %v1241
        %v1262 = vadd.f32 %v1086, %v1242
        %v1263 = vadd.f32 %v1087, %v1243
        %v1264 = vadd.f32 %v1088, %v1244
        %v1265 = vadd.f32 %v1089, %v1245
        %v1266 = vadd.f32 %v1090, %v1246
        %v1267 = vadd.f32 %v1091, %v1247
        %v1268 = vadd.f32 %v1092, %v1248
        %v1269 = vadd.f32 %v1093, %v1249
        %v1270 = vlaneseq
        %v1271 = vshrl.u32 %v1270, 7
        %v1272 = vsub.s32 2, %v1271
        %v1273 = vrot.slane %v493, %v1272
        %v1274 = vmul.f32 %v552, %v1273
        %v1275 = vmul.f32 %v553, %v1273
        %v1276 = vmul.f32 %v554, %v1273
        %v1277 = vmul.f32 %v555, %v1273
        %v1278 = vmul.f32 %v556, %v1273
        %v1279 = vmul.f32 %v557, %v1273
        %v1280 = vmul.f32 %v558, %v1273
        %v1281 = vmul.f32 %v559, %v1273
        %v1282 = vmul.f32 %v560, %v1273
        %v1283 = vmul.f32 %v561, %v1273
        %v1284 = vmul.f32 %v562, %v1273
        %v1285 = vmul.f32 %v563, %v1273
        %v1286 = vmul.f32 %v564, %v1273
        %v1287 = vmul.f32 %v565, %v1273
        %v1288 = vmul.f32 %v566, %v1273
        %v1289 = vmul.f32 %v567, %v1273
        %v1290 = vmul.f32 %v568, %v1273
        %v1291 = vmul.f32 %v569, %v1273
        %v1292 = vmul.f32 %v570, %v1273
        %v1293 = vmul.f32 %v571, %v1273
        %v1294 = vadd.f32 %v1118, %v1274
        %v1295 = vadd.f32 %v1119, %v1275
        %v1296 = vadd.f32 %v1120, %v1276
        %v1297 = vadd.f32 %v1121, %v1277
        %v1298 = vadd.f32 %v1122, %v1278
        %v1299 = vadd.f32 %v1123, %v1279
        %v1300 = vadd.f32 %v1124, %v1280
        %v1301 = vadd.f32 %v1125, %v1281
        %v1302 = vadd.f32 %v1126, %v1282
        %v1303 = vadd.f32 %v1127, %v1283
        %v1304 = vadd.f32 %v1128, %v1284
        %v1305 = vadd.f32 %v1129, %v1285
        %v1306 = vadd.f32 %v1130, %v1286
        %v1307 = vadd.f32 %v1131, %v1287
        %v1308 = vadd.f32 %v1132, %v1288
        %v1309 = vadd.f32 %v1133, %v1289
        %v1310 = vadd.f32 %v1134, %v1290
        %v1311 = vadd.f32 %v1135, %v1291
        %v1312 = vadd.f32 %v1136, %v1292
        %v1313 = vadd.f32 %v1137, %v1293
        %v1314 = vlaneseq
        %v1315 = vshrl.u32 %v1314, 7
        %v1316 = vsub.s32 3, %v1315
        %v1317 = vrot.slane %v493, %v1316
        %v1318 = vmul.f32 %v584, %v1317
        %v1319 = vmul.f32 %v585, %v1317
        %v1320 = vmul.f32 %v586, %v1317
        %v1321 = vmul.f32 %v587, %v1317
        %v1322 = vmul.f32 %v588, %v1317
        %v1323 = vmul.f32 %v589, %v1317
        %v1324 = vmul.f32 %v590, %v1317
        %v1325 = vmul.f32 %v591, %v1317
        %v1326 = vmul.f32 %v592, %v1317
        %v1327 = vmul.f32 %v593, %v1317
        %v1328 = vmul.f32 %v594, %v1317
        %v1329 = vmul.f32 %v595, %v1317
        %v1330 = vmul.f32 %v596, %v1317
        %v1331 = vmul.f32 %v597, %v1317
        %v1332 = vmul.f32 %v598, %v1317
        %v1333 = vmul.f32 %v599, %v1317
        %v1334 = vmul.f32 %v600, %v1317
        %v1335 = vmul.f32 %v601, %v1317
        %v1336 = vmul.f32 %v602, %v1317
        %v1337 = vmul.f32 %v603, %v1317
        %v1338 = vadd.f32 %v1162, %v1318
        %v1339 = vadd.f32 %v1163, %v1319
        %v1340 = vadd.f32 %v1164, %v1320
        %v1341 = vadd.f32 %v1165, %v1321
        %v1342 = vadd.f32 %v1166, %v1322
        %v1343 = vadd.f32 %v1167, %v1323
        %v1344 = vadd.f32 %v1168, %v1324
        %v1345 = vadd.f32 %v1169, %v1325
        %v1346 = vadd.f32 %v1170, %v1326
        %v1347 = vadd.f32 %v1171, %v1327
        %v1348 = vadd.f32 %v1172, %v1328
        %v1349 = vadd.f32 %v1173, %v1329
        %v1350 = vadd.f32 %v1174, %v1330
        %v1351 = vadd.f32 %v1175, %v1331
        %v1352 = vadd.f32 %v1176, %v1332
        %v1353 = vadd.f32 %v1177, %v1333
        %v1354 = vadd.f32 %v1178, %v1334
        %v1355 = vadd.f32 %v1179, %v1335
        %v1356 = vadd.f32 %v1180, %v1336
        %v1357 = vadd.f32 %v1181, %v1337
        %v1358 = vlaneseq
        %v1359 = vshrl.u32 %v1358, 7
        %v1360 = vsub.s32 4, %v1359
        %v1361 = vrot.slane %v493, %v1360
        %v1362 = vmul.f32 %v616, %v1361
        %v1363 = vmul.f32 %v617, %v1361
        %v1364 = vmul.f32 %v618, %v1361
        %v1365 = vmul.f32 %v619, %v1361
        %v1366 = vmul.f32 %v620, %v1361
        %v1367 = vmul.f32 %v621, %v1361
        %v1368 = vmul.f32 %v622, %v1361
        %v1369 = vmul.f32 %v623, %v1361
        %v1370 = vmul.f32 %v624, %v1361
        %v1371 = vmul.f32 %v625, %v1361
        %v1372 = vmul.f32 %v626, %v1361
        %v1373 = vmul.f32 %v627, %v1361
        %v1374 = vmul.f32 %v628, %v1361
        %v1375 = vmul.f32 %v629, %v1361
        %v1376 = vmul.f32 %v630, %v1361
        %v1377 = vmul.f32 %v631, %v1361
        %v1378 = vmul.f32 %v632, %v1361
        %v1379 = vmul.f32 %v633, %v1361
        %v1380 = vmul.f32 %v634, %v1361
        %v1381 = vmul.f32 %v635, %v1361
        %v1382 = vadd.f32 %v1206, %v1362
        %v1383 = vadd.f32 %v1207, %v1363
        %v1384 = vadd.f32 %v1208, %v1364
        %v1385 = vadd.f32 %v1209, %v1365
        %v1386 = vadd.f32 %v1210, %v1366
        %v1387 = vadd.f32 %v1211, %v1367
        %v1388 = vadd.f32 %v1212, %v1368
        %v1389 = vadd.f32 %v1213, %v1369
        %v1390 = vadd.f32 %v1214, %v1370
        %v1391 = vadd.f32 %v1215, %v1371
        %v1392 = vadd.f32 %v1216, %v1372
        %v1393 = vadd.f32 %v1217, %v1373
        %v1394 = vadd.f32 %v1218, %v1374
        %v1395 = vadd.f32 %v1219, %v1375
        %v1396 = vadd.f32 %v1220, %v1376
        %v1397 = vadd.f32 %v1221, %v1377
        %v1398 = vadd.f32 %v1222, %v1378
        %v1399 = vadd.f32 %v1223, %v1379
        %v1400 = vadd.f32 %v1224, %v1380
        %v1401 = vadd.f32 %v1225, %v1381
        %v1402 = vlaneseq
        %v1403 = vshrl.u32 %v1402, 7
        %v1404 = vsub.s32 5, %v1403
        %v1405 = vrot.slane %v493, %v1404
        %v1406 = vmul.f32 %v644, %v1405
        %v1407 = vmul.f32 %v645, %v1405
        %v1408 = vmul.f32 %v646, %v1405
        %v1409 = vmul.f32 %v647, %v1405
        %v1410 = vmul.f32 %v648, %v1405
        %v1411 = vmul.f32 %v649, %v1405
        %v1412 = vmul.f32 %v650, %v1405
        %v1413 = vmul.f32 %v651, %v1405
        %v1414 = vmul.f32 %v652, %v1405
        %v1415 = vmul.f32 %v653, %v1405
        %v1416 = vmul.f32 %v654, %v1405
        %v1417 = vmul.f32 %v655, %v1405
        %v1418 = vmul.f32 %v656, %v1405
        %v1419 = vmul.f32 %v657, %v1405
        %v1420 = vmul.f32 %v658, %v1405
        %v1421 = vmul.f32 %v659, %v1405
        %v1422 = vmul.f32 %v660, %v1405
        %v1423 = vmul.f32 %v661, %v1405
        %v1424 = vmul.f32 %v662, %v1405
        %v1425 = vmul.f32 %v663, %v1405
        %v1426 = vadd.f32 %v1250, %v1406
        %v1427 = vadd.f32 %v1251, %v1407
        %v1428 = vadd.f32 %v1252, %v1408
        %v1429 = vadd.f32 %v1253, %v1409
        %v1430 = vadd.f32 %v1254, %v1410
        %v1431 = vadd.f32 %v1255, %v1411
        %v1432 = vadd.f32 %v1256, %v1412
        %v1433 = vadd.f32 %v1257, %v1413
        %v1434 = vadd.f32 %v1258, %v1414
        %v1435 = vadd.f32 %v1259, %v1415
        %v1436 = vadd.f32 %v1260, %v1416
        %v1437 = vadd.f32 %v1261, %v1417
        %v1438 = vadd.f32 %v1262, %v1418
        %v1439 = vadd.f32 %v1263, %v1419
        %v1440 = vadd.f32 %v1264, %v1420
        %v1441 = vadd.f32 %v1265, %v1421
        %v1442 = vadd.f32 %v1266, %v1422
        %v1443 = vadd.f32 %v1267, %v1423
        %v1444 = vadd.f32 %v1268, %v1424
        %v1445 = vadd.f32 %v1269, %v1425
        %v1446 = vlaneseq
        %v1447 = vshrl.u32 %v1446, 7
        %v1448 = vsub.s32 6, %v1447
        %v1449 = vrot.slane %v493, %v1448
        %v1450 = vmul.f32 %v668, %v1449
        %v1451 = vmul.f32 %v669, %v1449
        %v1452 = vmul.f32 %v670, %v1449
        %v1453 = vmul.f32 %v671, %v1449
        %v1454 = vmul.f32 %v672, %v1449
        %v1455 = vmul.f32 %v673, %v1449
        %v1456 = vmul.f32 %v674, %v1449
        %v1457 = vmul.f32 %v675, %v1449
        %v1458 = vmul.f32 %v676, %v1449
        %v1459 = vmul.f32 %v677, %v1449
        %v1460 = vmul.f32 %v678, %v1449
        %v1461 = vmul.f32 %v679, %v1449
        %v1462 = vmul.f32 %v680, %v1449
        %v1463 = vmul.f32 %v681, %v1449
        %v1464 = vmul.f32 %v682, %v1449
        %v1465 = vmul.f32 %v683, %v1449
        %v1466 = vmul.f32 %v684, %v1449
        %v1467 = vmul.f32 %v685, %v1449
        %v1468 = vmul.f32 %v686, %v1449
        %v1469 = vmul.f32 %v687, %v1449
        %v1470 = vadd.f32 %v1294, %v1450
        %v1471 = vadd.f32 %v1295, %v1451
        %v1472 = vadd.f32 %v1296, %v1452
        %v1473 = vadd.f32 %v1297, %v1453
        %v1474 = vadd.f32 %v1298, %v1454
        %v1475 = vadd.f32 %v1299, %v1455
        %v1476 = vadd.f32 %v1300, %v1456
        %v1477 = vadd.f32 %v1301, %v1457
        %v1478 = vadd.f32 %v1302, %v1458
        %v1479 = vadd.f32 %v1303, %v1459
        %v1480 = vadd.f32 %v1304, %v1460
        %v1481 = vadd.f32 %v1305, %v1461
        %v1482 = vadd.f32 %v1306, %v1462
        %v1483 = vadd.f32 %v1307, %v1463
        %v1484 = vadd.f32 %v1308, %v1464
        %v1485 = vadd.f32 %v1309, %v1465
        %v1486 = vadd.f32 %v1310, %v1466
        %v1487 = vadd.f32 %v1311, %v1467
        %v1488 = vadd.f32 %v1312, %v1468
        %v1489 = vadd.f32 %v1313, %v1469
        %v1490 = vlaneseq
        %v1491 = vshrl.u32 %v1490, 7
        %v1492 = vsub.s32 0, %v1491
        %v1493 = vrot.slane %v494, %v1492
        %v1494 = vmul.f32 %v502, %v1493
        %v1495 = vmul.f32 %v503, %v1493
        %v1496 = vmul.f32 %v504, %v1493
        %v1497 = vmul.f32 %v505, %v1493
        %v1498 = vmul.f32 %v506, %v1493
        %v1499 = vmul.f32 %v507, %v1493
        %v1500 = vmul.f32 %v508, %v1493
        %v1501 = vmul.f32 %v509, %v1493
        %v1502 = vmul.f32 %v510, %v1493
        %v1503 = vmul.f32 %v511, %v1493
        %v1504 = vmul.f32 %v512, %v1493
        %v1505 = vmul.f32 %v513, %v1493
        %v1506 = vmul.f32 %v514, %v1493
        %v1507 = vmul.f32 %v515, %v1493
        %v1508 = vmul.f32 %v516, %v1493
        %v1509 = vmul.f32 %v517, %v1493
        %v1510 = vmul.f32 %v518, %v1493
        %v1511 = vmul.f32 %v519, %v1493
        %v1512 = vmul.f32 %v520, %v1493
        %v1513 = vmul.f32 %v521, %v1493
        %v1514 = vadd.f32 %v1338, %v1494
        %v1515 = vadd.f32 %v1339, %v1495
        %v1516 = vadd.f32 %v1340, %v1496
        %v1517 = vadd.f32 %v1341, %v1497
        %v1518 = vadd.f32 %v1342, %v1498
        %v1519 = vadd.f32 %v1343, %v1499
        %v1520 = vadd.f32 %v1344, %v1500
        %v1521 = vadd.f32 %v1345, %v1501
        %v1522 = vadd.f32 %v1346, %v1502
        %v1523 = vadd.f32 %v1347, %v1503
        %v1524 = vadd.f32 %v1348, %v1504
        %v1525 = vadd.f32 %v1349, %v1505
        %v1526 = vadd.f32 %v1350, %v1506
        %v1527 = vadd.f32 %v1351, %v1507
        %v1528 = vadd.f32 %v1352, %v1508
        %v1529 = vadd.f32 %v1353, %v1509
        %v1530 = vadd.f32 %v1354, %v1510
        %v1531 = vadd.f32 %v1355, %v1511
        %v1532 = vadd.f32 %v1356, %v1512
        %v1533 = vadd.f32 %v1357, %v1513
        %v1534 = vlaneseq
        %v1535 = vshrl.u32 %v1534, 7
        %v1536 = vsub.s32 1, %v1535
        %v1537 = vrot.slane %v494, %v1536
        %v1538 = vmul.f32 %v526, %v1537
        %v1539 = vmul.f32 %v527, %v1537
        %v1540 = vmul.f32 %v528, %v1537
        %v1541 = vmul.f32 %v529, %v1537
        %v1542 = vmul.f32 %v530, %v1537
        %v1543 = vmul.f32 %v531, %v1537
        %v1544 = vmul.f32 %v532, %v1537
        %v1545 = vmul.f32 %v533, %v1537
        %v1546 = vmul.f32 %v534, %v1537
        %v1547 = vmul.f32 %v535, %v1537
        %v1548 = vmul.f32 %v536, %v1537
        %v1549 = vmul.f32 %v537, %v1537
        %v1550 = vmul.f32 %v538, %v1537
        %v1551 = vmul.f32 %v539, %v1537
        %v1552 = vmul.f32 %v540, %v1537
        %v1553 = vmul.f32 %v541, %v1537
        %v1554 = vmul.f32 %v542, %v1537
        %v1555 = vmul.f32 %v543, %v1537
        %v1556 = vmul.f32 %v544, %v1537
        %v1557 = vmul.f32 %v545, %v1537
        %v1558 = vadd.f32 %v1382, %v1538
        %v1559 = vadd.f32 %v1383, %v1539
        %v1560 = vadd.f32 %v1384, %v1540
        %v1561 = vadd.f32 %v1385, %v1541
        %v1562 = vadd.f32 %v1386, %v1542
        %v1563 = vadd.f32 %v1387, %v1543
        %v1564 = vadd.f32 %v1388, %v1544
        %v1565 = vadd.f32 %v1389, %v1545
        %v1566 = vadd.f32 %v1390, %v1546
        %v1567 = vadd.f32 %v1391, %v1547
        %v1568 = vadd.f32 %v1392, %v1548
        %v1569 = vadd.f32 %v1393, %v1549
        %v1570 = vadd.f32 %v1394, %v1550
        %v1571 = vadd.f32 %v1395, %v1551
        %v1572 = vadd.f32 %v1396, %v1552
        %v1573 = vadd.f32 %v1397, %v1553
        %v1574 = vadd.f32 %v1398, %v1554
        %v1575 = vadd.f32 %v1399, %v1555
        %v1576 = vadd.f32 %v1400, %v1556
        %v1577 = vadd.f32 %v1401, %v1557
        %v1578 = vlaneseq
        %v1579 = vshrl.u32 %v1578, 7
        %v1580 = vsub.s32 2, %v1579
        %v1581 = vrot.slane %v494, %v1580
        %v1582 = vmul.f32 %v554, %v1581
        %v1583 = vmul.f32 %v555, %v1581
        %v1584 = vmul.f32 %v556, %v1581
        %v1585 = vmul.f32 %v557, %v1581
        %v1586 = vmul.f32 %v558, %v1581
        %v1587 = vmul.f32 %v559, %v1581
        %v1588 = vmul.f32 %v560, %v1581
        %v1589 = vmul.f32 %v561, %v1581
        %v1590 = vmul.f32 %v562, %v1581
        %v1591 = vmul.f32 %v563, %v1581
        %v1592 = vmul.f32 %v564, %v1581
        %v1593 = vmul.f32 %v565, %v1581
        %v1594 = vmul.f32 %v566, %v1581
        %v1595 = vmul.f32 %v567, %v1581
        %v1596 = vmul.f32 %v568, %v1581
        %v1597 = vmul.f32 %v569, %v1581
        %v1598 = vmul.f32 %v570, %v1581
        %v1599 = vmul.f32 %v571, %v1581
        %v1600 = vmul.f32 %v572, %v1581
        %v1601 = vmul.f32 %v573, %v1581
        %v1602 = vadd.f32 %v1426, %v1582
        %v1603 = vadd.f32 %v1427, %v1583
        %v1604 = vadd.f32 %v1428, %v1584
        %v1605 = vadd.f32 %v1429, %v1585
        %v1606 = vadd.f32 %v1430, %v1586
        %v1607 = vadd.f32 %v1431, %v1587
        %v1608 = vadd.f32 %v1432, %v1588
        %v1609 = vadd.f32 %v1433, %v1589
        %v1610 = vadd.f32 %v1434, %v1590
        %v1611 = vadd.f32 %v1435, %v1591
        %v1612 = vadd.f32 %v1436, %v1592
        %v1613 = vadd.f32 %v1437, %v1593
        %v1614 = vadd.f32 %v1438, %v1594
        %v1615 = vadd.f32 %v1439, %v1595
        %v1616 = vadd.f32 %v1440, %v1596
        %v1617 = vadd.f32 %v1441, %v1597
        %v1618 = vadd.f32 %v1442, %v1598
        %v1619 = vadd.f32 %v1443, %v1599
        %v1620 = vadd.f32 %v1444, %v1600
        %v1621 = vadd.f32 %v1445, %v1601
        %v1622 = vlaneseq
        %v1623 = vshrl.u32 %v1622, 7
        %v1624 = vsub.s32 3, %v1623
        %v1625 = vrot.slane %v494, %v1624
        %v1626 = vmul.f32 %v586, %v1625
        %v1627 = vmul.f32 %v587, %v1625
        %v1628 = vmul.f32 %v588, %v1625
        %v1629 = vmul.f32 %v589, %v1625
        %v1630 = vmul.f32 %v590, %v1625
        %v1631 = vmul.f32 %v591, %v1625
        %v1632 = vmul.f32 %v592, %v1625
        %v1633 = vmul.f32 %v593, %v1625
        %v1634 = vmul.f32 %v594, %v1625
        %v1635 = vmul.f32 %v595, %v1625
        %v1636 = vmul.f32 %v596, %v1625
        %v1637 = vmul.f32 %v597, %v1625
        %v1638 = vmul.f32 %v598, %v1625
        %v1639 = vmul.f32 %v599, %v1625
        %v1640 = vmul.f32 %v600, %v1625
        %v1641 = vmul.f32 %v601, %v1625
        %v1642 = vmul.f32 %v602, %v1625
        %v1643 = vmul.f32 %v603, %v1625
        %v1644 = vmul.f32 %v604, %v1625
        %v1645 = vmul.f32 %v605, %v1625
        %v1646 = vadd.f32 %v1470, %v1626
        %v1647 = vadd.f32 %v1471, %v1627
        %v1648 = vadd.f32 %v1472, %v1628
        %v1649 = vadd.f32 %v1473, %v1629
        %v1650 = vadd.f32 %v1474, %v1630
        %v1651 = vadd.f32 %v1475, %v1631
        %v1652 = vadd.f32 %v1476, %v1632
        %v1653 = vadd.f32 %v1477, %v1633
        %v1654 = vadd.f32 %v1478, %v1634
        %v1655 = vadd.f32 %v1479, %v1635
        %v1656 = vadd.f32 %v1480, %v1636
        %v1657 = vadd.f32 %v1481, %v1637
        %v1658 = vadd.f32 %v1482, %v1638
        %v1659 = vadd.f32 %v1483, %v1639
        %v1660 = vadd.f32 %v1484, %v1640
        %v1661 = vadd.f32 %v1485, %v1641
        %v1662 = vadd.f32 %v1486, %v1642
        %v1663 = vadd.f32 %v1487, %v1643
        %v1664 = vadd.f32 %v1488, %v1644
        %v1665 = vadd.f32 %v1489, %v1645
        %v1666 = vlaneseq
        %v1667 = vshrl.u32 %v1666, 7
        %v1668 = vsub.s32 4, %v1667
        %v1669 = vrot.slane %v494, %v1668
        %v1670 = vmul.f32 %v618, %v1669
        %v1671 = vmul.f32 %v619, %v1669
        %v1672 = vmul.f32 %v620, %v1669
        %v1673 = vmul.f32 %v621, %v1669
        %v1674 = vmul.f32 %v622, %v1669
        %v1675 = vmul.f32 %v623, %v1669
        %v1676 = vmul.f32 %v624, %v1669
        %v1677 = vmul.f32 %v625, %v1669
        %v1678 = vmul.f32 %v626, %v1669
        %v1679 = vmul.f32 %v627, %v1669
        %v1680 = vmul.f32 %v628, %v1669
        %v1681 = vmul.f32 %v629, %v1669
        %v1682 = vmul.f32 %v630, %v1669
        %v1683 = vmul.f32 %v631, %v1669
        %v1684 = vmul.f32 %v632, %v1669
        %v1685 = vmul.f32 %v633, %v1669
        %v1686 = vmul.f32 %v634, %v1669
        %v1687 = vmul.f32 %v635, %v1669
        %v1688 = vmul.f32 %v636, %v1669
        %v1689 = vmul.f32 %v637, %v1669
        %v1690 = vadd.f32 %v1514, %v1670
        %v1691 = vadd.f32 %v1515, %v1671
        %v1692 = vadd.f32 %v1516, %v1672
        %v1693 = vadd.f32 %v1517, %v1673
        %v1694 = vadd.f32 %v1518, %v1674
        %v1695 = vadd.f32 %v1519, %v1675
        %v1696 = vadd.f32 %v1520, %v1676
        %v1697 = vadd.f32 %v1521, %v1677
        %v1698 = vadd.f32 %v1522, %v1678
        %v1699 = vadd.f32 %v1523, %v1679
        %v1700 = vadd.f32 %v1524, %v1680
        %v1701 = vadd.f32 %v1525, %v1681
        %v1702 = vadd.f32 %v1526, %v1682
        %v1703 = vadd.f32 %v1527, %v1683
        %v1704 = vadd.f32 %v1528, %v1684
        %v1705 = vadd.f32 %v1529, %v1685
        %v1706 = vadd.f32 %v1530, %v1686
        %v1707 = vadd.f32 %v1531, %v1687
        %v1708 = vadd.f32 %v1532, %v1688
        %v1709 = vadd.f32 %v1533, %v1689
        %v1710 = vlaneseq
        %v1711 = vshrl.u32 %v1710, 7
        %v1712 = vsub.s32 5, %v1711
        %v1713 = vrot.slane %v494, %v1712
        %v1714 = vmul.f32 %v646, %v1713
        %v1715 = vmul.f32 %v647, %v1713
        %v1716 = vmul.f32 %v648, %v1713
        %v1717 = vmul.f32 %v649, %v1713
        %v1718 = vmul.f32 %v650, %v1713
        %v1719 = vmul.f32 %v651, %v1713
        %v1720 = vmul.f32 %v652, %v1713
        %v1721 = vmul.f32 %v653, %v1713
        %v1722 = vmul.f32 %v654, %v1713
        %v1723 = vmul.f32 %v655, %v1713
        %v1724 = vmul.f32 %v656, %v1713
        %v1725 = vmul.f32 %v657, %v1713
        %v1726 = vmul.f32 %v658, %v1713
        %v1727 = vmul.f32 %v659, %v1713
        %v1728 = vmul.f32 %v660, %v1713
        %v1729 = vmul.f32 %v661, %v1713
        %v1730 = vmul.f32 %v662, %v1713
        %v1731 = vmul.f32 %v663, %v1713
        %v1732 = vmul.f32 %v664, %v1713
        %v1733 = vmul.f32 %v665, %v1713
        %v1734 = vadd.f32 %v1558, %v1714
        %v1735 = vadd.f32 %v1559, %v1715
        %v1736 = vadd.f32 %v1560, %v1716
        %v1737 = vadd.f32 %v1561, %v1717
        %v1738 = vadd.f32 %v1562, %v1718
        %v1739 = vadd.f32 %v1563, %v1719
        %v1740 = vadd.f32 %v1564, %v1720
        %v1741 = vadd.f32 %v1565, %v1721
        %v1742 = vadd.f32 %v1566, %v1722
        %v1743 = vadd.f32 %v1567, %v1723
        %v1744 = vadd.f32 %v1568, %v1724
        %v1745 = vadd.f32 %v1569, %v1725
        %v1746 = vadd.f32 %v1570, %v1726
        %v1747 = vadd.f32 %v1571, %v1727
        %v1748 = vadd.f32 %v1572, %v1728
        %v1749 = vadd.f32 %v1573, %v1729
        %v1750 = vadd.f32 %v1574, %v1730
        %v1751 = vadd.f32 %v1575, %v1731
        %v1752 = vadd.f32 %v1576, %v1732
        %v1753 = vadd.f32 %v1577, %v1733
        %v1754 = vlaneseq
        %v1755 = vshrl.u32 %v1754, 7
        %v1756 = vsub.s32 6, %v1755
        %v1757 = vrot.slane %v494, %v1756
        %v1758 = vmul.f32 %v670, %v1757
        %v1759 = vmul.f32 %v671, %v1757
        %v1760 = vmul.f32 %v672, %v1757
        %v1761 = vmul.f32 %v673, %v1757
        %v1762 = vmul.f32 %v674, %v1757
        %v1763 = vmul.f32 %v675, %v1757
        %v1764 = vmul.f32 %v676, %v1757
        %v1765 = vmul.f32 %v677, %v1757
        %v1766 = vmul.f32 %v678, %v1757
        %v1767 = vmul.f32 %v679, %v1757
        %v1768 = vmul.f32 %v680, %v1757
        %v1769 = vmul.f32 %v681, %v1757
        %v1770 = vmul.f32 %v682, %v1757
        %v1771 = vmul.f32 %v683, %v1757
        %v1772 = vmul.f32 %v684, %v1757
        %v1773 = vmul.f32 %v685, %v1757
        %v1774 = vmul.f32 %v686, %v1757
        %v1775 = vmul.f32 %v687, %v1757
        %v1776 = vmul.f32 %v688, %v1757
        %v1777 = vmul.f32 %v689, %v1757
        %v1778 = vadd.f32 %v1602, %v1758
        %v1779 = vadd.f32 %v1603, %v1759
        %v1780 = vadd.f32 %v1604, %v1760
        %v1781 = vadd.f32 %v1605, %v1761
        %v1782 = vadd.f32 %v1606, %v1762
        %v1783 = vadd.f32 %v1607, %v1763
        %v1784 = vadd.f32 %v1608, %v1764
        %v1785 = vadd.f32 %v1609, %v1765
        %v1786 = vadd.f32 %v1610, %v1766
        %v1787 = vadd.f32 %v1611, %v1767
        %v1788 = vadd.f32 %v1612, %v1768
        %v1789 = vadd.f32 %v1613, %v1769
        %v1790 = vadd.f32 %v1614, %v1770
        %v1791 = vadd.f32 %v1615, %v1771
        %v1792 = vadd.f32 %v1616, %v1772
        %v1793 = vadd.f32 %v1617, %v1773
        %v1794 = vadd.f32 %v1618, %v1774
        %v1795 = vadd.f32 %v1619, %v1775
        %v1796 = vadd.f32 %v1620, %v1776
        %v1797 = vadd.f32 %v1621, %v1777
        %v1798 = vlaneseq
        %v1799 = vshrl.u32 %v1798, 7
        %v1800 = vsub.s32 2, %v1799
        %v1801 = vrot.slane %v495, %v1800
        %v1802 = vmul.f32 %v556, %v1801
        %v1803 = vmul.f32 %v557, %v1801
        %v1804 = vmul.f32 %v558, %v1801
        %v1805 = vmul.f32 %v559, %v1801
        %v1806 = vmul.f32 %v560, %v1801
        %v1807 = vmul.f32 %v561, %v1801
        %v1808 = vmul.f32 %v562, %v1801
        %v1809 = vmul.f32 %v563, %v1801
        %v1810 = vmul.f32 %v564, %v1801
        %v1811 = vmul.f32 %v565, %v1801
        %v1812 = vmul.f32 %v566, %v1801
        %v1813 = vmul.f32 %v567, %v1801
        %v1814 = vmul.f32 %v568, %v1801
        %v1815 = vmul.f32 %v569, %v1801
        %v1816 = vmul.f32 %v570, %v1801
        %v1817 = vmul.f32 %v571, %v1801
        %v1818 = vmul.f32 %v572, %v1801
        %v1819 = vmul.f32 %v573, %v1801
        %v1820 = vmul.f32 %v574, %v1801
        %v1821 = vmul.f32 %v575, %v1801
        %v1822 = vadd.f32 %v1646, %v1802
        %v1823 = vadd.f32 %v1647, %v1803
        %v1824 = vadd.f32 %v1648, %v1804
        %v1825 = vadd.f32 %v1649, %v1805
        %v1826 = vadd.f32 %v1650, %v1806
        %v1827 = vadd.f32 %v1651, %v1807
        %v1828 = vadd.f32 %v1652, %v1808
        %v1829 = vadd.f32 %v1653, %v1809
        %v1830 = vadd.f32 %v1654, %v1810
        %v1831 = vadd.f32 %v1655, %v1811
        %v1832 = vadd.f32 %v1656, %v1812
        %v1833 = vadd.f32 %v1657, %v1813
        %v1834 = vadd.f32 %v1658, %v1814
        %v1835 = vadd.f32 %v1659, %v1815
        %v1836 = vadd.f32 %v1660, %v1816
        %v1837 = vadd.f32 %v1661, %v1817
        %v1838 = vadd.f32 %v1662, %v1818
        %v1839 = vadd.f32 %v1663, %v1819
        %v1840 = vadd.f32 %v1664, %v1820
        %v1841 = vadd.f32 %v1665, %v1821
        %v1842 = vlaneseq
        %v1843 = vshrl.u32 %v1842, 7
        %v1844 = vsub.s32 3, %v1843
        %v1845 = vrot.slane %v495, %v1844
        %v1846 = vmul.f32 %v588, %v1845
        %v1847 = vmul.f32 %v589, %v1845
        %v1848 = vmul.f32 %v590, %v1845
        %v1849 = vmul.f32 %v591, %v1845
        %v1850 = vmul.f32 %v592, %v1845
        %v1851 = vmul.f32 %v593, %v1845
        %v1852 = vmul.f32 %v594, %v1845
        %v1853 = vmul.f32 %v595, %v1845
        %v1854 = vmul.f32 %v596, %v1845
        %v1855 = vmul.f32 %v597, %v1845
        %v1856 = vmul.f32 %v598, %v1845
        %v1857 = vmul.f32 %v599, %v1845
        %v1858 = vmul.f32 %v600, %v1845
        %v1859 = vmul.f32 %v601, %v1845
        %v1860 = vmul.f32 %v602, %v1845
        %v1861 = vmul.f32 %v603, %v1845
        %v1862 = vmul.f32 %v604, %v1845
        %v1863 = vmul.f32 %v605, %v1845
        %v1864 = vmul.f32 %v606, %v1845
        %v1865 = vmul.f32 %v607, %v1845
        %v1866 = vadd.f32 %v1690, %v1846
        %v1867 = vadd.f32 %v1691, %v1847
        %v1868 = vadd.f32 %v1692, %v1848
        %v1869 = vadd.f32 %v1693, %v1849
        %v1870 = vadd.f32 %v1694, %v1850
        %v1871 = vadd.f32 %v1695, %v1851
        %v1872 = vadd.f32 %v1696, %v1852
        %v1873 = vadd.f32 %v1697, %v1853
        %v1874 = vadd.f32 %v1698, %v1854
        %v1875 = vadd.f32 %v1699, %v1855
        %v1876 = vadd.f32 %v1700, %v1856
        %v1877 = vadd.f32 %v1701, %v1857
        %v1878 = vadd.f32 %v1702, %v1858
        %v1879 = vadd.f32 %v1703, %v1859
        %v1880 = vadd.f32 %v1704, %v1860
        %v1881 = vadd.f32 %v1705, %v1861
        %v1882 = vadd.f32 %v1706, %v1862
        %v1883 = vadd.f32 %v1707, %v1863
        %v1884 = vadd.f32 %v1708, %v1864
        %v1885 = vadd.f32 %v1709, %v1865
        %v1886 = vlaneseq
        %v1887 = vshrl.u32 %v1886, 7
        %v1888 = vsub.s32 4, %v1887
        %v1889 = vrot.slane %v495, %v1888
        %v1890 = vmul.f32 %v620, %v1889
        %v1891 = vmul.f32 %v621, %v1889
        %v1892 = vmul.f32 %v622, %v1889
        %v1893 = vmul.f32 %v623, %v1889
        %v1894 = vmul.f32 %v624, %v1889
        %v1895 = vmul.f32 %v625, %v1889
        %v1896 = vmul.f32 %v626, %v1889
        %v1897 = vmul.f32 %v627, %v1889
        %v1898 = vmul.f32 %v628, %v1889
        %v1899 = vmul.f32 %v629, %v1889
        %v1900 = vmul.f32 %v630, %v1889
        %v1901 = vmul.f32 %v631, %v1889
        %v1902 = vmul.f32 %v632, %v1889
        %v1903 = vmul.f32 %v633, %v1889
        %v1904 = vmul.f32 %v634, %v1889
        %v1905 = vmul.f32 %v635, %v1889
        %v1906 = vmul.f32 %v636, %v1889
        %v1907 = vmul.f32 %v637, %v1889
        %v1908 = vmul.f32 %v638, %v1889
        %v1909 = vmul.f32 %v639, %v1889
        %v1910 = vadd.f32 %v1734, %v1890
        %v1911 = vadd.f32 %v1735, %v1891
        %v1912 = vadd.f32 %v1736, %v1892
        %v1913 = vadd.f32 %v1737, %v1893
        %v1914 = vadd.f32 %v1738, %v1894
        %v1915 = vadd.f32 %v1739, %v1895
        %v1916 = vadd.f32 %v1740, %v1896
        %v1917 = vadd.f32 %v1741, %v1897
        %v1918 = vadd.f32 %v1742, %v1898
        %v1919 = vadd.f32 %v1743, %v1899
        %v1920 = vadd.f32 %v1744, %v1900
        %v1921 = vadd.f32 %v1745, %v1901
        %v1922 = vadd.f32 %v1746, %v1902
        %v1923 = vadd.f32 %v1747, %v1903
        %v1924 = vadd.f32 %v1748, %v1904
        %v1925 = vadd.f32 %v1749, %v1905
        %v1926 = vadd.f32 %v1750, %v1906
        %v1927 = vadd.f32 %v1751, %v1907
        %v1928 = vadd.f32 %v1752, %v1908
        %v1929 = vadd.f32 %v1753, %v1909
        %v1930 = vlaneseq
        %v1931 = vshrl.u32 %v1930, 7
        %v1932 = vsub.s32 2, %v1931
        %v1933 = vrot.slane %v496, %v1932
        %v1934 = vmul.f32 %v558, %v1933
        %v1935 = vmul.f32 %v559, %v1933
        %v1936 = vmul.f32 %v560, %v1933
        %v1937 = vmul.f32 %v561, %v1933
        %v1938 = vmul.f32 %v562, %v1933
        %v1939 = vmul.f32 %v563, %v1933
        %v1940 = vmul.f32 %v564, %v1933
        %v1941 = vmul.f32 %v565, %v1933
        %v1942 = vmul.f32 %v566, %v1933
        %v1943 = vmul.f32 %v567, %v1933
        %v1944 = vmul.f32 %v568, %v1933
        %v1945 = vmul.f32 %v569, %v1933
        %v1946 = vmul.f32 %v570, %v1933
        %v1947 = vmul.f32 %v571, %v1933
        %v1948 = vmul.f32 %v572, %v1933
        %v1949 = vmul.f32 %v573, %v1933
        %v1950 = vmul.f32 %v574, %v1933
        %v1951 = vmul.f32 %v575, %v1933
        %v1952 = vmul.f32 %v576, %v1933
        %v1953 = vmul.f32 %v577, %v1933
        %v1954 = vadd.f32 %v1778, %v1934
        %v1955 = vadd.f32 %v1779, %v1935
        %v1956 = vadd.f32 %v1780, %v1936
        %v1957 = vadd.f32 %v1781, %v1937
        %v1958 = vadd.f32 %v1782, %v1938
        %v1959 = vadd.f32 %v1783, %v1939
        %v1960 = vadd.f32 %v1784, %v1940
        %v1961 = vadd.f32 %v1785, %v1941
        %v1962 = vadd.f32 %v1786, %v1942
        %v1963 = vadd.f32 %v1787, %v1943
        %v1964 = vadd.f32 %v1788, %v1944
        %v1965 = vadd.f32 %v1789, %v1945
        %v1966 = vadd.f32 %v1790, %v1946
        %v1967 = vadd.f32 %v1791, %v1947
        %v1968 = vadd.f32 %v1792, %v1948
        %v1969 = vadd.f32 %v1793, %v1949
        %v1970 = vadd.f32 %v1794, %v1950
        %v1971 = vadd.f32 %v1795, %v1951
        %v1972 = vadd.f32 %v1796, %v1952
        %v1973 = vadd.f32 %v1797, %v1953
        %v1974 = vlaneseq
        %v1975 = vshrl.u32 %v1974, 7
        %v1976 = vsub.s32 3, %v1975
        %v1977 = vrot.slane %v496, %v1976
        %v1978 = vmul.f32 %v590, %v1977
        %v1979 = vmul.f32 %v591, %v1977
        %v1980 = vmul.f32 %v592, %v1977
        %v1981 = vmul.f32 %v593, %v1977
        %v1982 = vmul.f32 %v594, %v1977
        %v1983 = vmul.f32 %v595, %v1977
        %v1984 = vmul.f32 %v596, %v1977
        %v1985 = vmul.f32 %v597, %v1977
        %v1986 = vmul.f32 %v598, %v1977
        %v1987 = vmul.f32 %v599, %v1977
        %v1988 = vmul.f32 %v600, %v1977
        %v1989 = vmul.f32 %v601, %v1977
        %v1990 = vmul.f32 %v602, %v1977
        %v1991 = vmul.f32 %v603, %v1977
        %v1992 = vmul.f32 %v604, %v1977
        %v1993 = vmul.f32 %v605, %v1977
        %v1994 = vmul.f32 %v606, %v1977
        %v1995 = vmul.f32 %v607, %v1977
        %v1996 = vmul.f32 %v608, %v1977
        %v1997 = vmul.f32 %v609, %v1977
        %v1998 = vadd.f32 %v1822, %v1978
        %v1999 = vadd.f32 %v1823, %v1979
        %v2000 = vadd.f32 %v1824, %v1980
        %v2001 = vadd.f32 %v1825, %v1981
        %v2002 = vadd.f32 %v1826, %v1982
        %v2003 = vadd.f32 %v1827, %v1983
        %v2004 = vadd.f32 %v1828, %v1984
        %v2005 = vadd.f32 %v1829, %v1985
        %v2006 = vadd.f32 %v1830, %v1986
        %v2007 = vadd.f32 %v1831, %v1987
        %v2008 = vadd.f32 %v1832, %v1988
        %v2009 = vadd.f32 %v1833, %v1989
        %v2010 = vadd.f32 %v1834, %v1990
        %v2011 = vadd.f32 %v1835, %v1991
        %v2012 = vadd.f32 %v1836, %v1992
        %v2013 = vadd.f32 %v1837, %v1993
        %v2014 = vadd.f32 %v1838, %v1994
        %v2015 = vadd.f32 %v1839, %v1995
        %v2016 = vadd.f32 %v1840, %v1996
        %v2017 = vadd.f32 %v1841, %v1997
        %v2018 = vlaneseq
        %v2019 = vshrl.u32 %v2018, 7
        %v2020 = vsub.s32 4, %v2019
        %v2021 = vrot.slane %v496, %v2020
        %v2022 = vmul.f32 %v622, %v2021
        %v2023 = vmul.f32 %v623, %v2021
        %v2024 = vmul.f32 %v624, %v2021
        %v2025 = vmul.f32 %v625, %v2021
        %v2026 = vmul.f32 %v626, %v2021
        %v2027 = vmul.f32 %v627, %v2021
        %v2028 = vmul.f32 %v628, %v2021
        %v2029 = vmul.f32 %v629, %v2021
        %v2030 = vmul.f32 %v630, %v2021
        %v2031 = vmul.f32 %v631, %v2021
        %v2032 = vmul.f32 %v632, %v2021
        %v2033 = vmul.f32 %v633, %v2021
        %v2034 = vmul.f32 %v634, %v2021
        %v2035 = vmul.f32 %v635, %v2021
        %v2036 = vmul.f32 %v636, %v2021
        %v2037 = vmul.f32 %v637, %v2021
        %v2038 = vmul.f32 %v638, %v2021
        %v2039 = vmul.f32 %v639, %v2021
        %v2040 = vmul.f32 %v640, %v2021
        %v2041 = vmul.f32 %v641, %v2021
        %v2042 = vadd.f32 %v1866, %v2022
        %v2043 = vadd.f32 %v1867, %v2023
        %v2044 = vadd.f32 %v1868, %v2024
        %v2045 = vadd.f32 %v1869, %v2025
        %v2046 = vadd.f32 %v1870, %v2026
        %v2047 = vadd.f32 %v1871, %v2027
        %v2048 = vadd.f32 %v1872, %v2028
        %v2049 = vadd.f32 %v1873, %v2029
        %v2050 = vadd.f32 %v1874, %v2030
        %v2051 = vadd.f32 %v1875, %v2031
        %v2052 = vadd.f32 %v1876, %v2032
        %v2053 = vadd.f32 %v1877, %v2033
        %v2054 = vadd.f32 %v1878, %v2034
        %v2055 = vadd.f32 %v1879, %v2035
        %v2056 = vadd.f32 %v1880, %v2036
        %v2057 = vadd.f32 %v1881, %v2037
        %v2058 = vadd.f32 %v1882, %v2038
        %v2059 = vadd.f32 %v1883, %v2039
        %v2060 = vadd.f32 %v1884, %v2040
        %v2061 = vadd.f32 %v1885, %v2041
        %v2062 = vadd.f32 %v2042, %v1910
        %v2063 = vadd.f32 %v2043, %v1911
        %v2064 = vadd.f32 %v2044, %v1912
        %v2065 = vadd.f32 %v2045, %v1913
        %v2066 = vadd.f32 %v2046, %v1914
        %v2067 = vadd.f32 %v2047, %v1915
        %v2068 = vadd.f32 %v2048, %v1916
        %v2069 = vadd.f32 %v2049, %v1917
        %v2070 = vadd.f32 %v2050, %v1918
        %v2071 = vadd.f32 %v2051, %v1919
        %v2072 = vadd.f32 %v2052, %v1920
        %v2073 = vadd.f32 %v2053, %v1921
        %v2074 = vadd.f32 %v2054, %v1922
        %v2075 = vadd.f32 %v2055, %v1923
        %v2076 = vadd.f32 %v2056, %v1924
        %v2077 = vadd.f32 %v2057, %v1925
        %v2078 = vadd.f32 %v2058, %v1926
        %v2079 = vadd.f32 %v2059, %v1927
        %v2080 = vadd.f32 %v2060, %v1928
        %v2081 = vadd.f32 %v2061, %v1929
        %v2082 = vadd.f32 %v1954, %v1998
        %v2083 = vadd.f32 %v1955, %v1999
        %v2084 = vadd.f32 %v1956, %v2000
        %v2085 = vadd.f32 %v1957, %v2001
        %v2086 = vadd.f32 %v1958, %v2002
        %v2087 = vadd.f32 %v1959, %v2003
        %v2088 = vadd.f32 %v1960, %v2004
        %v2089 = vadd.f32 %v1961, %v2005
        %v2090 = vadd.f32 %v1962, %v2006
        %v2091 = vadd.f32 %v1963, %v2007
        %v2092 = vadd.f32 %v1964, %v2008
        %v2093 = vadd.f32 %v1965, %v2009
        %v2094 = vadd.f32 %v1966, %v2010
        %v2095 = vadd.f32 %v1967, %v2011
        %v2096 = vadd.f32 %v1968, %v2012
        %v2097 = vadd.f32 %v1969, %v2013
        %v2098 = vadd.f32 %v1970, %v2014
        %v2099 = vadd.f32 %v1971, %v2015
        %v2100 = vadd.f32 %v1972, %v2016
        %v2101 = vadd.f32 %v1973, %v2017
        %v2102 = vadd.f32 %v2062, %v2082
        %v2103 = vadd.f32 %v2063, %v2083
        %v2104 = vadd.f32 %v2064, %v2084
        %v2105 = vadd.f32 %v2065, %v2085
        %v2106 = vadd.f32 %v2066, %v2086
        %v2107 = vadd.f32 %v2067, %v2087
        %v2108 = vadd.f32 %v2068, %v2088
        %v2109 = vadd.f32 %v2069, %v2089
        %v2110 = vadd.f32 %v2070, %v2090
        %v2111 = vadd.f32 %v2071, %v2091
        %v2112 = vadd.f32 %v2072, %v2092
        %v2113 = vadd.f32 %v2073, %v2093
        %v2114 = vadd.f32 %v2074, %v2094
        %v2115 = vadd.f32 %v2075, %v2095
        %v2116 = vadd.f32 %v2076, %v2096
        %v2117 = vadd.f32 %v2077, %v2097
        %v2118 = vadd.f32 %v2078, %v2098
        %v2119 = vadd.f32 %v2079, %v2099
        %v2120 = vadd.f32 %v2080, %v2100
        %v2121 = vadd.f32 %v2081, %v2101
        %v2122 = vld [vmem:[%s2] sm:$0x1]
        %v2124 = vlaneseq
        %v2125 = vshrl.u32 %v2124, 7
        %v2126 = vsub.s32 0, %v2125
        %v2127 = vrot.slane %v2122, %v2126
        %v2129 = vadd.f32 %v2102, %v2127
        %v2130 = vadd.f32 %v2103, %v2127
        %v2131 = vadd.f32 %v2104, %v2127
        %v2132 = vadd.f32 %v2105, %v2127
        %v2133 = vadd.f32 %v2106, %v2127
        %v2134 = vadd.f32 %v2107, %v2127
        %v2135 = vadd.f32 %v2108, %v2127
        %v2136 = vadd.f32 %v2109, %v2127
        %v2137 = vadd.f32 %v2110, %v2127
        %v2138 = vadd.f32 %v2111, %v2127
        %v2139 = vadd.f32 %v2112, %v2127
        %v2140 = vadd.f32 %v2113, %v2127
        %v2141 = vadd.f32 %v2114, %v2127
        %v2142 = vadd.f32 %v2115, %v2127
        %v2143 = vadd.f32 %v2116, %v2127
        %v2144 = vadd.f32 %v2117, %v2127
        %v2145 = vadd.f32 %v2118, %v2127
        %v2146 = vadd.f32 %v2119, %v2127
        %v2147 = vadd.f32 %v2120, %v2127
        %v2148 = vadd.f32 %v2121, %v2127
        %v2149 = vlaneseq
        %v2150 = vshrl.u32 %v2149, 7
        %v2151 = vadd.s32 %v2150, 8
        %vm2152 = vcmp.ge.s32.totalorder %v2150, 1
        %vm2153 = vcmp.ge.s32.totalorder %v2151, 1
        %vm2154 = vmand 0, %vm2152
        %vm2155 = vmand 0, %vm2153
        %vm2156 = vmand 1, %vm2152
        %vm2157 = vmand 1, %vm2153
        %vm2158 = vcmp.le.s32.totalorder %v2150, 8
        %vm2159 = vcmp.le.s32.totalorder %v2151, 8
        %vm2160 = vmand %vm2154, %vm2158
        %vm2161 = vmand %vm2155, %vm2159
        %vm2162 = vmand %vm2156, %vm2158
        %vm2163 = vmand %vm2157, %vm2159
        %v2164 = vsel %vm2160, 1, 0
        %v2165 = vsel %vm2161, 1, 0
        %v2166 = vsel %vm2162, 1, 0
        %v2167 = vsel %vm2163, 1, 0
        %vm2168 = vcmp.eq.s32.totalorder %v2164, 1
        %vm2169 = vcmp.eq.s32.totalorder %v2165, 1
        %vm2170 = vcmp.eq.s32.totalorder %v2166, 1
        %vm2171 = vcmp.eq.s32.totalorder %v2167, 1
        %v2172 = vsel %vm2168, %v2129, 0.0
        %v2173 = vsel %vm2169, %v2130, 0.0
        %v2174 = vsel %vm2170, %v2131, 0.0
        %v2175 = vsel %vm2171, %v2132, 0.0
        %v2176 = vsel %vm2170, %v2133, 0.0
        %v2177 = vsel %vm2171, %v2134, 0.0
        %v2178 = vsel %vm2170, %v2135, 0.0
        %v2179 = vsel %vm2171, %v2136, 0.0
        %v2180 = vsel %vm2170, %v2137, 0.0
        %v2181 = vsel %vm2171, %v2138, 0.0
        %v2182 = vsel %vm2170, %v2139, 0.0
        %v2183 = vsel %vm2171, %v2140, 0.0
        %v2184 = vsel %vm2170, %v2141, 0.0
        %v2185 = vsel %vm2171, %v2142, 0.0
        %v2186 = vsel %vm2170, %v2143, 0.0
        %v2187 = vsel %vm2171, %v2144, 0.0
        %v2188 = vsel %vm2170, %v2145, 0.0
        %v2189 = vsel %vm2171, %v2146, 0.0
        %v2190 = vsel %vm2168, %v2147, 0.0
        %v2191 = vsel %vm2169, %v2148, 0.0
        %v2192 = vld [vmem:[#allocation8] sm:$0x7]
        %v2193 = vld [vmem:[#allocation8 + $0x4] sm:$0x7]
        %v2194 = vld [vmem:[#allocation8 + $0x8] sm:$0x7]
        %v2195 = vlaneseq
        %v2196 = vshrl.u32 %v2195, 7
        %v2197 = vsub.s32 0, %v2196
        %v2198 = vrot.slane %v2192, %v2197
        %v2199 = vmul.f32 %v2172, %v2198
        %v2200 = vmul.f32 %v2174, %v2198
        %v2201 = vmul.f32 %v2176, %v2198
        %v2202 = vmul.f32 %v2178, %v2198
        %v2203 = vmul.f32 %v2180, %v2198
        %v2204 = vmul.f32 %v2182, %v2198
        %v2205 = vmul.f32 %v2184, %v2198
        %v2206 = vmul.f32 %v2186, %v2198
        %v2207 = vlaneseq
        %v2208 = vshrl.u32 %v2207, 7
        %v2209 = vsub.s32 0, %v2208
        %v2210 = vrot.slane %v2193, %v2209
        %v2211 = vmul.f32 %v2174, %v2210
        %v2212 = vmul.f32 %v2176, %v2210
        %v2213 = vmul.f32 %v2178, %v2210
        %v2214 = vmul.f32 %v2180, %v2210
        %v2215 = vmul.f32 %v2182, %v2210
        %v2216 = vmul.f32 %v2184, %v2210
        %v2217 = vmul.f32 %v2186, %v2210
        %v2218 = vmul.f32 %v2188, %v2210
        %v2219 = vadd.f32 %v2199, %v2211
        %v2220 = vadd.f32 %v2200, %v2212
        %v2221 = vadd.f32 %v2201, %v2213
        %v2222 = vadd.f32 %v2202, %v2214
        %v2223 = vadd.f32 %v2203, %v2215
        %v2224 = vadd.f32 %v2204, %v2216
        %v2225 = vadd.f32 %v2205, %v2217
        %v2226 = vadd.f32 %v2206, %v2218
        %v2227 = vlaneseq
        %v2228 = vshrl.u32 %v2227, 7
        %v2229 = vsub.s32 0, %v2228
        %v2230 = vrot.slane %v2194, %v2229
        %v2231 = vmul.f32 %v2176, %v2230
        %v2232 = vmul.f32 %v2178, %v2230
        %v2233 = vmul.f32 %v2180, %v2230
        %v2234 = vmul.f32 %v2182, %v2230
        %v2235 = vmul.f32 %v2184, %v2230
        %v2236 = vmul.f32 %v2186, %v2230
        %v2237 = vmul.f32 %v2188, %v2230
        %v2238 = vmul.f32 %v2190, %v2230
        %v2239 = vadd.f32 %v2219, %v2231
        %v2240 = vadd.f32 %v2220, %v2232
        %v2241 = vadd.f32 %v2221, %v2233
        %v2242 = vadd.f32 %v2222, %v2234
        %v2243 = vadd.f32 %v2223, %v2235
        %v2244 = vadd.f32 %v2224, %v2236
        %v2245 = vadd.f32 %v2225, %v2237
        %v2246 = vadd.f32 %v2226, %v2238
        %v2247 = vlaneseq
        %v2248 = vshrl.u32 %v2247, 7
        %v2249 = vsub.s32 1, %v2248
        %v2250 = vrot.slane %v2192, %v2249
        %v2251 = vmul.f32 %v2172, %v2250
        %v2252 = vmul.f32 %v2173, %v2250
        %v2253 = vmul.f32 %v2174, %v2250
        %v2254 = vmul.f32 %v2175, %v2250
        %v2255 = vmul.f32 %v2176, %v2250
        %v2256 = vmul.f32 %v2177, %v2250
        %v2257 = vmul.f32 %v2178, %v2250
        %v2258 = vmul.f32 %v2179, %v2250
        %v2259 = vmul.f32 %v2180, %v2250
        %v2260 = vmul.f32 %v2181, %v2250
        %v2261 = vmul.f32 %v2182, %v2250
        %v2262 = vmul.f32 %v2183, %v2250
        %v2263 = vmul.f32 %v2184, %v2250
        %v2264 = vmul.f32 %v2185, %v2250
        %v2265 = vmul.f32 %v2186, %v2250
        %v2266 = vmul.f32 %v2187, %v2250
        %v2267 = vlaneseq
        %v2268 = vshrl.u32 %v2267, 7
        %v2269 = vsub.s32 1, %v2268
        %v2270 = vrot.slane %v2193, %v2269
        %v2271 = vmul.f32 %v2174, %v2270
        %v2272 = vmul.f32 %v2175, %v2270
        %v2273 = vmul.f32 %v2176, %v2270
        %v2274 = vmul.f32 %v2177, %v2270
        %v2275 = vmul.f32 %v2178, %v2270
        %v2276 = vmul.f32 %v2179, %v2270
        %v2277 = vmul.f32 %v2180, %v2270
        %v2278 = vmul.f32 %v2181, %v2270
        %v2279 = vmul.f32 %v2182, %v2270
        %v2280 = vmul.f32 %v2183, %v2270
        %v2281 = vmul.f32 %v2184, %v2270
        %v2282 = vmul.f32 %v2185, %v2270
        %v2283 = vmul.f32 %v2186, %v2270
        %v2284 = vmul.f32 %v2187, %v2270
        %v2285 = vmul.f32 %v2188, %v2270
        %v2286 = vmul.f32 %v2189, %v2270
        %v2287 = vadd.f32 %v2251, %v2271
        %v2288 = vadd.f32 %v2252, %v2272
        %v2289 = vadd.f32 %v2253, %v2273
        %v2290 = vadd.f32 %v2254, %v2274
        %v2291 = vadd.f32 %v2255, %v2275
        %v2292 = vadd.f32 %v2256, %v2276
        %v2293 = vadd.f32 %v2257, %v2277
        %v2294 = vadd.f32 %v2258, %v2278
        %v2295 = vadd.f32 %v2259, %v2279
        %v2296 = vadd.f32 %v2260, %v2280
        %v2297 = vadd.f32 %v2261, %v2281
        %v2298 = vadd.f32 %v2262, %v2282
        %v2299 = vadd.f32 %v2263, %v2283
        %v2300 = vadd.f32 %v2264, %v2284
        %v2301 = vadd.f32 %v2265, %v2285
        %v2302 = vadd.f32 %v2266, %v2286
        %v2303 = vlaneseq
        %v2304 = vshrl.u32 %v2303, 7
        %v2305 = vsub.s32 1, %v2304
        %v2306 = vrot.slane %v2194, %v2305
        %v2307 = vmul.f32 %v2176, %v2306
        %v2308 = vmul.f32 %v2177, %v2306
        %v2309 = vmul.f32 %v2178, %v2306
        %v2310 = vmul.f32 %v2179, %v2306
        %v2311 = vmul.f32 %v2180, %v2306
        %v2312 = vmul.f32 %v2181, %v2306
        %v2313 = vmul.f32 %v2182, %v2306
        %v2314 = vmul.f32 %v2183, %v2306
        %v2315 = vmul.f32 %v2184, %v2306
        %v2316 = vmul.f32 %v2185, %v2306
        %v2317 = vmul.f32 %v2186, %v2306
        %v2318 = vmul.f32 %v2187, %v2306
        %v2319 = vmul.f32 %v2188, %v2306
        %v2320 = vmul.f32 %v2189, %v2306
        %v2321 = vmul.f32 %v2190, %v2306
        %v2322 = vmul.f32 %v2191, %v2306
        %v2323 = vadd.f32 %v2287, %v2307
        %v2324 = vadd.f32 %v2288, %v2308
        %v2325 = vadd.f32 %v2289, %v2309
        %v2326 = vadd.f32 %v2290, %v2310
        %v2327 = vadd.f32 %v2291, %v2311
        %v2328 = vadd.f32 %v2292, %v2312
        %v2329 = vadd.f32 %v2293, %v2313
        %v2330 = vadd.f32 %v2294, %v2314
        %v2331 = vadd.f32 %v2295, %v2315
        %v2332 = vadd.f32 %v2296, %v2316
        %v2333 = vadd.f32 %v2297, %v2317
        %v2334 = vadd.f32 %v2298, %v2318
        %v2335 = vadd.f32 %v2299, %v2319
        %v2336 = vadd.f32 %v2300, %v2320
        %v2337 = vadd.f32 %v2301, %v2321
        %v2338 = vadd.f32 %v2302, %v2322
        %v2339 = vlaneseq
        %v2340 = vshrl.u32 %v2339, 7
        %v2341 = vsub.s32 2, %v2340
        %v2342 = vrot.slane %v2192, %v2341
        %v2343 = vmul.f32 %v2172, %v2342
        %v2344 = vmul.f32 %v2173, %v2342
        %v2345 = vmul.f32 %v2174, %v2342
        %v2346 = vmul.f32 %v2175, %v2342
        %v2347 = vmul.f32 %v2176, %v2342
        %v2348 = vmul.f32 %v2177, %v2342
        %v2349 = vmul.f32 %v2178, %v2342
        %v2350 = vmul.f32 %v2179, %v2342
        %v2351 = vmul.f32 %v2180, %v2342
        %v2352 = vmul.f32 %v2181, %v2342
        %v2353 = vmul.f32 %v2182, %v2342
        %v2354 = vmul.f32 %v2183, %v2342
        %v2355 = vmul.f32 %v2184, %v2342
        %v2356 = vmul.f32 %v2185, %v2342
        %v2357 = vmul.f32 %v2186, %v2342
        %v2358 = vmul.f32 %v2187, %v2342
        %v2359 = vlaneseq
        %v2360 = vshrl.u32 %v2359, 7
        %v2361 = vsub.s32 2, %v2360
        %v2362 = vrot.slane %v2193, %v2361
        %v2363 = vmul.f32 %v2174, %v2362
        %v2364 = vmul.f32 %v2175, %v2362
        %v2365 = vmul.f32 %v2176, %v2362
        %v2366 = vmul.f32 %v2177, %v2362
        %v2367 = vmul.f32 %v2178, %v2362
        %v2368 = vmul.f32 %v2179, %v2362
        %v2369 = vmul.f32 %v2180, %v2362
        %v2370 = vmul.f32 %v2181, %v2362
        %v2371 = vmul.f32 %v2182, %v2362
        %v2372 = vmul.f32 %v2183, %v2362
        %v2373 = vmul.f32 %v2184, %v2362
        %v2374 = vmul.f32 %v2185, %v2362
        %v2375 = vmul.f32 %v2186, %v2362
        %v2376 = vmul.f32 %v2187, %v2362
        %v2377 = vmul.f32 %v2188, %v2362
        %v2378 = vmul.f32 %v2189, %v2362
        %v2379 = vadd.f32 %v2343, %v2363
        %v2380 = vadd.f32 %v2344, %v2364
        %v2381 = vadd.f32 %v2345, %v2365
        %v2382 = vadd.f32 %v2346, %v2366
        %v2383 = vadd.f32 %v2347, %v2367
        %v2384 = vadd.f32 %v2348, %v2368
        %v2385 = vadd.f32 %v2349, %v2369
        %v2386 = vadd.f32 %v2350, %v2370
        %v2387 = vadd.f32 %v2351, %v2371
        %v2388 = vadd.f32 %v2352, %v2372
        %v2389 = vadd.f32 %v2353, %v2373
        %v2390 = vadd.f32 %v2354, %v2374
        %v2391 = vadd.f32 %v2355, %v2375
        %v2392 = vadd.f32 %v2356, %v2376
        %v2393 = vadd.f32 %v2357, %v2377
        %v2394 = vadd.f32 %v2358, %v2378
        %v2395 = vlaneseq
        %v2396 = vshrl.u32 %v2395, 7
        %v2397 = vsub.s32 2, %v2396
        %v2398 = vrot.slane %v2194, %v2397
        %v2399 = vmul.f32 %v2176, %v2398
        %v2400 = vmul.f32 %v2177, %v2398
        %v2401 = vmul.f32 %v2178, %v2398
        %v2402 = vmul.f32 %v2179, %v2398
        %v2403 = vmul.f32 %v2180, %v2398
        %v2404 = vmul.f32 %v2181, %v2398
        %v2405 = vmul.f32 %v2182, %v2398
        %v2406 = vmul.f32 %v2183, %v2398
        %v2407 = vmul.f32 %v2184, %v2398
        %v2408 = vmul.f32 %v2185, %v2398
        %v2409 = vmul.f32 %v2186, %v2398
        %v2410 = vmul.f32 %v2187, %v2398
        %v2411 = vmul.f32 %v2188, %v2398
        %v2412 = vmul.f32 %v2189, %v2398
        %v2413 = vmul.f32 %v2190, %v2398
        %v2414 = vmul.f32 %v2191, %v2398
        %v2415 = vadd.f32 %v2379, %v2399
        %v2416 = vadd.f32 %v2380, %v2400
        %v2417 = vadd.f32 %v2381, %v2401
        %v2418 = vadd.f32 %v2382, %v2402
        %v2419 = vadd.f32 %v2383, %v2403
        %v2420 = vadd.f32 %v2384, %v2404
        %v2421 = vadd.f32 %v2385, %v2405
        %v2422 = vadd.f32 %v2386, %v2406
        %v2423 = vadd.f32 %v2387, %v2407
        %v2424 = vadd.f32 %v2388, %v2408
        %v2425 = vadd.f32 %v2389, %v2409
        %v2426 = vadd.f32 %v2390, %v2410
        %v2427 = vadd.f32 %v2391, %v2411
        %v2428 = vadd.f32 %v2392, %v2412
        %v2429 = vadd.f32 %v2393, %v2413
        %v2430 = vadd.f32 %v2394, %v2414
        %vm2447 = vcmask 1046528
        %v2448 = vrot.slane %v2323, 1
        %v2449 = vrot.slane %v2324, 1
        %v2450 = vsel %vm2447, %v2448, %v2449
        %v2451 = vrot.slane %v2325, 1
        %v2452 = vrot.slane %v2326, 1
        %v2453 = vsel %vm2447, %v2451, %v2452
        %v2454 = vrot.slane %v2327, 1
        %v2455 = vrot.slane %v2328, 1
        %v2456 = vsel %vm2447, %v2454, %v2455
        %v2457 = vrot.slane %v2329, 1
        %v2458 = vrot.slane %v2330, 1
        %v2459 = vsel %vm2447, %v2457, %v2458
        %v2460 = vrot.slane %v2331, 1
        %v2461 = vrot.slane %v2332, 1
        %v2462 = vsel %vm2447, %v2460, %v2461
        %v2463 = vrot.slane %v2333, 1
        %v2464 = vrot.slane %v2334, 1
        %v2465 = vsel %vm2447, %v2463, %v2464
        %v2466 = vrot.slane %v2335, 1
        %v2467 = vrot.slane %v2336, 1
        %v2468 = vsel %vm2447, %v2466, %v2467
        %v2469 = vrot.slane %v2337, 1
        %v2470 = vrot.slane %v2338, 1
        %v2471 = vsel %vm2447, %v2469, %v2470
        %v2480 = vadd.f32 %v2239, %v2450
        %v2481 = vadd.f32 %v2240, %v2453
        %v2482 = vadd.f32 %v2241, %v2456
        %v2483 = vadd.f32 %v2242, %v2459
        %v2484 = vadd.f32 %v2243, %v2462
        %v2485 = vadd.f32 %v2244, %v2465
        %v2486 = vadd.f32 %v2245, %v2468
        %v2487 = vadd.f32 %v2246, %v2471
        %vm2504 = vcmask 1045504
        %v2505 = vrot.slane %v2415, 2
        %v2506 = vrot.slane %v2416, 2
        %v2507 = vsel %vm2504, %v2505, %v2506
        %v2508 = vrot.slane %v2417, 2
        %v2509 = vrot.slane %v2418, 2
        %v2510 = vsel %vm2504, %v2508, %v2509
        %v2511 = vrot.slane %v2419, 2
        %v2512 = vrot.slane %v2420, 2
        %v2513 = vsel %vm2504, %v2511, %v2512
        %v2514 = vrot.slane %v2421, 2
        %v2515 = vrot.slane %v2422, 2
        %v2516 = vsel %vm2504, %v2514, %v2515
        %v2517 = vrot.slane %v2423, 2
        %v2518 = vrot.slane %v2424, 2
        %v2519 = vsel %vm2504, %v2517, %v2518
        %v2520 = vrot.slane %v2425, 2
        %v2521 = vrot.slane %v2426, 2
        %v2522 = vsel %vm2504, %v2520, %v2521
        %v2523 = vrot.slane %v2427, 2
        %v2524 = vrot.slane %v2428, 2
        %v2525 = vsel %vm2504, %v2523, %v2524
        %v2526 = vrot.slane %v2429, 2
        %v2527 = vrot.slane %v2430, 2
        %v2528 = vsel %vm2504, %v2526, %v2527
        %v2537 = vadd.f32 %v2480, %v2507
        %v2538 = vadd.f32 %v2481, %v2510
        %v2539 = vadd.f32 %v2482, %v2513
        %v2540 = vadd.f32 %v2483, %v2516
        %v2541 = vadd.f32 %v2484, %v2519
        %v2542 = vadd.f32 %v2485, %v2522
        %v2543 = vadd.f32 %v2486, %v2525
        %v2544 = vadd.f32 %v2487, %v2528
        %2545 = vmatprep.subr.mxu0 0.0
        %2546 = vmatpush1.msra.mxu0 %v287
        %2547 = vmatprep.subr.mxu0 0.0
        %2548 = vmatpush1.msra.mxu0 %v288
        %2549 = vmatprep.subr.mxu0 0.0
        %2550 = vmatpush1.msra.mxu0 %v289
        %2551 = vmatprep.subr.mxu0 0.0
        %2552 = vmatpush1.msra.mxu0 %v290
        %2553 = vmatprep.subr.mxu0 0.0
        %2554 = vmatpush1.msra.mxu0 %v291
        %2555 = vmatprep.subr.mxu0 0.0
        %2556 = vmatpush1.msra.mxu0 %v292
        %2557 = vmatprep.subr.mxu0 0.0
        %2558 = vmatpush1.msra.mxu0 %v293
        %2559 = vmatprep.subr.mxu0 0.0
        %2560 = vmatpush1.msra.mxu0 %v294
        %2561 = vmatprep.subr.mxu0 0.0
        %2562 = vmatpush1.msra.mxu0 %v295
        %2563 = vmatprep.subr.mxu0 0.0
        %2564 = vmatpush1.msra.mxu0 %v296
        %2565 = vmatprep.subr.mxu0 0.0
        %2566 = vmatpush1.msra.mxu0 %v297
        %2567 = vmatprep.subr.mxu0 0.0
        %2568 = vmatpush1.msra.mxu0 %v298
        %2569 = vmatprep.subr.mxu0 0.0
        %2570 = vmatpush1.msra.mxu0 %v299
        %2571 = vmatprep.subr.mxu0 0.0
        %2572 = vmatpush1.msra.mxu0 %v300
        %2573 = vmatprep.subr.mxu0 0.0
        %2574 = vmatpush1.msra.mxu0 %v301
        %2575 = vmatprep.subr.mxu0 0.0
        %2576 = vmatpush1.msra.mxu0 %v302
        %2577 = vmatprep.subr.mxu0 0.0
        %2578 = vmatpush1.msra.mxu0 0.0
        %2579 = vmatprep.subr.mxu0 0.0
        %2580 = vmatpush1.msra.mxu0 0.0
        %2581 = vmatprep.subr.mxu0 0.0
        %2582 = vmatpush1.msra.mxu0 0.0
        %2583 = vmatprep.subr.mxu0 0.0
        %2584 = vmatpush1.msra.mxu0 0.0
        %2585 = vmatprep.subr.mxu0 0.0
        %2586 = vmatpush1.msra.mxu0 0.0
        %2587 = vmatprep.subr.mxu0 0.0
        %2588 = vmatpush1.msra.mxu0 0.0
        %2589 = vmatprep.subr.mxu0 0.0
        %2590 = vmatpush1.msra.mxu0 0.0
        %2591 = vmatprep.subr.mxu0 0.0
        %2592 = vmatpush1.msra.mxu0 0.0
        %2593 = vmatprep.subr.mxu0 0.0
        %2594 = vmatpush1.msra.mxu0 0.0
        %2595 = vmatprep.subr.mxu0 0.0
        %2596 = vmatpush1.msra.mxu0 0.0
        %2597 = vmatprep.subr.mxu0 0.0
        %2598 = vmatpush1.msra.mxu0 0.0
        %2599 = vmatprep.subr.mxu0 0.0
        %2600 = vmatpush1.msra.mxu0 0.0
        %2601 = vmatprep.subr.mxu0 0.0
        %2602 = vmatpush1.msra.mxu0 0.0
        %2603 = vmatprep.subr.mxu0 0.0
        %2604 = vmatpush1.msra.mxu0 0.0
        %2605 = vmatprep.subr.mxu0 0.0
        %2606 = vmatpush1.msra.mxu0 0.0
        %2607 = vmatprep.subr.mxu0 0.0
        %2608 = vmatpush1.msra.mxu0 0.0
        %2609 = vmatprep.mubr.f32.mxu0 0.0
        %2610 = vmatmul.mubr.f32.gmra.mrb[0].mxu0 %v2537
        %v2611 = vpop.f32.mrb[0].mxu0
        %v2612 = vadd.f32 0.0, %v2611
        %v2613 = vpop.f32.mrb[0].mxu0
        %2614 = vmatprep.mubr.f32.mxu0 0.0
        %2615 = vmatmul.mubr.f32.gmra.mrb[0].mxu0 %v2538
        %v2616 = vpop.f32.mrb[0].mxu0
        %v2617 = vadd.f32 0.0, %v2616
        %v2618 = vpop.f32.mrb[0].mxu0
        %2619 = vmatprep.mubr.f32.mxu0 0.0
        %2620 = vmatmul.mubr.f32.gmra.mrb[0].mxu0 %v2539
        %v2621 = vpop.f32.mrb[0].mxu0
        %v2622 = vadd.f32 0.0, %v2621
        %v2623 = vpop.f32.mrb[0].mxu0
        %2624 = vmatprep.mubr.f32.mxu0 0.0
        %2625 = vmatmul.mubr.f32.gmra.mrb[0].mxu0 %v2540
        %v2626 = vpop.f32.mrb[0].mxu0
        %v2627 = vadd.f32 0.0, %v2626
        %v2628 = vpop.f32.mrb[0].mxu0
        %2629 = vmatprep.mubr.f32.mxu0 0.0
        %2630 = vmatmul.mubr.f32.gmra.mrb[0].mxu0 %v2541
        %v2631 = vpop.f32.mrb[0].mxu0
        %v2632 = vadd.f32 0.0, %v2631
        %v2633 = vpop.f32.mrb[0].mxu0
        %2634 = vmatprep.mubr.f32.mxu0 0.0
        %2635 = vmatmul.mubr.f32.gmra.mrb[0].mxu0 %v2542
        %v2636 = vpop.f32.mrb[0].mxu0
        %v2637 = vadd.f32 0.0, %v2636
        %v2638 = vpop.f32.mrb[0].mxu0
        %2639 = vmatprep.mubr.f32.mxu0 0.0
        %2640 = vmatmul.mubr.f32.gmra.mrb[0].mxu0 %v2543
        %v2641 = vpop.f32.mrb[0].mxu0
        %v2642 = vadd.f32 0.0, %v2641
        %v2643 = vpop.f32.mrb[0].mxu0
        %2644 = vmatprep.mubr.f32.mxu0 0.0
        %2645 = vmatmul.mubr.f32.gmra.mrb[0].mxu0 %v2544
        %v2646 = vpop.f32.mrb[0].mxu0
        %v2647 = vadd.f32 0.0, %v2646
        %v2648 = vpop.f32.mrb[0].mxu0
        %2649 = vdwg.mxu0
        %2650 = vst [vmem:[%s286] sm:$0xff] %v2612
        %2651 = vst [vmem:[%s286 + $0x8] sm:$0xff] %v2617
        %2652 = vst [vmem:[%s286 + $0x10] sm:$0xff] %v2622
        %2653 = vst [vmem:[%s286 + $0x18] sm:$0xff] %v2627
        %2654 = vst [vmem:[%s286 + $0x20] sm:$0xff] %v2632
        %2655 = vst [vmem:[%s286 + $0x28] sm:$0xff] %v2637
        %2656 = vst [vmem:[%s286 + $0x30] sm:$0xff] %v2642
        %2657 = vst [vmem:[%s286 + $0x38] sm:$0xff] %v2647
        %s2658 = sand.u32 %s142, 1
        %s2659 = scalar_lea.sflag [#allocation5], %s2658
        %s2660 = sand.u32 %s142, 1
        %s2661 = smul.addr %s2660, 64
        %s2662 = scalar_lea.vmem [#allocation11], %s2661
        // Predicated region
        $region57: #{tpu_custom_call.1} parent=39 // pred_check
          %p2663 = pneg %p152
        $region58: #{tpu_custom_call.1} parent=39 // pred_check_branch
          %2665 = sbr.rel (%p2663) target = $region60
        $region59: #{tpu_custom_call.1} parent=39 // pred_region
          %s2667 = ssub.s32 1024, 1024
          %2668 = vsyncadd %s2659, %s2667
          %s2669 = smul.addr %s24, 8
          %s2670 = smul.addr %s2669, 128
          %s2671 = scalar_lea.hbm %s5, %s2670
          %s2672 = sshll.u32 %s2662, 4
          %s2673 = int_to_ptr.vmem [resolvable:$true] %s2672
          %2678 = dma.vmem_to_hbm [thread:$0]  %s2673, 1024, %s2671, %s2659, 128, 128, 8
        $region60: #{tpu_custom_call.1} parent=39 // pred_fallthru
          _
      $region40: #{tpu_custom_call.1} parent=5 // pred_fallthru
        _
      %p2679 = scmp.le.s32.totalorder 2, %s19
      // Predicated region
      $region61: #{tpu_custom_call.1} parent=5 // pred_check
        %p2680 = pneg %p2679
      $region62: #{tpu_custom_call.1} parent=5 // pred_check_branch
        %2682 = sbr.rel (%p2680) target = $region64
      $region63: #{tpu_custom_call.1} parent=5 // pred_region
        %s2683 = ssub.s32 %s19, 2
        // Predicated region
        $region65: #{tpu_custom_call.1} parent=63 // pred_check
          %p2684 = pneg %p158
        $region66: #{tpu_custom_call.1} parent=63 // pred_check_branch
          %2686 = sbr.rel (%p2684) target = $region68
        $region67: #{tpu_custom_call.1} parent=63 // pred_region
          %s2687 = sand.u32 %s143, 1
          %s2688 = scalar_lea.sflag [#allocation5], %s2687
          %s2689 = sand.u32 %s143, 1
          %s2690 = smul.addr %s2689, 64
          %s2691 = scalar_lea.vmem [#allocation11], %s2690
          %2692 = dma.done %s2688, 1024
        $region68: #{tpu_custom_call.1} parent=63 // pred_fallthru
          _
      $region64: #{tpu_custom_call.1} parent=5 // pred_fallthru
        _
    $region6: #{tpu_custom_call.1} parent=1 // loop_footer
      %s23 = sadd.s32 1, %s19
    $region7: #{tpu_custom_call.1} parent=1 // loop_footer_branch
      %18 = sbr.rel target = $region3
    $region8: #{tpu_custom_call.1} parent=1 // loop_exit
      _
    %2693 = vsyncpa [#allocation4], 1
    %s2694 = scalar_lea.sflag [#allocation4], 1
    %2695 = vsyncpa %s2694, 1
    %2696 = vsyncpa [#allocation7], 1
    %2697 = vsyncpa [#allocation10], 1
    %2698 = vsyncpa [#allocation5], 1
    %s2699 = scalar_lea.sflag [#allocation5], 1
    %2700 = vsyncpa %s2699, 1

</llo_original>
